<compile_context>
chip_gen: v7x
topology: tpu7x:2x2x1
jax: 0.10.0
libtpu: 0.0.40
codegen_flags: <defaults>
</compile_context>

<pallas_src>
import numpy as np
import jax
import jax.numpy as jnp
from jax.experimental import pallas as pl
from jax.experimental.pallas import tpu as pltpu


def _round_up(x, m):
    return ((x + m - 1) // m) * m


def relgat_kernel(node_ref, gath_ref, deg_ref, w1_ref, b1_ref, w23_ref, b23_ref, out_ref):
    """One node tile: per-edge bf16 MXU matmuls + online masked softmax + self path."""
    K, TN, Dp = gath_ref.shape                     # static
    Hp = out_ref.shape[1]
    f32 = jnp.float32

    node_bf = node_ref[...]                        # [TN, Dp] bf16  (MXU operand)
    node_f = node_bf.astype(f32)                   # f32 copy for score / accumulation
    deg = deg_ref[...]                             # [TN, 1] int32 in-degree
    w1 = w1_ref[...]                               # [Dp, Hp] bf16
    b1 = b1_ref[...]                               # [1, Hp] f32

    neg = jnp.float32(-1e30)
    m = jnp.full((TN, 1), neg, f32)
    denom = jnp.zeros((TN, 1), f32)
    neigh = jnp.zeros((TN, Hp), f32)

    # Online (flash-style) masked softmax over the K incoming-edge slots.  Messages are
    # consumed straight out of the MXU -- no VMEM message scratch, single read per k.
    for k in range(K):                             # K is small & static -> unrolled
        ok_k = deg > k                             # [TN, 1] slot k holds a real edge
        msg_k = jnp.dot(gath_ref[k], w1, preferred_element_type=f32) + b1   # [TN, Hp] f32
        s_k = jnp.sum(msg_k * node_f, axis=-1, keepdims=True)               # [TN, 1]
        s_k = jnp.where(ok_k, s_k, neg)
        m_new = jnp.maximum(m, s_k)
        alpha = jnp.exp(m - m_new)
        p_k = jnp.where(ok_k, jnp.exp(s_k - m_new), 0.0)
        denom = denom * alpha + p_k
        neigh = neigh * alpha + p_k * msg_k
        m = m_new

    has_nbr = deg > 0                              # [TN, 1]  (in_degree > 0)
    inv = pl.reciprocal(jnp.where(has_nbr, denom, 1.0), approx=True)
    neigh = neigh * inv                            # exactly 0 for isolated nodes

    # Self path: fused linear2 || linear3 -> one bf16 matmul, halves selected per node.
    self_both = jnp.dot(node_bf, w23_ref[...], preferred_element_type=f32) + b23_ref[...]
    self_msg = jnp.where(has_nbr, self_both[:, :Hp], self_both[:, Hp:])

    # RReLU (eval mode): fixed slope (lower + upper) / 2.
    x = self_msg + neigh
    slope = jnp.float32((1.0 / 8.0 + 1.0 / 3.0) / 2.0)
    out_ref[...] = jnp.where(x >= 0.0, x, x * slope)


def _choose_tiling(N, K, Dp, Hp, tile_n_req=None):
    """Per-generation tile size & scoped-VMEM budget (128 MiB parts vs v7x's 64 MiB)."""
    try:
        kind = jax.devices()[0].device_kind.lower()
    except Exception:
        kind = ""
    if ("v5" in kind) or ("v6" in kind):
        vmem_budget = 96 * 1024 * 1024     # 128 MiB VMEM parts: raise the 16/32 MiB default
        target = 512
    else:                                  # v7x (64 MiB physical) or unknown: conservative
        vmem_budget = 40 * 1024 * 1024
        target = 256
    if tile_n_req is not None:
        target = tile_n_req

    # Cap so the 1-D grid has >=2 steps (feeds both v7x TensorCores); keep the sublane
    # dim a multiple of 16 (bf16 native tiling).
    t = min(target, max(16, _round_up(-(-N // 2), 16)))
    t = max(16, _round_up(t, 16))

    def est_bytes(tn):
        fixed = (Dp * Hp + Dp * 2 * Hp) * 2 + 3 * Hp * 4 + (2 << 20)   # weights + slack
        per_step = (2 * K * tn * Dp * 2    # gathered, bf16, double-buffered
                    + 2 * tn * Dp * 2      # node feats, bf16, double-buffered
                    + 2 * tn * 128 * 4     # in-degree column (lane padded)
                    + 2 * tn * Hp * 4      # output tile, f32, double-buffered
                    + 8 * tn * Hp * 4)     # headroom for in-kernel f32 intermediates
        return fixed + per_step

    while t > 16 and est_bytes(t) > vmem_budget:
        t -= 16
    return t, vmem_budget


def rel_gat_layer(node_feats, edge_feats, nbr_src, nbr_eid, nbr_mask, params, *, tile_n=None):
    """node_feats: [N, D] f32, edge_feats: [E, D] f32, nbr_*: [N, K] padded incoming-edge lists.

    params = (w1, b1, w2, b2, w3, b3); weights stored [in, out] (torch weight transposed),
    biases [1, out].
    """
    N, D = node_feats.shape
    K = nbr_src.shape[1]
    w1, b1, w2, b2, w3, b3 = params
    H = w1.shape[1]
    assert D == H, "score matmul in the reference requires input_size == hidden_size"

    LANE = 128
    Dp = _round_up(D, LANE)
    Hp = _round_up(H, LANE)
    tile_n, vmem_limit = _choose_tiling(N, K, Dp, Hp, tile_n)
    N_pad = _round_up(N, tile_n)

    f32, bf16 = jnp.float32, jnp.bfloat16
    node_bf = jnp.pad(node_feats.astype(f32), ((0, N_pad - N), (0, Dp - D))).astype(bf16)
    edge_bf = jnp.pad(edge_feats.astype(f32), ((0, 0), (0, Dp - D))).astype(bf16)

    # Host glue: k-major bf16 gather of per-edge inputs (src_feat + edge_feat) -> [K, N_pad, Dp].
    # TODO(synk): move this gather in-kernel (scalar-prefetched nbr_src/nbr_eid + manual DMA); skipped
    #             because at Dp<=512 each row is a 0.25-1 KiB transfer and 2*K*tile_n per-step DMA
    #             descriptors cost more than the HBM bytes they save; bf16 already halves this stream.
    gathered = node_bf[nbr_src.T] + edge_bf[nbr_eid.T]                  # [K, N, Dp] bf16
    gathered = jnp.pad(gathered, ((0, 0), (0, N_pad - N), (0, 0)))

    # Single per-node in-degree column replaces K lane-sparse mask slabs.
    deg = jnp.sum((nbr_mask > 0).astype(jnp.int32), axis=1, keepdims=True)   # [N, 1]
    deg = jnp.pad(deg, ((0, N_pad - N), (0, 0)))

    # Weights pre-transposed [D, H]; zero padding is exact.  linear2 || linear3 fused.
    w1_bf = jnp.pad(w1.astype(f32), ((0, Dp - D), (0, Hp - H))).astype(bf16)
    b1_p = jnp.pad(b1.astype(f32), ((0, 0), (0, Hp - H)))
    w23_bf = jnp.concatenate(
        [jnp.pad(w2.astype(f32), ((0, Dp - D), (0, Hp - H))),
         jnp.pad(w3.astype(f32), ((0, Dp - D), (0, Hp - H)))], axis=1).astype(bf16)   # [Dp, 2Hp]
    b23_p = jnp.concatenate(
        [jnp.pad(b2.astype(f32), ((0, 0), (0, Hp - H))),
         jnp.pad(b3.astype(f32), ((0, 0), (0, Hp - H)))], axis=1)                     # [1, 2Hp]

    grid = (N_pad // tile_n,)
    cost = pl.CostEstimate(
        flops=2 * (K + 2) * N_pad * Dp * Hp,
        transcendentals=2 * K * N_pad,
        bytes_accessed=(K + 1) * N_pad * Dp * 2 + N_pad * Hp * 4 + 3 * Dp * Hp * 2,
    )

    def build(single_buffer_weights):
        wkw = {"pipeline_mode": pl.Buffered(1)} if single_buffer_weights else {}
        in_specs = [
            pl.BlockSpec((tile_n, Dp), lambda i: (i, 0)),               # node feats (bf16)
            pl.BlockSpec((K, tile_n, Dp), lambda i: (0, i, 0)),         # gathered edge inputs (bf16)
            pl.BlockSpec((tile_n, 1), lambda i: (i, 0)),                # in-degree (int32)
            pl.BlockSpec((Dp, Hp), lambda i: (0, 0), **wkw),            # W1
            pl.BlockSpec((1, Hp), lambda i: (0, 0), **wkw),             # b1
            pl.BlockSpec((Dp, 2 * Hp), lambda i: (0, 0), **wkw),        # W2 || W3
            pl.BlockSpec((1, 2 * Hp), lambda i: (0, 0), **wkw),         # b2 || b3
        ]
        return pl.pallas_call(
            relgat_kernel,
            out_shape=jax.ShapeDtypeStruct((N_pad, Hp), f32),
            grid_spec=pltpu.PrefetchScalarGridSpec(
                num_scalar_prefetch=0,
                grid=grid,
                in_specs=in_specs,
                out_specs=pl.BlockSpec((tile_n, Hp), lambda i: (i, 0)),
            ),
            compiler_params=pltpu.CompilerParams(
                dimension_semantics=("parallel",),
                vmem_limit_bytes=vmem_limit,
            ),
            cost_estimate=cost,
        )

    args = (node_bf, gathered, deg, w1_bf, b1_p, w23_bf, b23_p)
    try:
        out = build(single_buffer_weights=True)(*args)
    except Exception:
        # pl.Buffered(1) (single-buffered invariant weights) unsupported here -> default buffering.
        out = build(single_buffer_weights=False)(*args)
    return out[:N, :H]


def reference(node_feats, edge_feats, nbr_src, nbr_eid, nbr_mask, params):
    """Pure-JAX f32 reference with identical semantics, for validation."""
    w1, b1, w2, b2, w3, b3 = params
    gathered = node_feats[nbr_src] + edge_feats[nbr_eid]          # [N, K, D]
    msg = jnp.einsum("nkd,dh->nkh", gathered, w1) + b1            # [N, K, H]
    scores = jnp.einsum("nd,nkd->nk", node_feats, msg)
    scores = jnp.where(nbr_mask > 0, scores, -1e30)
    e = jnp.exp(scores - scores.max(-1, keepdims=True)) * nbr_mask
    denom = e.sum(-1, keepdims=True)
    has_nbr = denom > 0
    w = e / jnp.where(has_nbr, denom, 1.0)
    neigh = jnp.einsum("nk,nkh->nh", w, msg)
    self2 = node_feats @ w2 + b2
    self3 = node_feats @ w3 + b3
    self_msg = jnp.where(has_nbr, self2, self3)
    x = self_msg + neigh
    slope = (1.0 / 8.0 + 1.0 / 3.0) / 2.0
    return jnp.where(x >= 0, x, x * slope)


if __name__ == "__main__":
    N, D, H = 64, 32, 32        # input_size == hidden_size (required by the score matmul)
    K = 4                       # max in-degree (padding width)

    # Deterministic small graph with varying in-degree; nodes with n % 5 == 0 are isolated.
    nbr_src = np.zeros((N, K), dtype=np.int32)
    nbr_eid = np.zeros((N, K), dtype=np.int32)
    nbr_mask = np.zeros((N, K), dtype=np.float32)
    edges = []
    for n in range(N):
        if n % 5 == 0:
            continue
        degree = 1 + (n % K)
        for j in range(degree):
            s = (3 * n + 7 * j + 1) % N
            nbr_src[n, j] = s
            nbr_eid[n, j] = len(edges)
            nbr_mask[n, j] = 1.0
            edges.append((s, n))
    E = len(edges)

    key = jax.random.PRNGKey(0)
    ks = jax.random.split(key, 8)
    node_feats = 0.5 * jax.random.normal(ks[0], (N, D), dtype=jnp.float32)
    edge_feats = 0.5 * jax.random.normal(ks[1], (E, D), dtype=jnp.float32)
    # Linear params stored as [in, out] (i.e. torch weight transposed), biases as [1, out].
    w1 = 0.1 * jax.random.normal(ks[2], (D, H), dtype=jnp.float32)
    w2 = 0.1 * jax.random.normal(ks[3], (D, H), dtype=jnp.float32)
    w3 = 0.1 * jax.random.normal(ks[4], (D, H), dtype=jnp.float32)
    b1 = 0.1 * jax.random.normal(ks[5], (1, H), dtype=jnp.float32)
    b2 = 0.1 * jax.random.normal(ks[6], (1, H), dtype=jnp.float32)
    b3 = 0.1 * jax.random.normal(ks[7], (1, H), dtype=jnp.float32)
    params = (w1, b1, w2, b2, w3, b3)

    nbr_src_j = jnp.asarray(nbr_src)
    nbr_eid_j = jnp.asarray(nbr_eid)
    nbr_mask_j = jnp.asarray(nbr_mask)

    out = rel_gat_layer(node_feats, edge_feats, nbr_src_j, nbr_eid_j, nbr_mask_j, params)
    out = jax.block_until_ready(out)

    ref = reference(node_feats, edge_feats, nbr_src_j, nbr_eid_j, nbr_mask_j, params)
    # bf16 MXU operands -> loosened tolerance (all softmax/accumulation math is f32).
    np.testing.assert_allclose(np.asarray(out), np.asarray(ref), rtol=2e-2, atol=2e-2)

    print("KERNEL_OK")
</pallas_src>

<mosaic_0001>
module attributes {stable_mosaic.version = 11 : i64} {
  func.func @relgat_kernel(%arg0: i32, %arg1: memref<32x128xbf16, #tpu.memory_space<vmem>>, %arg2: memref<4x32x128xbf16, #tpu.memory_space<vmem>>, %arg3: memref<32x1xi32, #tpu.memory_space<vmem>>, %arg4: memref<128x128xbf16, #tpu.memory_space<vmem>>, %arg5: memref<1x128xf32, #tpu.memory_space<vmem>>, %arg6: memref<128x256xbf16, #tpu.memory_space<vmem>>, %arg7: memref<1x256xf32, #tpu.memory_space<vmem>>, %arg8: memref<32x128xf32, #tpu.memory_space<vmem>>) attributes {dimension_semantics = [#tpu.dimension_semantics<parallel>], iteration_bounds = array<i64: 2>, scalar_prefetch = 0 : i64, scratch_operands = 0 : i64, tpu.core_type = #tpu.core_type<tc>, window_params = [{transform_indices = @transform_0, window_bounds = array<i64: 32, 128>}, {transform_indices = @transform_1, window_bounds = array<i64: 4, 32, 128>}, {transform_indices = @transform_2, window_bounds = array<i64: 32, 1>}, {pipeline_mode = #tpu.pipeline_mode<synchronous>, transform_indices = @transform_3, window_bounds = array<i64: 128, 128>}, {pipeline_mode = #tpu.pipeline_mode<synchronous>, transform_indices = @transform_4, window_bounds = array<i64: 1, 128>}, {pipeline_mode = #tpu.pipeline_mode<synchronous>, transform_indices = @transform_5, window_bounds = array<i64: 128, 256>}, {pipeline_mode = #tpu.pipeline_mode<synchronous>, transform_indices = @transform_6, window_bounds = array<i64: 1, 256>}, {transform_indices = @transform_7, window_bounds = array<i64: 32, 128>}]} {
    %c0 = arith.constant 0 : index
    %c0_0 = arith.constant 0 : index
    %0 = vector.load %arg1[%c0, %c0_0] : memref<32x128xbf16, #tpu.memory_space<vmem>>, vector<32x128xbf16>
    %1 = arith.extf %0 : vector<32x128xbf16> to vector<32x128xf32>
    %c0_1 = arith.constant 0 : index
    %c0_2 = arith.constant 0 : index
    %2 = vector.load %arg3[%c0_1, %c0_2] : memref<32x1xi32, #tpu.memory_space<vmem>>, vector<32x1xi32>
    %c0_3 = arith.constant 0 : index
    %c0_4 = arith.constant 0 : index
    %3 = vector.load %arg4[%c0_3, %c0_4] : memref<128x128xbf16, #tpu.memory_space<vmem>>, vector<128x128xbf16>
    %c0_5 = arith.constant 0 : index
    %c0_6 = arith.constant 0 : index
    %4 = vector.load %arg5[%c0_5, %c0_6] : memref<1x128xf32, #tpu.memory_space<vmem>>, vector<1x128xf32>
    %cst = arith.constant -1.000000e+30 : f32
    %5 = vector.broadcast %cst : f32 to vector<32x1xf32>
    %cst_7 = arith.constant 0.000000e+00 : f32
    %6 = vector.broadcast %cst_7 : f32 to vector<32x1xf32>
    %cst_8 = arith.constant 0.000000e+00 : f32
    %7 = vector.broadcast %cst_8 : f32 to vector<32x128xf32>
    %c0_i32 = arith.constant 0 : i32
    %8 = vector.broadcast %c0_i32 : i32 to vector<32x1xi32>
    %9 = arith.cmpi sgt, %2, %8 : vector<32x1xi32>
    %c0_9 = arith.constant 0 : index
    %c0_10 = arith.constant 0 : index
    %c0_11 = arith.constant 0 : index
    %10 = vector.load %arg2[%c0_9, %c0_10, %c0_11] : memref<4x32x128xbf16, #tpu.memory_space<vmem>>, vector<1x32x128xbf16>
    %11 = vector.shape_cast %10 : vector<1x32x128xbf16> to vector<32x128xbf16>
    %cst_12 = arith.constant dense<0.000000e+00> : vector<32x128xf32>
    %12 = tpu.matmul %11, %3, %cst_12 {dimension_numbers = #tpu.dot_dimension_numbers<[1], [0], [0], [1], [0, 0, 1, 1], [], []>} : vector<32x128xbf16>, vector<128x128xbf16>, vector<32x128xf32> -> vector<32x128xf32>
    %13 = vector.broadcast %4 : vector<1x128xf32> to vector<32x128xf32>
    %14 = arith.addf %12, %13 : vector<32x128xf32>
    %15 = arith.mulf %14, %1 : vector<32x128xf32>
    %cst_13 = arith.constant dense<0.000000e+00> : vector<32xf32>
    %16 = vector.multi_reduction <add>, %15, %cst_13 [1] : vector<32x128xf32> to vector<32xf32>
    %17 = vector.shape_cast %16 : vector<32xf32> to vector<32x1xf32>
    %cst_14 = arith.constant -1.000000e+30 : f32
    %18 = vector.broadcast %cst_14 : f32 to vector<32x1xf32>
    %19 = arith.select %9, %17, %18 : vector<32x1xi1>, vector<32x1xf32>
    %20 = arith.maximumf %5, %19 : vector<32x1xf32>
    %21 = arith.subf %5, %20 : vector<32x1xf32>
    %22 = math.exp %21 : vector<32x1xf32>
    %23 = arith.subf %19, %20 : vector<32x1xf32>
    %24 = math.exp %23 : vector<32x1xf32>
    %cst_15 = arith.constant 0.000000e+00 : f32
    %25 = vector.broadcast %cst_15 : f32 to vector<32x1xf32>
    %26 = arith.select %9, %24, %25 : vector<32x1xi1>, vector<32x1xf32>
    %27 = arith.mulf %6, %22 : vector<32x1xf32>
    %28 = arith.addf %27, %26 : vector<32x1xf32>
    %29 = vector.broadcast %22 : vector<32x1xf32> to vector<32x128xf32>
    %30 = arith.mulf %7, %29 : vector<32x128xf32>
    %31 = vector.broadcast %26 : vector<32x1xf32> to vector<32x128xf32>
    %32 = arith.mulf %31, %14 : vector<32x128xf32>
    %33 = arith.addf %30, %32 : vector<32x128xf32>
    %c1_i32 = arith.constant 1 : i32
    %34 = vector.broadcast %c1_i32 : i32 to vector<32x1xi32>
    %35 = arith.cmpi sgt, %2, %34 : vector<32x1xi32>
    %c1 = arith.constant 1 : index
    %c0_16 = arith.constant 0 : index
    %c0_17 = arith.constant 0 : index
    %36 = vector.load %arg2[%c1, %c0_16, %c0_17] : memref<4x32x128xbf16, #tpu.memory_space<vmem>>, vector<1x32x128xbf16>
    %37 = vector.shape_cast %36 : vector<1x32x128xbf16> to vector<32x128xbf16>
    %cst_18 = arith.constant dense<0.000000e+00> : vector<32x128xf32>
    %38 = tpu.matmul %37, %3, %cst_18 {dimension_numbers = #tpu.dot_dimension_numbers<[1], [0], [0], [1], [0, 0, 1, 1], [], []>} : vector<32x128xbf16>, vector<128x128xbf16>, vector<32x128xf32> -> vector<32x128xf32>
    %39 = vector.broadcast %4 : vector<1x128xf32> to vector<32x128xf32>
    %40 = arith.addf %38, %39 : vector<32x128xf32>
    %41 = arith.mulf %40, %1 : vector<32x128xf32>
    %cst_19 = arith.constant dense<0.000000e+00> : vector<32xf32>
    %42 = vector.multi_reduction <add>, %41, %cst_19 [1] : vector<32x128xf32> to vector<32xf32>
    %43 = vector.shape_cast %42 : vector<32xf32> to vector<32x1xf32>
    %cst_20 = arith.constant -1.000000e+30 : f32
    %44 = vector.broadcast %cst_20 : f32 to vector<32x1xf32>
    %45 = arith.select %35, %43, %44 : vector<32x1xi1>, vector<32x1xf32>
    %46 = arith.maximumf %20, %45 : vector<32x1xf32>
    %47 = arith.subf %20, %46 : vector<32x1xf32>
    %48 = math.exp %47 : vector<32x1xf32>
    %49 = arith.subf %45, %46 : vector<32x1xf32>
    %50 = math.exp %49 : vector<32x1xf32>
    %cst_21 = arith.constant 0.000000e+00 : f32
    %51 = vector.broadcast %cst_21 : f32 to vector<32x1xf32>
    %52 = arith.select %35, %50, %51 : vector<32x1xi1>, vector<32x1xf32>
    %53 = arith.mulf %28, %48 : vector<32x1xf32>
    %54 = arith.addf %53, %52 : vector<32x1xf32>
    %55 = vector.broadcast %48 : vector<32x1xf32> to vector<32x128xf32>
    %56 = arith.mulf %33, %55 : vector<32x128xf32>
    %57 = vector.broadcast %52 : vector<32x1xf32> to vector<32x128xf32>
    %58 = arith.mulf %57, %40 : vector<32x128xf32>
    %59 = arith.addf %56, %58 : vector<32x128xf32>
    %c2_i32 = arith.constant 2 : i32
    %60 = vector.broadcast %c2_i32 : i32 to vector<32x1xi32>
    %61 = arith.cmpi sgt, %2, %60 : vector<32x1xi32>
    %c2 = arith.constant 2 : index
    %c0_22 = arith.constant 0 : index
    %c0_23 = arith.constant 0 : index
    %62 = vector.load %arg2[%c2, %c0_22, %c0_23] : memref<4x32x128xbf16, #tpu.memory_space<vmem>>, vector<1x32x128xbf16>
    %63 = vector.shape_cast %62 : vector<1x32x128xbf16> to vector<32x128xbf16>
    %cst_24 = arith.constant dense<0.000000e+00> : vector<32x128xf32>
    %64 = tpu.matmul %63, %3, %cst_24 {dimension_numbers = #tpu.dot_dimension_numbers<[1], [0], [0], [1], [0, 0, 1, 1], [], []>} : vector<32x128xbf16>, vector<128x128xbf16>, vector<32x128xf32> -> vector<32x128xf32>
    %65 = vector.broadcast %4 : vector<1x128xf32> to vector<32x128xf32>
    %66 = arith.addf %64, %65 : vector<32x128xf32>
    %67 = arith.mulf %66, %1 : vector<32x128xf32>
    %cst_25 = arith.constant dense<0.000000e+00> : vector<32xf32>
    %68 = vector.multi_reduction <add>, %67, %cst_25 [1] : vector<32x128xf32> to vector<32xf32>
    %69 = vector.shape_cast %68 : vector<32xf32> to vector<32x1xf32>
    %cst_26 = arith.constant -1.000000e+30 : f32
    %70 = vector.broadcast %cst_26 : f32 to vector<32x1xf32>
    %71 = arith.select %61, %69, %70 : vector<32x1xi1>, vector<32x1xf32>
    %72 = arith.maximumf %46, %71 : vector<32x1xf32>
    %73 = arith.subf %46, %72 : vector<32x1xf32>
    %74 = math.exp %73 : vector<32x1xf32>
    %75 = arith.subf %71, %72 : vector<32x1xf32>
    %76 = math.exp %75 : vector<32x1xf32>
    %cst_27 = arith.constant 0.000000e+00 : f32
    %77 = vector.broadcast %cst_27 : f32 to vector<32x1xf32>
    %78 = arith.select %61, %76, %77 : vector<32x1xi1>, vector<32x1xf32>
    %79 = arith.mulf %54, %74 : vector<32x1xf32>
    %80 = arith.addf %79, %78 : vector<32x1xf32>
    %81 = vector.broadcast %74 : vector<32x1xf32> to vector<32x128xf32>
    %82 = arith.mulf %59, %81 : vector<32x128xf32>
    %83 = vector.broadcast %78 : vector<32x1xf32> to vector<32x128xf32>
    %84 = arith.mulf %83, %66 : vector<32x128xf32>
    %85 = arith.addf %82, %84 : vector<32x128xf32>
    %c3_i32 = arith.constant 3 : i32
    %86 = vector.broadcast %c3_i32 : i32 to vector<32x1xi32>
    %87 = arith.cmpi sgt, %2, %86 : vector<32x1xi32>
    %c3 = arith.constant 3 : index
    %c0_28 = arith.constant 0 : index
    %c0_29 = arith.constant 0 : index
    %88 = vector.load %arg2[%c3, %c0_28, %c0_29] : memref<4x32x128xbf16, #tpu.memory_space<vmem>>, vector<1x32x128xbf16>
    %89 = vector.shape_cast %88 : vector<1x32x128xbf16> to vector<32x128xbf16>
    %cst_30 = arith.constant dense<0.000000e+00> : vector<32x128xf32>
    %90 = tpu.matmul %89, %3, %cst_30 {dimension_numbers = #tpu.dot_dimension_numbers<[1], [0], [0], [1], [0, 0, 1, 1], [], []>} : vector<32x128xbf16>, vector<128x128xbf16>, vector<32x128xf32> -> vector<32x128xf32>
    %91 = vector.broadcast %4 : vector<1x128xf32> to vector<32x128xf32>
    %92 = arith.addf %90, %91 : vector<32x128xf32>
    %93 = arith.mulf %92, %1 : vector<32x128xf32>
    %cst_31 = arith.constant dense<0.000000e+00> : vector<32xf32>
    %94 = vector.multi_reduction <add>, %93, %cst_31 [1] : vector<32x128xf32> to vector<32xf32>
    %95 = vector.shape_cast %94 : vector<32xf32> to vector<32x1xf32>
    %cst_32 = arith.constant -1.000000e+30 : f32
    %96 = vector.broadcast %cst_32 : f32 to vector<32x1xf32>
    %97 = arith.select %87, %95, %96 : vector<32x1xi1>, vector<32x1xf32>
    %98 = arith.maximumf %72, %97 : vector<32x1xf32>
    %99 = arith.subf %72, %98 : vector<32x1xf32>
    %100 = math.exp %99 : vector<32x1xf32>
    %101 = arith.subf %97, %98 : vector<32x1xf32>
    %102 = math.exp %101 : vector<32x1xf32>
    %cst_33 = arith.constant 0.000000e+00 : f32
    %103 = vector.broadcast %cst_33 : f32 to vector<32x1xf32>
    %104 = arith.select %87, %102, %103 : vector<32x1xi1>, vector<32x1xf32>
    %105 = arith.mulf %80, %100 : vector<32x1xf32>
    %106 = arith.addf %105, %104 : vector<32x1xf32>
    %107 = vector.broadcast %100 : vector<32x1xf32> to vector<32x128xf32>
    %108 = arith.mulf %85, %107 : vector<32x128xf32>
    %109 = vector.broadcast %104 : vector<32x1xf32> to vector<32x128xf32>
    %110 = arith.mulf %109, %92 : vector<32x128xf32>
    %111 = arith.addf %108, %110 : vector<32x128xf32>
    %c0_i32_34 = arith.constant 0 : i32
    %112 = vector.broadcast %c0_i32_34 : i32 to vector<32x1xi32>
    %113 = arith.cmpi sgt, %2, %112 : vector<32x1xi32>
    %cst_35 = arith.constant 1.000000e+00 : f32
    %114 = vector.broadcast %cst_35 : f32 to vector<32x1xf32>
    %115 = arith.select %113, %106, %114 : vector<32x1xi1>, vector<32x1xf32>
    %116 = tpu.reciprocal %115 {approx = true} : vector<32x1xf32> -> vector<32x1xf32>
    %117 = vector.broadcast %116 : vector<32x1xf32> to vector<32x128xf32>
    %118 = arith.mulf %111, %117 : vector<32x128xf32>
    %c0_36 = arith.constant 0 : index
    %c0_37 = arith.constant 0 : index
    %119 = vector.load %arg6[%c0_36, %c0_37] : memref<128x256xbf16, #tpu.memory_space<vmem>>, vector<128x256xbf16>
    %cst_38 = arith.constant dense<0.000000e+00> : vector<32x256xf32>
    %120 = tpu.matmul %0, %119, %cst_38 {dimension_numbers = #tpu.dot_dimension_numbers<[1], [0], [0], [1], [0, 0, 1, 1], [], []>} : vector<32x128xbf16>, vector<128x256xbf16>, vector<32x256xf32> -> vector<32x256xf32>
    %c0_39 = arith.constant 0 : index
    %c0_40 = arith.constant 0 : index
    %121 = vector.load %arg7[%c0_39, %c0_40] : memref<1x256xf32, #tpu.memory_space<vmem>>, vector<1x256xf32>
    %122 = vector.broadcast %121 : vector<1x256xf32> to vector<32x256xf32>
    %123 = arith.addf %120, %122 : vector<32x256xf32>
    %124 = vector.extract_strided_slice %123 {offsets = [0, 0], sizes = [32, 128], strides = [1, 1]} : vector<32x256xf32> to vector<32x128xf32>
    %125 = vector.extract_strided_slice %123 {offsets = [0, 128], sizes = [32, 128], strides = [1, 1]} : vector<32x256xf32> to vector<32x128xf32>
    %126 = vector.shape_cast %113 : vector<32x1xi1> to vector<32x1xi1>
    %127 = vector.broadcast %126 : vector<32x1xi1> to vector<32x128xi1>
    %128 = arith.select %127, %124, %125 : vector<32x128xi1>, vector<32x128xf32>
    %129 = arith.addf %128, %118 : vector<32x128xf32>
    %cst_41 = arith.constant 0.000000e+00 : f32
    %130 = vector.broadcast %cst_41 : f32 to vector<32x128xf32>
    %131 = arith.cmpf oge, %129, %130 : vector<32x128xf32>
    %cst_42 = arith.constant 0.229166672 : f32
    %132 = vector.broadcast %cst_42 : f32 to vector<32x128xf32>
    %133 = arith.mulf %129, %132 : vector<32x128xf32>
    %134 = arith.select %131, %129, %133 : vector<32x128xi1>, vector<32x128xf32>
    %c0_43 = arith.constant 0 : index
    %c0_44 = arith.constant 0 : index
    %135 = vector.load %arg8[%c0_43, %c0_44] : memref<32x128xf32, #tpu.memory_space<vmem>>, vector<32x128xf32>
    tpu.vector_store %arg8[%c0_43, %c0_44], %134 {strides = array<i32>} : memref<32x128xf32, #tpu.memory_space<vmem>>, vector<32x128xf32>,
    return
  }
  func.func @transform_0(%arg0: i32) -> (i32, i32) {
    %c0_i32 = arith.constant 0 : i32
    %c0_i32_0 = arith.constant 0 : i32
    return %arg0, %c0_i32 : i32, i32
  }
  func.func @transform_1(%arg0: i32) -> (i32, i32, i32) {
    %c0_i32 = arith.constant 0 : i32
    %c0_i32_0 = arith.constant 0 : i32
    %c0_i32_1 = arith.constant 0 : i32
    return %c0_i32, %arg0, %c0_i32_0 : i32, i32, i32
  }
  func.func @transform_2(%arg0: i32) -> (i32, i32) {
    %c0_i32 = arith.constant 0 : i32
    %c0_i32_0 = arith.constant 0 : i32
    return %arg0, %c0_i32 : i32, i32
  }
  func.func @transform_3(%arg0: i32) -> (i32, i32) {
    %c0_i32 = arith.constant 0 : i32
    %c0_i32_0 = arith.constant 0 : i32
    %c0_i32_1 = arith.constant 0 : i32
    return %c0_i32, %c0_i32_0 : i32, i32
  }
  func.func @transform_4(%arg0: i32) -> (i32, i32) {
    %c0_i32 = arith.constant 0 : i32
    %c0_i32_0 = arith.constant 0 : i32
    %c0_i32_1 = arith.constant 0 : i32
    return %c0_i32, %c0_i32_0 : i32, i32
  }
  func.func @transform_5(%arg0: i32) -> (i32, i32) {
    %c0_i32 = arith.constant 0 : i32
    %c0_i32_0 = arith.constant 0 : i32
    %c0_i32_1 = arith.constant 0 : i32
    return %c0_i32, %c0_i32_0 : i32, i32
  }
  func.func @transform_6(%arg0: i32) -> (i32, i32) {
    %c0_i32 = arith.constant 0 : i32
    %c0_i32_0 = arith.constant 0 : i32
    %c0_i32_1 = arith.constant 0 : i32
    return %c0_i32, %c0_i32_0 : i32, i32
  }
  func.func @transform_7(%arg0: i32) -> (i32, i32) {
    %c0_i32 = arith.constant 0 : i32
    %c0_i32_0 = arith.constant 0 : i32
    return %arg0, %c0_i32 : i32, i32
  }
}

module attributes {stable_mosaic.version = 11 : i64} {
  func.func @relgat_kernel(%arg0: i32, %arg1: memref<32x128xbf16, #tpu.memory_space<vmem>>, %arg2: memref<4x32x128xbf16, #tpu.memory_space<vmem>>, %arg3: memref<32x1xi32, #tpu.memory_space<vmem>>, %arg4: memref<128x128xbf16, #tpu.memory_space<vmem>>, %arg5: memref<1x128xf32, #tpu.memory_space<vmem>>, %arg6: memref<128x256xbf16, #tpu.memory_space<vmem>>, %arg7: memref<1x256xf32, #tpu.memory_space<vmem>>, %arg8: memref<32x128xf32, #tpu.memory_space<vmem>>) attributes {dimension_semantics = [#tpu.dimension_semantics<parallel>], iteration_bounds = array<i64: 2>, scalar_prefetch = 0 : i64, scratch_operands = 0 : i64, tpu.core_type = #tpu.core_type<tc>, window_params = [{transform_indices = @transform_0, window_bounds = array<i64: 32, 128>}, {transform_indices = @transform_1, window_bounds = array<i64: 4, 32, 128>}, {transform_indices = @transform_2, window_bounds = array<i64: 32, 1>}, {pipeline_mode = #tpu.pipeline_mode<synchronous>, transform_indices = @transform_3, window_bounds = array<i64: 128, 128>}, {pipeline_mode = #tpu.pipeline_mode<synchronous>, transform_indices = @transform_4, window_bounds = array<i64: 1, 128>}, {pipeline_mode = #tpu.pipeline_mode<synchronous>, transform_indices = @transform_5, window_bounds = array<i64: 128, 256>}, {pipeline_mode = #tpu.pipeline_mode<synchronous>, transform_indices = @transform_6, window_bounds = array<i64: 1, 256>}, {transform_indices = @transform_7, window_bounds = array<i64: 32, 128>}]} {
    %c0 = arith.constant 0 : index
    %c0_0 = arith.constant 0 : index
    %0 = vector.load %arg1[%c0, %c0_0] : memref<32x128xbf16, #tpu.memory_space<vmem>>, vector<32x128xbf16>
    %1 = arith.extf %0 : vector<32x128xbf16> to vector<32x128xf32>
    %c0_1 = arith.constant 0 : index
    %c0_2 = arith.constant 0 : index
    %2 = vector.load %arg3[%c0_1, %c0_2] : memref<32x1xi32, #tpu.memory_space<vmem>>, vector<32x1xi32>
    %c0_3 = arith.constant 0 : index
    %c0_4 = arith.constant 0 : index
    %3 = vector.load %arg4[%c0_3, %c0_4] : memref<128x128xbf16, #tpu.memory_space<vmem>>, vector<128x128xbf16>
    %c0_5 = arith.constant 0 : index
    %c0_6 = arith.constant 0 : index
    %4 = vector.load %arg5[%c0_5, %c0_6] : memref<1x128xf32, #tpu.memory_space<vmem>>, vector<1x128xf32>
    %cst = arith.constant -1.000000e+30 : f32
    %5 = vector.broadcast %cst : f32 to vector<32x1xf32>
    %cst_7 = arith.constant 0.000000e+00 : f32
    %6 = vector.broadcast %cst_7 : f32 to vector<32x1xf32>
    %cst_8 = arith.constant 0.000000e+00 : f32
    %7 = vector.broadcast %cst_8 : f32 to vector<32x128xf32>
    %c0_i32 = arith.constant 0 : i32
    %8 = vector.broadcast %c0_i32 : i32 to vector<32x1xi32>
    %9 = arith.cmpi sgt, %2, %8 : vector<32x1xi32>
    %c0_9 = arith.constant 0 : index
    %c0_10 = arith.constant 0 : index
    %c0_11 = arith.constant 0 : index
    %10 = vector.load %arg2[%c0_9, %c0_10, %c0_11] : memref<4x32x128xbf16, #tpu.memory_space<vmem>>, vector<1x32x128xbf16>
    %11 = vector.shape_cast %10 : vector<1x32x128xbf16> to vector<32x128xbf16>
    %cst_12 = arith.constant dense<0.000000e+00> : vector<32x128xf32>
    %12 = tpu.matmul %11, %3, %cst_12 {dimension_numbers = #tpu.dot_dimension_numbers<[1], [0], [0], [1], [0, 0, 1, 1], [], []>} : vector<32x128xbf16>, vector<128x128xbf16>, vector<32x128xf32> -> vector<32x128xf32>
    %13 = vector.broadcast %4 : vector<1x128xf32> to vector<32x128xf32>
    %14 = arith.addf %12, %13 : vector<32x128xf32>
    %15 = arith.mulf %14, %1 : vector<32x128xf32>
    %cst_13 = arith.constant dense<0.000000e+00> : vector<32xf32>
    %16 = vector.multi_reduction <add>, %15, %cst_13 [1] : vector<32x128xf32> to vector<32xf32>
    %17 = vector.shape_cast %16 : vector<32xf32> to vector<32x1xf32>
    %cst_14 = arith.constant -1.000000e+30 : f32
    %18 = vector.broadcast %cst_14 : f32 to vector<32x1xf32>
    %19 = arith.select %9, %17, %18 : vector<32x1xi1>, vector<32x1xf32>
    %20 = arith.maximumf %5, %19 : vector<32x1xf32>
    %21 = arith.subf %5, %20 : vector<32x1xf32>
    %22 = math.exp %21 : vector<32x1xf32>
    %23 = arith.subf %19, %20 : vector<32x1xf32>
    %24 = math.exp %23 : vector<32x1xf32>
    %cst_15 = arith.constant 0.000000e+00 : f32
    %25 = vector.broadcast %cst_15 : f32 to vector<32x1xf32>
    %26 = arith.select %9, %24, %25 : vector<32x1xi1>, vector<32x1xf32>
    %27 = arith.mulf %6, %22 : vector<32x1xf32>
    %28 = arith.addf %27, %26 : vector<32x1xf32>
    %29 = vector.broadcast %22 : vector<32x1xf32> to vector<32x128xf32>
    %30 = arith.mulf %7, %29 : vector<32x128xf32>
    %31 = vector.broadcast %26 : vector<32x1xf32> to vector<32x128xf32>
    %32 = arith.mulf %31, %14 : vector<32x128xf32>
    %33 = arith.addf %30, %32 : vector<32x128xf32>
    %c1_i32 = arith.constant 1 : i32
    %34 = vector.broadcast %c1_i32 : i32 to vector<32x1xi32>
    %35 = arith.cmpi sgt, %2, %34 : vector<32x1xi32>
    %c1 = arith.constant 1 : index
    %c0_16 = arith.constant 0 : index
    %c0_17 = arith.constant 0 : index
    %36 = vector.load %arg2[%c1, %c0_16, %c0_17] : memref<4x32x128xbf16, #tpu.memory_space<vmem>>, vector<1x32x128xbf16>
    %37 = vector.shape_cast %36 : vector<1x32x128xbf16> to vector<32x128xbf16>
    %cst_18 = arith.constant dense<0.000000e+00> : vector<32x128xf32>
    %38 = tpu.matmul %37, %3, %cst_18 {dimension_numbers = #tpu.dot_dimension_numbers<[1], [0], [0], [1], [0, 0, 1, 1], [], []>} : vector<32x128xbf16>, vector<128x128xbf16>, vector<32x128xf32> -> vector<32x128xf32>
    %39 = vector.broadcast %4 : vector<1x128xf32> to vector<32x128xf32>
    %40 = arith.addf %38, %39 : vector<32x128xf32>
    %41 = arith.mulf %40, %1 : vector<32x128xf32>
    %cst_19 = arith.constant dense<0.000000e+00> : vector<32xf32>
    %42 = vector.multi_reduction <add>, %41, %cst_19 [1] : vector<32x128xf32> to vector<32xf32>
    %43 = vector.shape_cast %42 : vector<32xf32> to vector<32x1xf32>
    %cst_20 = arith.constant -1.000000e+30 : f32
    %44 = vector.broadcast %cst_20 : f32 to vector<32x1xf32>
    %45 = arith.select %35, %43, %44 : vector<32x1xi1>, vector<32x1xf32>
    %46 = arith.maximumf %20, %45 : vector<32x1xf32>
    %47 = arith.subf %20, %46 : vector<32x1xf32>
    %48 = math.exp %47 : vector<32x1xf32>
    %49 = arith.subf %45, %46 : vector<32x1xf32>
    %50 = math.exp %49 : vector<32x1xf32>
    %cst_21 = arith.constant 0.000000e+00 : f32
    %51 = vector.broadcast %cst_21 : f32 to vector<32x1xf32>
    %52 = arith.select %35, %50, %51 : vector<32x1xi1>, vector<32x1xf32>
    %53 = arith.mulf %28, %48 : vector<32x1xf32>
    %54 = arith.addf %53, %52 : vector<32x1xf32>
    %55 = vector.broadcast %48 : vector<32x1xf32> to vector<32x128xf32>
    %56 = arith.mulf %33, %55 : vector<32x128xf32>
    %57 = vector.broadcast %52 : vector<32x1xf32> to vector<32x128xf32>
    %58 = arith.mulf %57, %40 : vector<32x128xf32>
    %59 = arith.addf %56, %58 : vector<32x128xf32>
    %c2_i32 = arith.constant 2 : i32
    %60 = vector.broadcast %c2_i32 : i32 to vector<32x1xi32>
    %61 = arith.cmpi sgt, %2, %60 : vector<32x1xi32>
    %c2 = arith.constant 2 : index
    %c0_22 = arith.constant 0 : index
    %c0_23 = arith.constant 0 : index
    %62 = vector.load %arg2[%c2, %c0_22, %c0_23] : memref<4x32x128xbf16, #tpu.memory_space<vmem>>, vector<1x32x128xbf16>
    %63 = vector.shape_cast %62 : vector<1x32x128xbf16> to vector<32x128xbf16>
    %cst_24 = arith.constant dense<0.000000e+00> : vector<32x128xf32>
    %64 = tpu.matmul %63, %3, %cst_24 {dimension_numbers = #tpu.dot_dimension_numbers<[1], [0], [0], [1], [0, 0, 1, 1], [], []>} : vector<32x128xbf16>, vector<128x128xbf16>, vector<32x128xf32> -> vector<32x128xf32>
    %65 = vector.broadcast %4 : vector<1x128xf32> to vector<32x128xf32>
    %66 = arith.addf %64, %65 : vector<32x128xf32>
    %67 = arith.mulf %66, %1 : vector<32x128xf32>
    %cst_25 = arith.constant dense<0.000000e+00> : vector<32xf32>
    %68 = vector.multi_reduction <add>, %67, %cst_25 [1] : vector<32x128xf32> to vector<32xf32>
    %69 = vector.shape_cast %68 : vector<32xf32> to vector<32x1xf32>
    %cst_26 = arith.constant -1.000000e+30 : f32
    %70 = vector.broadcast %cst_26 : f32 to vector<32x1xf32>
    %71 = arith.select %61, %69, %70 : vector<32x1xi1>, vector<32x1xf32>
    %72 = arith.maximumf %46, %71 : vector<32x1xf32>
    %73 = arith.subf %46, %72 : vector<32x1xf32>
    %74 = math.exp %73 : vector<32x1xf32>
    %75 = arith.subf %71, %72 : vector<32x1xf32>
    %76 = math.exp %75 : vector<32x1xf32>
    %cst_27 = arith.constant 0.000000e+00 : f32
    %77 = vector.broadcast %cst_27 : f32 to vector<32x1xf32>
    %78 = arith.select %61, %76, %77 : vector<32x1xi1>, vector<32x1xf32>
    %79 = arith.mulf %54, %74 : vector<32x1xf32>
    %80 = arith.addf %79, %78 : vector<32x1xf32>
    %81 = vector.broadcast %74 : vector<32x1xf32> to vector<32x128xf32>
    %82 = arith.mulf %59, %81 : vector<32x128xf32>
    %83 = vector.broadcast %78 : vector<32x1xf32> to vector<32x128xf32>
    %84 = arith.mulf %83, %66 : vector<32x128xf32>
    %85 = arith.addf %82, %84 : vector<32x128xf32>
    %c3_i32 = arith.constant 3 : i32
    %86 = vector.broadcast %c3_i32 : i32 to vector<32x1xi32>
    %87 = arith.cmpi sgt, %2, %86 : vector<32x1xi32>
    %c3 = arith.constant 3 : index
    %c0_28 = arith.constant 0 : index
    %c0_29 = arith.constant 0 : index
    %88 = vector.load %arg2[%c3, %c0_28, %c0_29] : memref<4x32x128xbf16, #tpu.memory_space<vmem>>, vector<1x32x128xbf16>
    %89 = vector.shape_cast %88 : vector<1x32x128xbf16> to vector<32x128xbf16>
    %cst_30 = arith.constant dense<0.000000e+00> : vector<32x128xf32>
    %90 = tpu.matmul %89, %3, %cst_30 {dimension_numbers = #tpu.dot_dimension_numbers<[1], [0], [0], [1], [0, 0, 1, 1], [], []>} : vector<32x128xbf16>, vector<128x128xbf16>, vector<32x128xf32> -> vector<32x128xf32>
    %91 = vector.broadcast %4 : vector<1x128xf32> to vector<32x128xf32>
    %92 = arith.addf %90, %91 : vector<32x128xf32>
    %93 = arith.mulf %92, %1 : vector<32x128xf32>
    %cst_31 = arith.constant dense<0.000000e+00> : vector<32xf32>
    %94 = vector.multi_reduction <add>, %93, %cst_31 [1] : vector<32x128xf32> to vector<32xf32>
    %95 = vector.shape_cast %94 : vector<32xf32> to vector<32x1xf32>
    %cst_32 = arith.constant -1.000000e+30 : f32
    %96 = vector.broadcast %cst_32 : f32 to vector<32x1xf32>
    %97 = arith.select %87, %95, %96 : vector<32x1xi1>, vector<32x1xf32>
    %98 = arith.maximumf %72, %97 : vector<32x1xf32>
    %99 = arith.subf %72, %98 : vector<32x1xf32>
    %100 = math.exp %99 : vector<32x1xf32>
    %101 = arith.subf %97, %98 : vector<32x1xf32>
    %102 = math.exp %101 : vector<32x1xf32>
    %cst_33 = arith.constant 0.000000e+00 : f32
    %103 = vector.broadcast %cst_33 : f32 to vector<32x1xf32>
    %104 = arith.select %87, %102, %103 : vector<32x1xi1>, vector<32x1xf32>
    %105 = arith.mulf %80, %100 : vector<32x1xf32>
    %106 = arith.addf %105, %104 : vector<32x1xf32>
    %107 = vector.broadcast %100 : vector<32x1xf32> to vector<32x128xf32>
    %108 = arith.mulf %85, %107 : vector<32x128xf32>
    %109 = vector.broadcast %104 : vector<32x1xf32> to vector<32x128xf32>
    %110 = arith.mulf %109, %92 : vector<32x128xf32>
    %111 = arith.addf %108, %110 : vector<32x128xf32>
    %c0_i32_34 = arith.constant 0 : i32
    %112 = vector.broadcast %c0_i32_34 : i32 to vector<32x1xi32>
    %113 = arith.cmpi sgt, %2, %112 : vector<32x1xi32>
    %cst_35 = arith.constant 1.000000e+00 : f32
    %114 = vector.broadcast %cst_35 : f32 to vector<32x1xf32>
    %115 = arith.select %113, %106, %114 : vector<32x1xi1>, vector<32x1xf32>
    %116 = tpu.reciprocal %115 {approx = true} : vector<32x1xf32> -> vector<32x1xf32>
    %117 = vector.broadcast %116 : vector<32x1xf32> to vector<32x128xf32>
    %118 = arith.mulf %111, %117 : vector<32x128xf32>
    %c0_36 = arith.constant 0 : index
    %c0_37 = arith.constant 0 : index
    %119 = vector.load %arg6[%c0_36, %c0_37] : memref<128x256xbf16, #tpu.memory_space<vmem>>, vector<128x256xbf16>
    %cst_38 = arith.constant dense<0.000000e+00> : vector<32x256xf32>
    %120 = tpu.matmul %0, %119, %cst_38 {dimension_numbers = #tpu.dot_dimension_numbers<[1], [0], [0], [1], [0, 0, 1, 1], [], []>} : vector<32x128xbf16>, vector<128x256xbf16>, vector<32x256xf32> -> vector<32x256xf32>
    %c0_39 = arith.constant 0 : index
    %c0_40 = arith.constant 0 : index
    %121 = vector.load %arg7[%c0_39, %c0_40] : memref<1x256xf32, #tpu.memory_space<vmem>>, vector<1x256xf32>
    %122 = vector.broadcast %121 : vector<1x256xf32> to vector<32x256xf32>
    %123 = arith.addf %120, %122 : vector<32x256xf32>
    %124 = vector.extract_strided_slice %123 {offsets = [0, 0], sizes = [32, 128], strides = [1, 1]} : vector<32x256xf32> to vector<32x128xf32>
    %125 = vector.extract_strided_slice %123 {offsets = [0, 128], sizes = [32, 128], strides = [1, 1]} : vector<32x256xf32> to vector<32x128xf32>
    %126 = vector.shape_cast %113 : vector<32x1xi1> to vector<32x1xi1>
    %127 = vector.broadcast %126 : vector<32x1xi1> to vector<32x128xi1>
    %128 = arith.select %127, %124, %125 : vector<32x128xi1>, vector<32x128xf32>
    %129 = arith.addf %128, %118 : vector<32x128xf32>
    %cst_41 = arith.constant 0.000000e+00 : f32
    %130 = vector.broadcast %cst_41 : f32 to vector<32x128xf32>
    %131 = arith.cmpf oge, %129, %130 : vector<32x128xf32>
    %cst_42 = arith.constant 0.229166672 : f32
    %132 = vector.broadcast %cst_42 : f32 to vector<32x128xf32>
    %133 = arith.mulf %129, %132 : vector<32x128xf32>
    %134 = arith.select %131, %129, %133 : vector<32x128xi1>, vector<32x128xf32>
    %c0_43 = arith.constant 0 : index
    %c0_44 = arith.constant 0 : index
    %135 = vector.load %arg8[%c0_43, %c0_44] : memref<32x128xf32, #tpu.memory_space<vmem>>, vector<32x128xf32>
    tpu.vector_store %arg8[%c0_43, %c0_44], %134 {strides = array<i32>} : memref<32x128xf32, #tpu.memory_space<vmem>>, vector<32x128xf32>,
    return
  }
  func.func @transform_0(%arg0: i32) -> (i32, i32) {
    %c0_i32 = arith.constant 0 : i32
    %c0_i32_0 = arith.constant 0 : i32
    return %arg0, %c0_i32 : i32, i32
  }
  func.func @transform_1(%arg0: i32) -> (i32, i32, i32) {
    %c0_i32 = arith.constant 0 : i32
    %c0_i32_0 = arith.constant 0 : i32
    %c0_i32_1 = arith.constant 0 : i32
    return %c0_i32, %arg0, %c0_i32_0 : i32, i32, i32
  }
  func.func @transform_2(%arg0: i32) -> (i32, i32) {
    %c0_i32 = arith.constant 0 : i32
    %c0_i32_0 = arith.constant 0 : i32
    return %arg0, %c0_i32 : i32, i32
  }
  func.func @transform_3(%arg0: i32) -> (i32, i32) {
    %c0_i32 = arith.constant 0 : i32
    %c0_i32_0 = arith.constant 0 : i32
    %c0_i32_1 = arith.constant 0 : i32
    return %c0_i32, %c0_i32_0 : i32, i32
  }
  func.func @transform_4(%arg0: i32) -> (i32, i32) {
    %c0_i32 = arith.constant 0 : i32
    %c0_i32_0 = arith.constant 0 : i32
    %c0_i32_1 = arith.constant 0 : i32
    return %c0_i32, %c0_i32_0 : i32, i32
  }
  func.func @transform_5(%arg0: i32) -> (i32, i32) {
    %c0_i32 = arith.constant 0 : i32
    %c0_i32_0 = arith.constant 0 : i32
    %c0_i32_1 = arith.constant 0 : i32
    return %c0_i32, %c0_i32_0 : i32, i32
  }
  func.func @transform_6(%arg0: i32) -> (i32, i32) {
    %c0_i32 = arith.constant 0 : i32
    %c0_i32_0 = arith.constant 0 : i32
    %c0_i32_1 = arith.constant 0 : i32
    return %c0_i32, %c0_i32_0 : i32, i32
  }
  func.func @transform_7(%arg0: i32) -> (i32, i32) {
    %c0_i32 = arith.constant 0 : i32
    %c0_i32_0 = arith.constant 0 : i32
    return %arg0, %c0_i32 : i32, i32
  }
}

</mosaic_0001>

<llo_original>
// kernel: tpu_custom_call.1
$region0: #{tpu_custom_call.1}
  #allocation0 [shape = 'u32[]', space=smem, size = 0x4, offset = 0x4, fixed_abs, tag = 'smem constant byte address 0x4 - core index']
  #allocation1 [shape = 'u32[144,128]{1,0:T(1,128)}', space=vmem, size = 0x12000, scoped, tag = 'internal scratch']
  #allocation9 [shape = 's32[]', space=sflag, size = 0x4, offset = 0, fixed_abs, tag = 'sflag constant byte address 0x0 - dummy sync flag']
  %s0 = inlined_call_operand.hbm [shape: bf16[64,128], index: 0, kind: input, shape index: {}]
  %s1 = inlined_call_operand.hbm [shape: bf16[4,64,128], index: 1, kind: input, shape index: {}]
  %s2 = inlined_call_operand.vmem [shape: s32[64,1], index: 2, kind: input, shape index: {}]
  %s3 = inlined_call_operand.vmem [shape: bf16[128,128], index: 3, kind: input, shape index: {}]
  %s4 = inlined_call_operand.vmem [shape: f32[1,128], index: 4, kind: input, shape index: {}]
  %s5 = inlined_call_operand.hbm [shape: bf16[128,256], index: 5, kind: input, shape index: {}]
  %s6 = inlined_call_operand.vmem [shape: f32[1,256], index: 6, kind: input, shape index: {}]
  %s7 = inlined_call_operand.hbm [shape: f32[64,128], index: 7, kind: output, shape index: {}]
  %s8 = sld [smem:[#allocation0]]
  $region73: #{tpu_custom_call.1} parent=0
    _
  %s10 = ssub.s32 1, %s8
  %s11 = scalar_select 0, %s10, %s8
  $region1: #{tpu_custom_call.1} parent=0
    #allocation2 [shape = 'u8[16384]{0}', space=vmem, size = 0x4000, scoped, tag = 'input window, operand 0']
    #allocation3 [shape = 's32[2]{0}', space=sflag, size = 0x8, scoped, tag = 'scoped memory for tpu_custom_call.1']
    #allocation4 [shape = 's32[2]{0}', space=sflag, size = 0x8, scoped, tag = 'scoped memory for tpu_custom_call.1']
    #allocation5 [shape = 'u8[65536]{0}', space=vmem, size = 0x10000, scoped, tag = 'input window, operand 1']
    #allocation6 [shape = 's32[2]{0}', space=sflag, size = 0x8, scoped, tag = 'scoped memory for tpu_custom_call.1']
    #allocation7 [shape = 'u8[65536]{0}', space=vmem, size = 0x10000, scoped, tag = 'input window, operand 5, single buffered']
    #allocation8 [shape = 'u8[32768]{0}', space=vmem, size = 0x8000, scoped, tag = 'output window, operand 0']
    %12 = vsyncpa [#allocation3], 0
    %s13 = scalar_lea.sflag [#allocation3], 1
    %14 = vsyncpa %s13, 0
    %15 = vsyncpa [#allocation6], 0
    %s16 = scalar_lea.sflag [#allocation6], 1
    %17 = vsyncpa %s16, 0
    %18 = vsyncpa [#allocation4], 0
    %s19 = scalar_lea.sflag [#allocation4], 1
    %20 = vsyncpa %s19, 0
    loop: start=0, step=1, limit=4
    $region2: #{tpu_custom_call.1} parent=1 // loop_pre_header
      _
    $region3: #{tpu_custom_call.1} parent=1 // loop_header
      %s22 = sphi 0, %s26
      %p23 = scmp.ge.s32.totalorder %s22, 4
      %s32 = sphi 0, %s34
      %s35 = sphi 0, %s32
      %s36 = sphi 0, %s35
      %s52 = sphi 0, %s36
      %s58 = sphi 0, %s60
      %s61 = sphi 0, %s58
      %s62 = sphi 0, %s61
      %s78 = sphi 0, %s62
      %s84 = sphi 0, %s86
      %s87 = sphi 0, %s84
      %s88 = sphi 0, %s87
      %s104 = sphi 0, %s88
      %s108 = sphi 0, %s108
      %s110 = sphi 0, %s108
      %s111 = sphi 0, %s110
      %s125 = sphi 0, %s111
      %s129 = sphi 0, %s129
      %s131 = sphi 0, %s129
      %s132 = sphi 0, %s131
      %s146 = sphi 0, %s132
      %s150 = sphi 0, %s150
      %s152 = sphi 0, %s150
      %s153 = sphi 0, %s152
      %s167 = sphi 0, %s153
      %s171 = sphi 0, %s171
      %s173 = sphi 0, %s171
      %s174 = sphi 0, %s173
      %s188 = sphi 0, %s174
      %s194 = sphi 0, %s196
      %s197 = sphi 0, %s194
      %s198 = sphi 0, %s197
      %s214 = sphi 0, %s198
    $region4: #{tpu_custom_call.1} parent=1 // loop_header_branch
      %25 = sbr.rel (%p23) target = $region8
    $region5: #{tpu_custom_call.1} parent=1 // loop_body
      %s27 = ssub.s32 %s22, 1
      %s28 = ssub.s32 %s22, 2
      %s29 = sadd.s32 %s22, 1
      %s30 = ssub.s32 %s22, %s29
      %p31 = scmp.eq.s32.totalorder %s30, 0
      %s33 = sadd.s32 %s32, 1
      %s34 = scalar_select %p31, %s32, %s33
      %p37 = pneg %p31
      %p38 = scmp.eq.s32.totalorder %s22, 1
      %p39 = por %p37, %p38
      %p40 = scmp.ne.s32.totalorder %s32, %s35
      %p41 = scmp.eq.s32.totalorder %s22, 0
      %p42 = por %p40, %p41
      %p43 = scmp.ne.s32.totalorder %s32, %s35
      %p44 = scmp.eq.s32.totalorder %s27, 1
      %p45 = por %p43, %p44
      %p46 = scmp.ne.s32.totalorder %s35, %s36
      %p47 = scmp.eq.s32.totalorder %s27, 0
      %p48 = por %p46, %p47
      %p49 = scmp.ne.s32.totalorder %s35, %s36
      %p50 = scmp.eq.s32.totalorder %s28, 1
      %p51 = por %p49, %p50
      %p53 = scmp.ne.s32.totalorder %s36, %s52
      %p54 = scmp.eq.s32.totalorder %s28, 0
      %p55 = por %p53, %p54
      %s56 = ssub.s32 %s22, %s29
      %p57 = scmp.eq.s32.totalorder %s56, 0
      %s59 = sadd.s32 %s58, 1
      %s60 = scalar_select %p57, %s58, %s59
      %p63 = pneg %p57
      %p64 = scmp.eq.s32.totalorder %s22, 1
      %p65 = por %p63, %p64
      %p66 = scmp.ne.s32.totalorder %s58, %s61
      %p67 = scmp.eq.s32.totalorder %s22, 0
      %p68 = por %p66, %p67
      %p69 = scmp.ne.s32.totalorder %s58, %s61
      %p70 = scmp.eq.s32.totalorder %s27, 1
      %p71 = por %p69, %p70
      %p72 = scmp.ne.s32.totalorder %s61, %s62
      %p73 = scmp.eq.s32.totalorder %s27, 0
      %p74 = por %p72, %p73
      %p75 = scmp.ne.s32.totalorder %s61, %s62
      %p76 = scmp.eq.s32.totalorder %s28, 1
      %p77 = por %p75, %p76
      %p79 = scmp.ne.s32.totalorder %s62, %s78
      %p80 = scmp.eq.s32.totalorder %s28, 0
      %p81 = por %p79, %p80
      %s82 = ssub.s32 %s22, %s29
      %p83 = scmp.eq.s32.totalorder %s82, 0
      %s85 = sadd.s32 %s84, 1
      %s86 = scalar_select %p83, %s84, %s85
      %p89 = pneg %p83
      %p90 = scmp.eq.s32.totalorder %s22, 1
      %p91 = por %p89, %p90
      %p92 = scmp.ne.s32.totalorder %s84, %s87
      %p93 = scmp.eq.s32.totalorder %s22, 0
      %p94 = por %p92, %p93
      %p95 = scmp.ne.s32.totalorder %s84, %s87
      %p96 = scmp.eq.s32.totalorder %s27, 1
      %p97 = por %p95, %p96
      %p98 = scmp.ne.s32.totalorder %s87, %s88
      %p99 = scmp.eq.s32.totalorder %s27, 0
      %p100 = por %p98, %p99
      %p101 = scmp.ne.s32.totalorder %s87, %s88
      %p102 = scmp.eq.s32.totalorder %s28, 1
      %p103 = por %p101, %p102
      %p105 = scmp.ne.s32.totalorder %s88, %s104
      %p106 = scmp.eq.s32.totalorder %s28, 0
      %p107 = por %p105, %p106
      %s109 = sadd.s32 %s108, 1
      %p112 = scmp.eq.s32.totalorder %s22, 1
      %p113 = scmp.ne.s32.totalorder %s108, %s110
      %p114 = scmp.eq.s32.totalorder %s22, 0
      %p115 = por %p113, %p114
      %p116 = scmp.ne.s32.totalorder %s108, %s110
      %p117 = scmp.eq.s32.totalorder %s27, 1
      %p118 = por %p116, %p117
      %p119 = scmp.ne.s32.totalorder %s110, %s111
      %p120 = scmp.eq.s32.totalorder %s27, 0
      %p121 = por %p119, %p120
      %p122 = scmp.ne.s32.totalorder %s110, %s111
      %p123 = scmp.eq.s32.totalorder %s28, 1
      %p124 = por %p122, %p123
      %p126 = scmp.ne.s32.totalorder %s111, %s125
      %p127 = scmp.eq.s32.totalorder %s28, 0
      %p128 = por %p126, %p127
      %s130 = sadd.s32 %s129, 1
      %p133 = scmp.eq.s32.totalorder %s22, 1
      %p134 = scmp.ne.s32.totalorder %s129, %s131
      %p135 = scmp.eq.s32.totalorder %s22, 0
      %p136 = por %p134, %p135
      %p137 = scmp.ne.s32.totalorder %s129, %s131
      %p138 = scmp.eq.s32.totalorder %s27, 1
      %p139 = por %p137, %p138
      %p140 = scmp.ne.s32.totalorder %s131, %s132
      %p141 = scmp.eq.s32.totalorder %s27, 0
      %p142 = por %p140, %p141
      %p143 = scmp.ne.s32.totalorder %s131, %s132
      %p144 = scmp.eq.s32.totalorder %s28, 1
      %p145 = por %p143, %p144
      %p147 = scmp.ne.s32.totalorder %s132, %s146
      %p148 = scmp.eq.s32.totalorder %s28, 0
      %p149 = por %p147, %p148
      %s151 = sadd.s32 %s150, 1
      %p154 = scmp.eq.s32.totalorder %s22, 1
      %p155 = scmp.ne.s32.totalorder %s150, %s152
      %p156 = scmp.eq.s32.totalorder %s22, 0
      %p157 = por %p155, %p156
      %p158 = scmp.ne.s32.totalorder %s150, %s152
      %p159 = scmp.eq.s32.totalorder %s27, 1
      %p160 = por %p158, %p159
      %p161 = scmp.ne.s32.totalorder %s152, %s153
      %p162 = scmp.eq.s32.totalorder %s27, 0
      %p163 = por %p161, %p162
      %p164 = scmp.ne.s32.totalorder %s152, %s153
      %p165 = scmp.eq.s32.totalorder %s28, 1
      %p166 = por %p164, %p165
      %p168 = scmp.ne.s32.totalorder %s153, %s167
      %p169 = scmp.eq.s32.totalorder %s28, 0
      %p170 = por %p168, %p169
      %s172 = sadd.s32 %s171, 1
      %p175 = scmp.eq.s32.totalorder %s22, 1
      %p176 = scmp.ne.s32.totalorder %s171, %s173
      %p177 = scmp.eq.s32.totalorder %s22, 0
      %p178 = por %p176, %p177
      %p179 = scmp.ne.s32.totalorder %s171, %s173
      %p180 = scmp.eq.s32.totalorder %s27, 1
      %p181 = por %p179, %p180
      %p182 = scmp.ne.s32.totalorder %s173, %s174
      %p183 = scmp.eq.s32.totalorder %s27, 0
      %p184 = por %p182, %p183
      %p185 = scmp.ne.s32.totalorder %s173, %s174
      %p186 = scmp.eq.s32.totalorder %s28, 1
      %p187 = por %p185, %p186
      %p189 = scmp.ne.s32.totalorder %s174, %s188
      %p190 = scmp.eq.s32.totalorder %s28, 0
      %p191 = por %p189, %p190
      %s192 = ssub.s32 %s22, %s29
      %p193 = scmp.eq.s32.totalorder %s192, 0
      %s195 = sadd.s32 %s194, 1
      %s196 = scalar_select %p193, %s194, %s195
      %p199 = pneg %p193
      %p200 = scmp.eq.s32.totalorder %s22, 1
      %p201 = por %p199, %p200
      %p202 = scmp.ne.s32.totalorder %s194, %s197
      %p203 = scmp.eq.s32.totalorder %s22, 0
      %p204 = por %p202, %p203
      %p205 = scmp.ne.s32.totalorder %s194, %s197
      %p206 = scmp.eq.s32.totalorder %s27, 1
      %p207 = por %p205, %p206
      %p208 = scmp.ne.s32.totalorder %s197, %s198
      %p209 = scmp.eq.s32.totalorder %s27, 0
      %p210 = por %p208, %p209
      %p211 = scmp.ne.s32.totalorder %s197, %s198
      %p212 = scmp.eq.s32.totalorder %s28, 1
      %p213 = por %p211, %p212
      %p215 = scmp.ne.s32.totalorder %s198, %s214
      %p216 = scmp.eq.s32.totalorder %s28, 0
      %p217 = por %p215, %p216
      %p218 = scmp.le.s32.totalorder 1, %s22
      %p219 = scmp.lt.s32.totalorder %s22, 3
      %p220 = pnand %p218, %p219
      %p221 = pneg %p220
      // Predicated region
      $region9: #{tpu_custom_call.1} parent=5 // pred_check
        _
      $region10: #{tpu_custom_call.1} parent=5 // pred_check_branch
        %223 = sbr.rel (%p220) target = $region12
      $region11: #{tpu_custom_call.1} parent=5 // pred_region
        %s224 = ssub.s32 %s22, 1
        // Predicated region
        $region13: #{tpu_custom_call.1} parent=11 // pred_check
          %p225 = pneg %p121
        $region14: #{tpu_custom_call.1} parent=11 // pred_check_branch
          %227 = sbr.rel (%p225) target = $region16
        $region15: #{tpu_custom_call.1} parent=11 // pred_region
          _
        $region16: #{tpu_custom_call.1} parent=11 // pred_fallthru
          _
        // Predicated region
        $region17: #{tpu_custom_call.1} parent=11 // pred_check
          %p228 = pneg %p142
        $region18: #{tpu_custom_call.1} parent=11 // pred_check_branch
          %230 = sbr.rel (%p228) target = $region20
        $region19: #{tpu_custom_call.1} parent=11 // pred_region
          _
        $region20: #{tpu_custom_call.1} parent=11 // pred_fallthru
          _
        // Predicated region
        $region21: #{tpu_custom_call.1} parent=11 // pred_check
          %p231 = pneg %p163
        $region22: #{tpu_custom_call.1} parent=11 // pred_check_branch
          %233 = sbr.rel (%p231) target = $region24
        $region23: #{tpu_custom_call.1} parent=11 // pred_region
          %s235 = ssub.s32 2048, 2048
          %236 = vsyncadd [#allocation6], %s235
          %s237 = sshll.u32 [#allocation7], 4
          %s238 = int_to_ptr.vmem [resolvable:$true] %s237
          %243 = dma.hbm_to_vmem [thread:$0]  %s5, 2048, %s238, [#allocation6], 128, 128, 8
        $region24: #{tpu_custom_call.1} parent=11 // pred_fallthru
          _
        // Predicated region
        $region25: #{tpu_custom_call.1} parent=11 // pred_check
          %p244 = pneg %p184
        $region26: #{tpu_custom_call.1} parent=11 // pred_check_branch
          %246 = sbr.rel (%p244) target = $region28
        $region27: #{tpu_custom_call.1} parent=11 // pred_region
          _
        $region28: #{tpu_custom_call.1} parent=11 // pred_fallthru
          _
      $region12: #{tpu_custom_call.1} parent=5 // pred_fallthru
        _
      %p247 = scmp.lt.s32.totalorder %s22, 2
      // Predicated region
      $region29: #{tpu_custom_call.1} parent=5 // pred_check
        %p248 = pneg %p247
      $region30: #{tpu_custom_call.1} parent=5 // pred_check_branch
        %250 = sbr.rel (%p248) target = $region32
      $region31: #{tpu_custom_call.1} parent=5 // pred_region
        // Predicated region
        $region33: #{tpu_custom_call.1} parent=31 // pred_check
          %p251 = pneg %p42
        $region34: #{tpu_custom_call.1} parent=31 // pred_check_branch
          %253 = sbr.rel (%p251) target = $region36
        $region35: #{tpu_custom_call.1} parent=31 // pred_region
          %s254 = sand.u32 %s32, 1
          %s255 = scalar_lea.sflag [#allocation3], %s254
          %s256 = sand.u32 %s32, 1
          %s257 = smul.addr %s256, 16
          %s258 = scalar_lea.vmem [#allocation2], %s257
          %s259 = smul.u32 4, %s22
          %s261 = ssub.s32 256, 256
          %262 = vsyncadd %s255, %s261
          %s263 = smul.addr %s259, 64
          %s264 = scalar_lea.hbm %s0, %s263
          %s265 = sshll.u32 %s258, 4
          %s266 = int_to_ptr.vmem [resolvable:$true] %s265
          %271 = dma.hbm_to_vmem [thread:$0]  %s264, 256, %s266, %s255, 64, 64, 4
        $region36: #{tpu_custom_call.1} parent=31 // pred_fallthru
          _
        // Predicated region
        $region37: #{tpu_custom_call.1} parent=31 // pred_check
          %p272 = pneg %p68
        $region38: #{tpu_custom_call.1} parent=31 // pred_check_branch
          %274 = sbr.rel (%p272) target = $region40
        $region39: #{tpu_custom_call.1} parent=31 // pred_region
          #allocation10 [shape = 'u32[6]{0}', space=smem, size = 0x18, scoped, tag = 'DMA stride descriptor']
          %s275 = sand.u32 %s22, 1
          %s276 = scalar_lea.sflag [#allocation6], %s275
          %s277 = sand.u32 %s58, 1
          %s278 = smul.addr %s277, 64
          %s279 = scalar_lea.vmem [#allocation5], %s278
          %s280 = smul.u32 4, %s22
          %s282 = ssub.s32 1024, 1024
          %283 = vsyncadd %s276, %s282
          %s284 = smul.addr %s280, 64
          %s285 = scalar_lea.hbm %s1, %s284
          %s287 = sshll.u32 1, 14
          %s288 = sxor.u32 4294967295, %s287
          %s290 = sld [smem:[#allocation0]]
          %s291 = sadd.s32 2, %s290
          %s293 = sshll.u32 7, 26
          %s294 = sxor.u32 4294967295, %s293
          %s295 = sand.u32 0, %s294
          %s296 = sshll.u32 %s291, 26
          %s297 = sor.u32 %s295, %s296
          %s298 = sshll.u32 %s279, 4
          %s299 = int_to_ptr.vmem [resolvable:$true] %s298
          %305 = sst [smem:[#allocation10]] 512
          %s306 = scalar_lea.smem [#allocation10], 1
          %307 = sst [smem:[%s306]] 256
          %s308 = scalar_lea.smem [#allocation10], 2
          %309 = sst [smem:[%s308]] 4
          %s310 = scalar_lea.smem [#allocation10], 3
          %311 = sst [smem:[%s310]] 64
          %s312 = scalar_lea.smem [#allocation10], 4
          %313 = sst [smem:[%s312]] 64
          %s314 = scalar_lea.smem [#allocation10], 5
          %315 = sst [smem:[%s314]] 4
          %317 = dma.general %s285, 1024, %s299, %s276, [#allocation9], [#allocation10], %s297, 0
        $region40: #{tpu_custom_call.1} parent=31 // pred_fallthru
          _
        // Predicated region
        $region41: #{tpu_custom_call.1} parent=31 // pred_check
          %p318 = pneg %p94
        $region42: #{tpu_custom_call.1} parent=31 // pred_check_branch
          %320 = sbr.rel (%p318) target = $region44
        $region43: #{tpu_custom_call.1} parent=31 // pred_region
          %s321 = smul.u32 4, %s22
          %p322 = scmp.lt.s32.totalorder %s321, 7
          %s323 = scalar_select %p322, %s321, 7
          %s324 = smul.addr %s323, 8
          %s325 = scalar_lea.vmem %s2, %s324
          %s326 = smul.u32 4, %s22
        $region44: #{tpu_custom_call.1} parent=31 // pred_fallthru
          _
      $region32: #{tpu_custom_call.1} parent=5 // pred_fallthru
        _
      %p327 = scmp.le.s32.totalorder 1, %s22
      %p328 = scmp.lt.s32.totalorder %s22, 3
      %p329 = pnand %p327, %p328
      %p330 = pneg %p329
      // Predicated region
      $region45: #{tpu_custom_call.1} parent=5 // pred_check
        _
      $region46: #{tpu_custom_call.1} parent=5 // pred_check_branch
        %332 = sbr.rel (%p329) target = $region48
      $region47: #{tpu_custom_call.1} parent=5 // pred_region
        %s333 = ssub.s32 %s22, 1
        %s334 = sand.u32 %s35, 1
        %s335 = scalar_lea.sflag [#allocation3], %s334
        %s336 = sand.u32 %s35, 1
        %s337 = smul.addr %s336, 16
        %s338 = scalar_lea.vmem [#allocation2], %s337
        // Predicated region
        $region49: #{tpu_custom_call.1} parent=47 // pred_check
          %p339 = pneg %p48
        $region50: #{tpu_custom_call.1} parent=47 // pred_check_branch
          %341 = sbr.rel (%p339) target = $region52
        $region51: #{tpu_custom_call.1} parent=47 // pred_region
          %342 = dma.done %s335, 256
        $region52: #{tpu_custom_call.1} parent=47 // pred_fallthru
          _
        %s343 = sand.u32 %s27, 1
        %s344 = scalar_lea.sflag [#allocation6], %s343
        %s345 = sand.u32 %s61, 1
        %s346 = smul.addr %s345, 64
        %s347 = scalar_lea.vmem [#allocation5], %s346
        // Predicated region
        $region53: #{tpu_custom_call.1} parent=47 // pred_check
          %p348 = pneg %p74
        $region54: #{tpu_custom_call.1} parent=47 // pred_check_branch
          %350 = sbr.rel (%p348) target = $region56
        $region55: #{tpu_custom_call.1} parent=47 // pred_region
          %351 = dma.done %s344, 1024
        $region56: #{tpu_custom_call.1} parent=47 // pred_fallthru
          _
        // Predicated region
        $region57: #{tpu_custom_call.1} parent=47 // pred_check
          %p352 = pneg %p163
        $region58: #{tpu_custom_call.1} parent=47 // pred_check_branch
          %354 = sbr.rel (%p352) target = $region60
        $region59: #{tpu_custom_call.1} parent=47 // pred_region
          %355 = dma.done [#allocation6], 2048
        $region60: #{tpu_custom_call.1} parent=47 // pred_fallthru
          _
        %s356 = sand.u32 %s35, 1
        %s357 = scalar_lea.sflag [#allocation3], %s356
        %s358 = sand.u32 %s35, 1
        %s359 = smul.addr %s358, 16
        %s360 = scalar_lea.vmem [#allocation2], %s359
        %p361 = pneg %p48
        %p362 = pneg %p45
        %s363 = sand.u32 %s27, 1
        %s364 = scalar_lea.sflag [#allocation6], %s363
        %s365 = sand.u32 %s61, 1
        %s366 = smul.addr %s365, 64
        %s367 = scalar_lea.vmem [#allocation5], %s366
        %p368 = pneg %p74
        %p369 = pneg %p71
        %s370 = smul.u32 4, %s27
        %p371 = scmp.lt.s32.totalorder %s370, 7
        %s372 = scalar_select %p371, %s370, 7
        %s373 = smul.addr %s372, 8
        %s374 = scalar_lea.vmem %s2, %s373
        %p375 = pneg %p100
        %p376 = pneg %p97
        %p377 = pneg %p121
        %p378 = pneg %p118
        %p379 = pneg %p142
        %p380 = pneg %p139
        %p381 = pneg %p163
        %p382 = pneg %p160
        %p383 = pneg %p184
        %p384 = pneg %p181
        %p385 = pneg %p210
        %p386 = pneg %p207
        %s387 = sand.u32 %s197, 1
        %s388 = scalar_lea.sflag [#allocation4], %s387
        %s389 = sand.u32 %s197, 1
        %s390 = smul.addr %s389, 32
        %s391 = scalar_lea.vmem [#allocation8], %s390
        %s392 = smul.u32 4, %s27
        %s393 = smul.u32 4, %s27
        %s394 = smul.u32 4, %s27
        %p395 = scmp.lt.s32.totalorder %s394, 7
        %s396 = scalar_select %p395, %s394, 7
        %s397 = smul.addr %s396, 8
        %s398 = scalar_lea.vmem %s2, %s397
        %s399 = smul.u32 4, %s27
        %s400 = smul.u32 4, %s27
        %v402 = vld [vmem:[%s338] sm:$0xf]
        %v403 = vld [vmem:[%s338 + $0x4] sm:$0xf]
        %v404 = vld [vmem:[%s338 + $0x8] sm:$0xf]
        %v405 = vld [vmem:[%s338 + $0xc] sm:$0xf]
        %v406 = vunpack.c.l.bf16 %v402
        %v407 = vunpack.c.l.bf16 %v403
        %v408 = vunpack.c.l.bf16 %v404
        %v409 = vunpack.c.l.bf16 %v405
        %v410 = vld [vmem:[%s398] sm:$0xff]
        %v411 = vld [vmem:[%s398 + $0x8] sm:$0xff]
        %v412 = vld [vmem:[%s398 + $0x10] sm:$0xff]
        %v413 = vld [vmem:[%s398 + $0x18] sm:$0xff]
        %v414 = vld [vmem:[%s3] sm:$0xf]
        %v415 = vld [vmem:[%s3 + $0x4] sm:$0xf]
        %v416 = vld [vmem:[%s3 + $0x8] sm:$0xf]
        %v417 = vld [vmem:[%s3 + $0xc] sm:$0xf]
        %v418 = vld [vmem:[%s3 + $0x10] sm:$0xf]
        %v419 = vld [vmem:[%s3 + $0x14] sm:$0xf]
        %v420 = vld [vmem:[%s3 + $0x18] sm:$0xf]
        %v421 = vld [vmem:[%s3 + $0x1c] sm:$0xf]
        %v422 = vld [vmem:[%s3 + $0x20] sm:$0xf]
        %v423 = vld [vmem:[%s3 + $0x24] sm:$0xf]
        %v424 = vld [vmem:[%s3 + $0x28] sm:$0xf]
        %v425 = vld [vmem:[%s3 + $0x2c] sm:$0xf]
        %v426 = vld [vmem:[%s3 + $0x30] sm:$0xf]
        %v427 = vld [vmem:[%s3 + $0x34] sm:$0xf]
        %v428 = vld [vmem:[%s3 + $0x38] sm:$0xf]
        %v429 = vld [vmem:[%s3 + $0x3c] sm:$0xf]
        %v430 = vld [vmem:[%s4] sm:$0x1]
        %vm431 = vcmp.gt.s32.totalorder %v410, 0
        %vm432 = vcmp.gt.s32.totalorder %v411, 0
        %vm433 = vcmp.gt.s32.totalorder %v412, 0
        %vm434 = vcmp.gt.s32.totalorder %v413, 0
        %v435 = vld [vmem:[%s347] sm:$0xf]
        %v436 = vld [vmem:[%s347 + $0x4] sm:$0xf]
        %v437 = vld [vmem:[%s347 + $0x8] sm:$0xf]
        %v438 = vld [vmem:[%s347 + $0xc] sm:$0xf]
        %v440 = vlaneseq
        %v441 = vshrl.u32 %v440, 7
        %v442 = vsub.s32 0, %v441
        %v443 = vrot.slane %v430, %v442
        %v449 = vunpack.c.l.b16 %v435
        %v450 = vunpack.c.l.b16 %v436
        %v451 = vunpack.c.l.b16 %v437
        %v452 = vunpack.c.l.b16 %v438
        %v453 = vpack.c.b16 %v450, %v449
        %v454 = vpack.c.b16 %v452, %v451
        %v473 = vunpack.c.l.b16 %v414
        %v474 = vunpack.c.l.b16 %v415
        %v475 = vunpack.c.l.b16 %v416
        %v476 = vunpack.c.l.b16 %v417
        %v477 = vunpack.c.l.b16 %v418
        %v478 = vunpack.c.l.b16 %v419
        %v479 = vunpack.c.l.b16 %v420
        %v480 = vunpack.c.l.b16 %v421
        %v481 = vunpack.c.l.b16 %v422
        %v482 = vunpack.c.l.b16 %v423
        %v483 = vunpack.c.l.b16 %v424
        %v484 = vunpack.c.l.b16 %v425
        %v485 = vunpack.c.l.b16 %v426
        %v486 = vunpack.c.l.b16 %v427
        %v487 = vunpack.c.l.b16 %v428
        %v488 = vunpack.c.l.b16 %v429
        %v489 = vpack.c.b16 %v474, %v473
        %v490 = vpack.c.b16 %v476, %v475
        %v491 = vpack.c.b16 %v478, %v477
        %v492 = vpack.c.b16 %v480, %v479
        %v493 = vpack.c.b16 %v482, %v481
        %v494 = vpack.c.b16 %v484, %v483
        %v495 = vpack.c.b16 %v486, %v485
        %v496 = vpack.c.b16 %v488, %v487
        %505 = vmatprep.subr.bf16.mxu0 0
        %506 = vmatpush1.bf16.msra.mxu0 %v489
        %507 = vmatprep.subr.bf16.mxu0 0
        %508 = vmatpush1.bf16.msra.mxu0 %v490
        %509 = vmatprep.subr.bf16.mxu0 0
        %510 = vmatpush1.bf16.msra.mxu0 %v491
        %511 = vmatprep.subr.bf16.mxu0 0
        %512 = vmatpush1.bf16.msra.mxu0 %v492
        %513 = vmatprep.subr.bf16.mxu0 0
        %514 = vmatpush1.bf16.msra.mxu0 %v493
        %515 = vmatprep.subr.bf16.mxu0 0
        %516 = vmatpush1.bf16.msra.mxu0 %v494
        %517 = vmatprep.subr.bf16.mxu0 0
        %518 = vmatpush1.bf16.msra.mxu0 %v495
        %519 = vmatprep.subr.bf16.mxu0 0
        %520 = vmatpush1.bf16.msra.mxu0 %v496
        %521 = vmatprep.subr.bf16.mxu0 0
        %522 = vmatpush1.bf16.msra.mxu0 0
        %523 = vmatprep.subr.bf16.mxu0 0
        %524 = vmatpush1.bf16.msra.mxu0 0
        %525 = vmatprep.subr.bf16.mxu0 0
        %526 = vmatpush1.bf16.msra.mxu0 0
        %527 = vmatprep.subr.bf16.mxu0 0
        %528 = vmatpush1.bf16.msra.mxu0 0
        %529 = vmatprep.subr.bf16.mxu0 0
        %530 = vmatpush1.bf16.msra.mxu0 0
        %531 = vmatprep.subr.bf16.mxu0 0
        %532 = vmatpush1.bf16.msra.mxu0 0
        %533 = vmatprep.subr.bf16.mxu0 0
        %534 = vmatpush1.bf16.msra.mxu0 0
        %535 = vmatprep.subr.bf16.mxu0 0
        %536 = vmatpush1.bf16.msra.mxu0 0
        %537 = vmatprep.mubr.bf16.mxu0 0
        %538 = vmatmul.mubr.bf16.gmra.mrb[0].mxu0 %v453
        %v539 = vpop.f32.mrb[0].mxu0
        %v540 = vadd.f32 %v443, %v539
        %v541 = vpop.f32.mrb[0].mxu0
        %v542 = vpop.f32.mrb[0].mxu0
        %v543 = vadd.f32 %v443, %v542
        %v544 = vpop.f32.mrb[0].mxu0
        %545 = vmatprep.mubr.bf16.mxu0 0
        %546 = vmatmul.mubr.bf16.gmra.mrb[0].mxu0 %v454
        %v547 = vpop.f32.mrb[0].mxu0
        %v548 = vadd.f32 %v443, %v547
        %v549 = vpop.f32.mrb[0].mxu0
        %v550 = vpop.f32.mrb[0].mxu0
        %v551 = vadd.f32 %v443, %v550
        %v552 = vpop.f32.mrb[0].mxu0
        %553 = vdwg.mxu0
        %v554 = vmul.f32 %v540, %v406
        %v555 = vmul.f32 %v543, %v407
        %v556 = vmul.f32 %v548, %v408
        %v557 = vmul.f32 %v551, %v409
        %558 = vadd.xlane.f32.xlu0 %v554
        %v559 = vpop.xlane.xlu0 %558
        %560 = vadd.xlane.f32.xlu0 %v555
        %v561 = vpop.xlane.xlu0 %560
        %562 = vadd.xlane.f32.xlu0 %v556
        %v563 = vpop.xlane.xlu0 %562
        %564 = vadd.xlane.f32.xlu0 %v557
        %v565 = vpop.xlane.xlu0 %564
        %v566 = vsel %vm431, %v559, -1e+30
        %v567 = vsel %vm432, %v561, -1e+30
        %v568 = vsel %vm433, %v563, -1e+30
        %v569 = vsel %vm434, %v565, -1e+30
        %v570 = vmax.f32 %v566, -1e+30
        %v571 = vmax.f32 %v567, -1e+30
        %v572 = vmax.f32 %v568, -1e+30
        %v573 = vmax.f32 %v569, -1e+30
        %v574 = vsub.f32 -1e+30, %v570
        %v575 = vsub.f32 -1e+30, %v571
        %v576 = vsub.f32 -1e+30, %v572
        %v577 = vsub.f32 -1e+30, %v573
        %v578 = vmul.f32 %v574, 1.442695
        %v579 = vpow.pop %v578
        %v580 = vmul.f32 %v575, 1.442695
        %v581 = vpow.pop %v580
        %v582 = vmul.f32 %v576, 1.442695
        %v583 = vpow.pop %v582
        %v584 = vmul.f32 %v577, 1.442695
        %v585 = vpow.pop %v584
        %v586 = vsub.f32 %v566, %v570
        %v587 = vsub.f32 %v567, %v571
        %v588 = vsub.f32 %v568, %v572
        %v589 = vsub.f32 %v569, %v573
        %v590 = vmul.f32 %v586, 1.442695
        %v591 = vpow.pop %v590
        %v592 = vmul.f32 %v587, 1.442695
        %v593 = vpow.pop %v592
        %v594 = vmul.f32 %v588, 1.442695
        %v595 = vpow.pop %v594
        %v596 = vmul.f32 %v589, 1.442695
        %v597 = vpow.pop %v596
        %v598 = vsel %vm431, %v591, 0.0
        %v599 = vsel %vm432, %v593, 0.0
        %v600 = vsel %vm433, %v595, 0.0
        %v601 = vsel %vm434, %v597, 0.0
        %v602 = vmul.f32 %v579, 0.0
        %v603 = vmul.f32 %v581, 0.0
        %v604 = vmul.f32 %v583, 0.0
        %v605 = vmul.f32 %v585, 0.0
        %v606 = vadd.f32 %v602, %v598
        %v607 = vadd.f32 %v603, %v599
        %v608 = vadd.f32 %v604, %v600
        %v609 = vadd.f32 %v605, %v601
        %611 = vset.pattern.permute.xlu0 0
        %612 = vperm.xlu0 %611, %v579
        %v613 = vpop.permute.xlu0 %612
        %616 = vset.pattern.permute.xlu0 0
        %617 = vperm.xlu0 %616, %v581
        %v618 = vpop.permute.xlu0 %617
        %621 = vset.pattern.permute.xlu0 0
        %622 = vperm.xlu0 %621, %v583
        %v623 = vpop.permute.xlu0 %622
        %626 = vset.pattern.permute.xlu0 0
        %627 = vperm.xlu0 %626, %v585
        %v628 = vpop.permute.xlu0 %627
        %v630 = vmul.f32 %v613, 0.0
        %v631 = vmul.f32 %v618, 0.0
        %v632 = vmul.f32 %v623, 0.0
        %v633 = vmul.f32 %v628, 0.0
        %635 = vset.pattern.permute.xlu0 0
        %636 = vperm.xlu0 %635, %v598
        %v637 = vpop.permute.xlu0 %636
        %640 = vset.pattern.permute.xlu0 0
        %641 = vperm.xlu0 %640, %v599
        %v642 = vpop.permute.xlu0 %641
        %645 = vset.pattern.permute.xlu0 0
        %646 = vperm.xlu0 %645, %v600
        %v647 = vpop.permute.xlu0 %646
        %650 = vset.pattern.permute.xlu0 0
        %651 = vperm.xlu0 %650, %v601
        %v652 = vpop.permute.xlu0 %651
        %v654 = vmul.f32 %v637, %v540
        %v655 = vmul.f32 %v642, %v543
        %v656 = vmul.f32 %v647, %v548
        %v657 = vmul.f32 %v652, %v551
        %v658 = vadd.f32 %v630, %v654
        %v659 = vadd.f32 %v631, %v655
        %v660 = vadd.f32 %v632, %v656
        %v661 = vadd.f32 %v633, %v657
        %vm662 = vcmp.gt.s32.totalorder %v410, 1
        %vm663 = vcmp.gt.s32.totalorder %v411, 1
        %vm664 = vcmp.gt.s32.totalorder %v412, 1
        %vm665 = vcmp.gt.s32.totalorder %v413, 1
        %s666 = scalar_lea.vmem %s347, 16 [#allocation5]
        %v667 = vld [vmem:[%s666] sm:$0xf]
        %v668 = vld [vmem:[%s666 + $0x4] sm:$0xf]
        %v669 = vld [vmem:[%s666 + $0x8] sm:$0xf]
        %v670 = vld [vmem:[%s666 + $0xc] sm:$0xf]
        %v675 = vunpack.c.l.b16 %v667
        %v676 = vunpack.c.l.b16 %v668
        %v677 = vunpack.c.l.b16 %v669
        %v678 = vunpack.c.l.b16 %v670
        %v679 = vpack.c.b16 %v676, %v675
        %v680 = vpack.c.b16 %v678, %v677
        %683 = vmatprep.subr.bf16.mxu0 0
        %684 = vmatpush1.bf16.msra.mxu0 %v489
        %685 = vmatprep.subr.bf16.mxu0 0
        %686 = vmatpush1.bf16.msra.mxu0 %v490
        %687 = vmatprep.subr.bf16.mxu0 0
        %688 = vmatpush1.bf16.msra.mxu0 %v491
        %689 = vmatprep.subr.bf16.mxu0 0
        %690 = vmatpush1.bf16.msra.mxu0 %v492
        %691 = vmatprep.subr.bf16.mxu0 0
        %692 = vmatpush1.bf16.msra.mxu0 %v493
        %693 = vmatprep.subr.bf16.mxu0 0
        %694 = vmatpush1.bf16.msra.mxu0 %v494
        %695 = vmatprep.subr.bf16.mxu0 0
        %696 = vmatpush1.bf16.msra.mxu0 %v495
        %697 = vmatprep.subr.bf16.mxu0 0
        %698 = vmatpush1.bf16.msra.mxu0 %v496
        %699 = vmatprep.subr.bf16.mxu0 0
        %700 = vmatpush1.bf16.msra.mxu0 0
        %701 = vmatprep.subr.bf16.mxu0 0
        %702 = vmatpush1.bf16.msra.mxu0 0
        %703 = vmatprep.subr.bf16.mxu0 0
        %704 = vmatpush1.bf16.msra.mxu0 0
        %705 = vmatprep.subr.bf16.mxu0 0
        %706 = vmatpush1.bf16.msra.mxu0 0
        %707 = vmatprep.subr.bf16.mxu0 0
        %708 = vmatpush1.bf16.msra.mxu0 0
        %709 = vmatprep.subr.bf16.mxu0 0
        %710 = vmatpush1.bf16.msra.mxu0 0
        %711 = vmatprep.subr.bf16.mxu0 0
        %712 = vmatpush1.bf16.msra.mxu0 0
        %713 = vmatprep.subr.bf16.mxu0 0
        %714 = vmatpush1.bf16.msra.mxu0 0
        %715 = vmatprep.mubr.bf16.mxu0 0
        %716 = vmatmul.mubr.bf16.gmra.mrb[0].mxu0 %v679
        %v717 = vpop.f32.mrb[0].mxu0
        %v718 = vadd.f32 %v443, %v717
        %v719 = vpop.f32.mrb[0].mxu0
        %v720 = vpop.f32.mrb[0].mxu0
        %v721 = vadd.f32 %v443, %v720
        %v722 = vpop.f32.mrb[0].mxu0
        %723 = vmatprep.mubr.bf16.mxu0 0
        %724 = vmatmul.mubr.bf16.gmra.mrb[0].mxu0 %v680
        %v725 = vpop.f32.mrb[0].mxu0
        %v726 = vadd.f32 %v443, %v725
        %v727 = vpop.f32.mrb[0].mxu0
        %v728 = vpop.f32.mrb[0].mxu0
        %v729 = vadd.f32 %v443, %v728
        %v730 = vpop.f32.mrb[0].mxu0
        %731 = vdwg.mxu0
        %v732 = vmul.f32 %v718, %v406
        %v733 = vmul.f32 %v721, %v407
        %v734 = vmul.f32 %v726, %v408
        %v735 = vmul.f32 %v729, %v409
        %736 = vadd.xlane.f32.xlu0 %v732
        %v737 = vpop.xlane.xlu0 %736
        %738 = vadd.xlane.f32.xlu0 %v733
        %v739 = vpop.xlane.xlu0 %738
        %740 = vadd.xlane.f32.xlu0 %v734
        %v741 = vpop.xlane.xlu0 %740
        %742 = vadd.xlane.f32.xlu0 %v735
        %v743 = vpop.xlane.xlu0 %742
        %v744 = vsel %vm662, %v737, -1e+30
        %v745 = vsel %vm663, %v739, -1e+30
        %v746 = vsel %vm664, %v741, -1e+30
        %v747 = vsel %vm665, %v743, -1e+30
        %v748 = vmax.f32 %v570, %v744
        %v749 = vmax.f32 %v571, %v745
        %v750 = vmax.f32 %v572, %v746
        %v751 = vmax.f32 %v573, %v747
        %v752 = vsub.f32 %v570, %v748
        %v753 = vsub.f32 %v571, %v749
        %v754 = vsub.f32 %v572, %v750
        %v755 = vsub.f32 %v573, %v751
        %v756 = vmul.f32 %v752, 1.442695
        %v757 = vpow.pop %v756
        %v758 = vmul.f32 %v753, 1.442695
        %v759 = vpow.pop %v758
        %v760 = vmul.f32 %v754, 1.442695
        %v761 = vpow.pop %v760
        %v762 = vmul.f32 %v755, 1.442695
        %v763 = vpow.pop %v762
        %v764 = vsub.f32 %v744, %v748
        %v765 = vsub.f32 %v745, %v749
        %v766 = vsub.f32 %v746, %v750
        %v767 = vsub.f32 %v747, %v751
        %v768 = vmul.f32 %v764, 1.442695
        %v769 = vpow.pop %v768
        %v770 = vmul.f32 %v765, 1.442695
        %v771 = vpow.pop %v770
        %v772 = vmul.f32 %v766, 1.442695
        %v773 = vpow.pop %v772
        %v774 = vmul.f32 %v767, 1.442695
        %v775 = vpow.pop %v774
        %v776 = vsel %vm662, %v769, 0.0
        %v777 = vsel %vm663, %v771, 0.0
        %v778 = vsel %vm664, %v773, 0.0
        %v779 = vsel %vm665, %v775, 0.0
        %v780 = vmul.f32 %v606, %v757
        %v781 = vmul.f32 %v607, %v759
        %v782 = vmul.f32 %v608, %v761
        %v783 = vmul.f32 %v609, %v763
        %v784 = vadd.f32 %v780, %v776
        %v785 = vadd.f32 %v781, %v777
        %v786 = vadd.f32 %v782, %v778
        %v787 = vadd.f32 %v783, %v779
        %789 = vset.pattern.permute.xlu0 0
        %790 = vperm.xlu0 %789, %v757
        %v791 = vpop.permute.xlu0 %790
        %794 = vset.pattern.permute.xlu0 0
        %795 = vperm.xlu0 %794, %v759
        %v796 = vpop.permute.xlu0 %795
        %799 = vset.pattern.permute.xlu0 0
        %800 = vperm.xlu0 %799, %v761
        %v801 = vpop.permute.xlu0 %800
        %804 = vset.pattern.permute.xlu0 0
        %805 = vperm.xlu0 %804, %v763
        %v806 = vpop.permute.xlu0 %805
        %v808 = vmul.f32 %v658, %v791
        %v809 = vmul.f32 %v659, %v796
        %v810 = vmul.f32 %v660, %v801
        %v811 = vmul.f32 %v661, %v806
        %813 = vset.pattern.permute.xlu0 0
        %814 = vperm.xlu0 %813, %v776
        %v815 = vpop.permute.xlu0 %814
        %818 = vset.pattern.permute.xlu0 0
        %819 = vperm.xlu0 %818, %v777
        %v820 = vpop.permute.xlu0 %819
        %823 = vset.pattern.permute.xlu0 0
        %824 = vperm.xlu0 %823, %v778
        %v825 = vpop.permute.xlu0 %824
        %828 = vset.pattern.permute.xlu0 0
        %829 = vperm.xlu0 %828, %v779
        %v830 = vpop.permute.xlu0 %829
        %v832 = vmul.f32 %v815, %v718
        %v833 = vmul.f32 %v820, %v721
        %v834 = vmul.f32 %v825, %v726
        %v835 = vmul.f32 %v830, %v729
        %v836 = vadd.f32 %v808, %v832
        %v837 = vadd.f32 %v809, %v833
        %v838 = vadd.f32 %v810, %v834
        %v839 = vadd.f32 %v811, %v835
        %vm840 = vcmp.gt.s32.totalorder %v410, 2
        %vm841 = vcmp.gt.s32.totalorder %v411, 2
        %vm842 = vcmp.gt.s32.totalorder %v412, 2
        %vm843 = vcmp.gt.s32.totalorder %v413, 2
        %s844 = scalar_lea.vmem %s347, 32 [#allocation5]
        %v845 = vld [vmem:[%s844] sm:$0xf]
        %v846 = vld [vmem:[%s844 + $0x4] sm:$0xf]
        %v847 = vld [vmem:[%s844 + $0x8] sm:$0xf]
        %v848 = vld [vmem:[%s844 + $0xc] sm:$0xf]
        %v853 = vunpack.c.l.b16 %v845
        %v854 = vunpack.c.l.b16 %v846
        %v855 = vunpack.c.l.b16 %v847
        %v856 = vunpack.c.l.b16 %v848
        %v857 = vpack.c.b16 %v854, %v853
        %v858 = vpack.c.b16 %v856, %v855
        %861 = vmatprep.subr.bf16.mxu0 0
        %862 = vmatpush1.bf16.msra.mxu0 %v489
        %863 = vmatprep.subr.bf16.mxu0 0
        %864 = vmatpush1.bf16.msra.mxu0 %v490
        %865 = vmatprep.subr.bf16.mxu0 0
        %866 = vmatpush1.bf16.msra.mxu0 %v491
        %867 = vmatprep.subr.bf16.mxu0 0
        %868 = vmatpush1.bf16.msra.mxu0 %v492
        %869 = vmatprep.subr.bf16.mxu0 0
        %870 = vmatpush1.bf16.msra.mxu0 %v493
        %871 = vmatprep.subr.bf16.mxu0 0
        %872 = vmatpush1.bf16.msra.mxu0 %v494
        %873 = vmatprep.subr.bf16.mxu0 0
        %874 = vmatpush1.bf16.msra.mxu0 %v495
        %875 = vmatprep.subr.bf16.mxu0 0
        %876 = vmatpush1.bf16.msra.mxu0 %v496
        %877 = vmatprep.subr.bf16.mxu0 0
        %878 = vmatpush1.bf16.msra.mxu0 0
        %879 = vmatprep.subr.bf16.mxu0 0
        %880 = vmatpush1.bf16.msra.mxu0 0
        %881 = vmatprep.subr.bf16.mxu0 0
        %882 = vmatpush1.bf16.msra.mxu0 0
        %883 = vmatprep.subr.bf16.mxu0 0
        %884 = vmatpush1.bf16.msra.mxu0 0
        %885 = vmatprep.subr.bf16.mxu0 0
        %886 = vmatpush1.bf16.msra.mxu0 0
        %887 = vmatprep.subr.bf16.mxu0 0
        %888 = vmatpush1.bf16.msra.mxu0 0
        %889 = vmatprep.subr.bf16.mxu0 0
        %890 = vmatpush1.bf16.msra.mxu0 0
        %891 = vmatprep.subr.bf16.mxu0 0
        %892 = vmatpush1.bf16.msra.mxu0 0
        %893 = vmatprep.mubr.bf16.mxu0 0
        %894 = vmatmul.mubr.bf16.gmra.mrb[0].mxu0 %v857
        %v895 = vpop.f32.mrb[0].mxu0
        %v896 = vadd.f32 %v443, %v895
        %v897 = vpop.f32.mrb[0].mxu0
        %v898 = vpop.f32.mrb[0].mxu0
        %v899 = vadd.f32 %v443, %v898
        %v900 = vpop.f32.mrb[0].mxu0
        %901 = vmatprep.mubr.bf16.mxu0 0
        %902 = vmatmul.mubr.bf16.gmra.mrb[0].mxu0 %v858
        %v903 = vpop.f32.mrb[0].mxu0
        %v904 = vadd.f32 %v443, %v903
        %v905 = vpop.f32.mrb[0].mxu0
        %v906 = vpop.f32.mrb[0].mxu0
        %v907 = vadd.f32 %v443, %v906
        %v908 = vpop.f32.mrb[0].mxu0
        %909 = vdwg.mxu0
        %v910 = vmul.f32 %v896, %v406
        %v911 = vmul.f32 %v899, %v407
        %v912 = vmul.f32 %v904, %v408
        %v913 = vmul.f32 %v907, %v409
        %914 = vadd.xlane.f32.xlu0 %v910
        %v915 = vpop.xlane.xlu0 %914
        %916 = vadd.xlane.f32.xlu0 %v911
        %v917 = vpop.xlane.xlu0 %916
        %918 = vadd.xlane.f32.xlu0 %v912
        %v919 = vpop.xlane.xlu0 %918
        %920 = vadd.xlane.f32.xlu0 %v913
        %v921 = vpop.xlane.xlu0 %920
        %v922 = vsel %vm840, %v915, -1e+30
        %v923 = vsel %vm841, %v917, -1e+30
        %v924 = vsel %vm842, %v919, -1e+30
        %v925 = vsel %vm843, %v921, -1e+30
        %v926 = vmax.f32 %v748, %v922
        %v927 = vmax.f32 %v749, %v923
        %v928 = vmax.f32 %v750, %v924
        %v929 = vmax.f32 %v751, %v925
        %v930 = vsub.f32 %v748, %v926
        %v931 = vsub.f32 %v749, %v927
        %v932 = vsub.f32 %v750, %v928
        %v933 = vsub.f32 %v751, %v929
        %v934 = vmul.f32 %v930, 1.442695
        %v935 = vpow.pop %v934
        %v936 = vmul.f32 %v931, 1.442695
        %v937 = vpow.pop %v936
        %v938 = vmul.f32 %v932, 1.442695
        %v939 = vpow.pop %v938
        %v940 = vmul.f32 %v933, 1.442695
        %v941 = vpow.pop %v940
        %v942 = vsub.f32 %v922, %v926
        %v943 = vsub.f32 %v923, %v927
        %v944 = vsub.f32 %v924, %v928
        %v945 = vsub.f32 %v925, %v929
        %v946 = vmul.f32 %v942, 1.442695
        %v947 = vpow.pop %v946
        %v948 = vmul.f32 %v943, 1.442695
        %v949 = vpow.pop %v948
        %v950 = vmul.f32 %v944, 1.442695
        %v951 = vpow.pop %v950
        %v952 = vmul.f32 %v945, 1.442695
        %v953 = vpow.pop %v952
        %v954 = vsel %vm840, %v947, 0.0
        %v955 = vsel %vm841, %v949, 0.0
        %v956 = vsel %vm842, %v951, 0.0
        %v957 = vsel %vm843, %v953, 0.0
        %v958 = vmul.f32 %v784, %v935
        %v959 = vmul.f32 %v785, %v937
        %v960 = vmul.f32 %v786, %v939
        %v961 = vmul.f32 %v787, %v941
        %v962 = vadd.f32 %v958, %v954
        %v963 = vadd.f32 %v959, %v955
        %v964 = vadd.f32 %v960, %v956
        %v965 = vadd.f32 %v961, %v957
        %967 = vset.pattern.permute.xlu0 0
        %968 = vperm.xlu0 %967, %v935
        %v969 = vpop.permute.xlu0 %968
        %972 = vset.pattern.permute.xlu0 0
        %973 = vperm.xlu0 %972, %v937
        %v974 = vpop.permute.xlu0 %973
        %977 = vset.pattern.permute.xlu0 0
        %978 = vperm.xlu0 %977, %v939
        %v979 = vpop.permute.xlu0 %978
        %982 = vset.pattern.permute.xlu0 0
        %983 = vperm.xlu0 %982, %v941
        %v984 = vpop.permute.xlu0 %983
        %v986 = vmul.f32 %v836, %v969
        %v987 = vmul.f32 %v837, %v974
        %v988 = vmul.f32 %v838, %v979
        %v989 = vmul.f32 %v839, %v984
        %991 = vset.pattern.permute.xlu0 0
        %992 = vperm.xlu0 %991, %v954
        %v993 = vpop.permute.xlu0 %992
        %996 = vset.pattern.permute.xlu0 0
        %997 = vperm.xlu0 %996, %v955
        %v998 = vpop.permute.xlu0 %997
        %1001 = vset.pattern.permute.xlu0 0
        %1002 = vperm.xlu0 %1001, %v956
        %v1003 = vpop.permute.xlu0 %1002
        %1006 = vset.pattern.permute.xlu0 0
        %1007 = vperm.xlu0 %1006, %v957
        %v1008 = vpop.permute.xlu0 %1007
        %v1010 = vmul.f32 %v993, %v896
        %v1011 = vmul.f32 %v998, %v899
        %v1012 = vmul.f32 %v1003, %v904
        %v1013 = vmul.f32 %v1008, %v907
        %v1014 = vadd.f32 %v986, %v1010
        %v1015 = vadd.f32 %v987, %v1011
        %v1016 = vadd.f32 %v988, %v1012
        %v1017 = vadd.f32 %v989, %v1013
        %vm1018 = vcmp.gt.s32.totalorder %v410, 3
        %vm1019 = vcmp.gt.s32.totalorder %v411, 3
        %vm1020 = vcmp.gt.s32.totalorder %v412, 3
        %vm1021 = vcmp.gt.s32.totalorder %v413, 3
        %s1022 = scalar_lea.vmem %s347, 48 [#allocation5]
        %v1023 = vld [vmem:[%s1022] sm:$0xf]
        %v1024 = vld [vmem:[%s1022 + $0x4] sm:$0xf]
        %v1025 = vld [vmem:[%s1022 + $0x8] sm:$0xf]
        %v1026 = vld [vmem:[%s1022 + $0xc] sm:$0xf]
        %v1031 = vunpack.c.l.b16 %v1023
        %v1032 = vunpack.c.l.b16 %v1024
        %v1033 = vunpack.c.l.b16 %v1025
        %v1034 = vunpack.c.l.b16 %v1026
        %v1035 = vpack.c.b16 %v1032, %v1031
        %v1036 = vpack.c.b16 %v1034, %v1033
        %1039 = vmatprep.subr.bf16.mxu0 0
        %1040 = vmatpush1.bf16.msra.mxu0 %v489
        %1041 = vmatprep.subr.bf16.mxu0 0
        %1042 = vmatpush1.bf16.msra.mxu0 %v490
        %1043 = vmatprep.subr.bf16.mxu0 0
        %1044 = vmatpush1.bf16.msra.mxu0 %v491
        %1045 = vmatprep.subr.bf16.mxu0 0
        %1046 = vmatpush1.bf16.msra.mxu0 %v492
        %1047 = vmatprep.subr.bf16.mxu0 0
        %1048 = vmatpush1.bf16.msra.mxu0 %v493
        %1049 = vmatprep.subr.bf16.mxu0 0
        %1050 = vmatpush1.bf16.msra.mxu0 %v494
        %1051 = vmatprep.subr.bf16.mxu0 0
        %1052 = vmatpush1.bf16.msra.mxu0 %v495
        %1053 = vmatprep.subr.bf16.mxu0 0
        %1054 = vmatpush1.bf16.msra.mxu0 %v496
        %1055 = vmatprep.subr.bf16.mxu0 0
        %1056 = vmatpush1.bf16.msra.mxu0 0
        %1057 = vmatprep.subr.bf16.mxu0 0
        %1058 = vmatpush1.bf16.msra.mxu0 0
        %1059 = vmatprep.subr.bf16.mxu0 0
        %1060 = vmatpush1.bf16.msra.mxu0 0
        %1061 = vmatprep.subr.bf16.mxu0 0
        %1062 = vmatpush1.bf16.msra.mxu0 0
        %1063 = vmatprep.subr.bf16.mxu0 0
        %1064 = vmatpush1.bf16.msra.mxu0 0
        %1065 = vmatprep.subr.bf16.mxu0 0
        %1066 = vmatpush1.bf16.msra.mxu0 0
        %1067 = vmatprep.subr.bf16.mxu0 0
        %1068 = vmatpush1.bf16.msra.mxu0 0
        %1069 = vmatprep.subr.bf16.mxu0 0
        %1070 = vmatpush1.bf16.msra.mxu0 0
        %1071 = vmatprep.mubr.bf16.mxu0 0
        %1072 = vmatmul.mubr.bf16.gmra.mrb[0].mxu0 %v1035
        %v1073 = vpop.f32.mrb[0].mxu0
        %v1074 = vadd.f32 %v443, %v1073
        %v1075 = vpop.f32.mrb[0].mxu0
        %v1076 = vpop.f32.mrb[0].mxu0
        %v1077 = vadd.f32 %v443, %v1076
        %v1078 = vpop.f32.mrb[0].mxu0
        %1079 = vmatprep.mubr.bf16.mxu0 0
        %1080 = vmatmul.mubr.bf16.gmra.mrb[0].mxu0 %v1036
        %v1081 = vpop.f32.mrb[0].mxu0
        %v1082 = vadd.f32 %v443, %v1081
        %v1083 = vpop.f32.mrb[0].mxu0
        %v1084 = vpop.f32.mrb[0].mxu0
        %v1085 = vadd.f32 %v443, %v1084
        %v1086 = vpop.f32.mrb[0].mxu0
        %1087 = vdwg.mxu0
        %v1088 = vmul.f32 %v1074, %v406
        %v1089 = vmul.f32 %v1077, %v407
        %v1090 = vmul.f32 %v1082, %v408
        %v1091 = vmul.f32 %v1085, %v409
        %1092 = vadd.xlane.f32.xlu0 %v1088
        %v1093 = vpop.xlane.xlu0 %1092
        %1094 = vadd.xlane.f32.xlu0 %v1089
        %v1095 = vpop.xlane.xlu0 %1094
        %1096 = vadd.xlane.f32.xlu0 %v1090
        %v1097 = vpop.xlane.xlu0 %1096
        %1098 = vadd.xlane.f32.xlu0 %v1091
        %v1099 = vpop.xlane.xlu0 %1098
        %v1100 = vsel %vm1018, %v1093, -1e+30
        %v1101 = vsel %vm1019, %v1095, -1e+30
        %v1102 = vsel %vm1020, %v1097, -1e+30
        %v1103 = vsel %vm1021, %v1099, -1e+30
        %v1104 = vmax.f32 %v926, %v1100
        %v1105 = vmax.f32 %v927, %v1101
        %v1106 = vmax.f32 %v928, %v1102
        %v1107 = vmax.f32 %v929, %v1103
        %v1108 = vsub.f32 %v926, %v1104
        %v1109 = vsub.f32 %v927, %v1105
        %v1110 = vsub.f32 %v928, %v1106
        %v1111 = vsub.f32 %v929, %v1107
        %v1112 = vmul.f32 %v1108, 1.442695
        %v1113 = vpow.pop %v1112
        %v1114 = vmul.f32 %v1109, 1.442695
        %v1115 = vpow.pop %v1114
        %v1116 = vmul.f32 %v1110, 1.442695
        %v1117 = vpow.pop %v1116
        %v1118 = vmul.f32 %v1111, 1.442695
        %v1119 = vpow.pop %v1118
        %v1120 = vsub.f32 %v1100, %v1104
        %v1121 = vsub.f32 %v1101, %v1105
        %v1122 = vsub.f32 %v1102, %v1106
        %v1123 = vsub.f32 %v1103, %v1107
        %v1124 = vmul.f32 %v1120, 1.442695
        %v1125 = vpow.pop %v1124
        %v1126 = vmul.f32 %v1121, 1.442695
        %v1127 = vpow.pop %v1126
        %v1128 = vmul.f32 %v1122, 1.442695
        %v1129 = vpow.pop %v1128
        %v1130 = vmul.f32 %v1123, 1.442695
        %v1131 = vpow.pop %v1130
        %v1132 = vsel %vm1018, %v1125, 0.0
        %v1133 = vsel %vm1019, %v1127, 0.0
        %v1134 = vsel %vm1020, %v1129, 0.0
        %v1135 = vsel %vm1021, %v1131, 0.0
        %v1136 = vmul.f32 %v962, %v1113
        %v1137 = vmul.f32 %v963, %v1115
        %v1138 = vmul.f32 %v964, %v1117
        %v1139 = vmul.f32 %v965, %v1119
        %v1140 = vadd.f32 %v1136, %v1132
        %v1141 = vadd.f32 %v1137, %v1133
        %v1142 = vadd.f32 %v1138, %v1134
        %v1143 = vadd.f32 %v1139, %v1135
        %1145 = vset.pattern.permute.xlu0 0
        %1146 = vperm.xlu0 %1145, %v1113
        %v1147 = vpop.permute.xlu0 %1146
        %1150 = vset.pattern.permute.xlu0 0
        %1151 = vperm.xlu0 %1150, %v1115
        %v1152 = vpop.permute.xlu0 %1151
        %1155 = vset.pattern.permute.xlu0 0
        %1156 = vperm.xlu0 %1155, %v1117
        %v1157 = vpop.permute.xlu0 %1156
        %1160 = vset.pattern.permute.xlu0 0
        %1161 = vperm.xlu0 %1160, %v1119
        %v1162 = vpop.permute.xlu0 %1161
        %v1164 = vmul.f32 %v1014, %v1147
        %v1165 = vmul.f32 %v1015, %v1152
        %v1166 = vmul.f32 %v1016, %v1157
        %v1167 = vmul.f32 %v1017, %v1162
        %1169 = vset.pattern.permute.xlu0 0
        %1170 = vperm.xlu0 %1169, %v1132
        %v1171 = vpop.permute.xlu0 %1170
        %1174 = vset.pattern.permute.xlu0 0
        %1175 = vperm.xlu0 %1174, %v1133
        %v1176 = vpop.permute.xlu0 %1175
        %1179 = vset.pattern.permute.xlu0 0
        %1180 = vperm.xlu0 %1179, %v1134
        %v1181 = vpop.permute.xlu0 %1180
        %1184 = vset.pattern.permute.xlu0 0
        %1185 = vperm.xlu0 %1184, %v1135
        %v1186 = vpop.permute.xlu0 %1185
        %v1188 = vmul.f32 %v1171, %v1074
        %v1189 = vmul.f32 %v1176, %v1077
        %v1190 = vmul.f32 %v1181, %v1082
        %v1191 = vmul.f32 %v1186, %v1085
        %v1192 = vadd.f32 %v1164, %v1188
        %v1193 = vadd.f32 %v1165, %v1189
        %v1194 = vadd.f32 %v1166, %v1190
        %v1195 = vadd.f32 %v1167, %v1191
        %v1196 = vsel %vm431, %v1140, 1.0
        %v1197 = vsel %vm432, %v1141, 1.0
        %v1198 = vsel %vm433, %v1142, 1.0
        %v1199 = vsel %vm434, %v1143, 1.0
        %v1200 = vrcp.pop %v1196
        %v1201 = vrcp.pop %v1197
        %v1202 = vrcp.pop %v1198
        %v1203 = vrcp.pop %v1199
        %1205 = vset.pattern.permute.xlu0 0
        %1206 = vperm.xlu0 %1205, %v1200
        %v1207 = vpop.permute.xlu0 %1206
        %1210 = vset.pattern.permute.xlu0 0
        %1211 = vperm.xlu0 %1210, %v1201
        %v1212 = vpop.permute.xlu0 %1211
        %1215 = vset.pattern.permute.xlu0 0
        %1216 = vperm.xlu0 %1215, %v1202
        %v1217 = vpop.permute.xlu0 %1216
        %1220 = vset.pattern.permute.xlu0 0
        %1221 = vperm.xlu0 %1220, %v1203
        %v1222 = vpop.permute.xlu0 %1221
        %v1224 = vmul.f32 %v1192, %v1207
        %v1225 = vmul.f32 %v1193, %v1212
        %v1226 = vmul.f32 %v1194, %v1217
        %v1227 = vmul.f32 %v1195, %v1222
        %v1228 = vld [vmem:[#allocation7] sm:$0xff]
        %v1229 = vld [vmem:[#allocation7 + $0x8] sm:$0xff]
        %v1230 = vld [vmem:[#allocation7 + $0x10] sm:$0xff]
        %v1231 = vld [vmem:[#allocation7 + $0x18] sm:$0xff]
        %v1232 = vld [vmem:[#allocation7 + $0x20] sm:$0xff]
        %v1233 = vld [vmem:[#allocation7 + $0x28] sm:$0xff]
        %v1234 = vld [vmem:[#allocation7 + $0x30] sm:$0xff]
        %v1235 = vld [vmem:[#allocation7 + $0x38] sm:$0xff]
        %v1236 = vld [vmem:[#allocation7 + $0x40] sm:$0xff]
        %v1237 = vld [vmem:[#allocation7 + $0x48] sm:$0xff]
        %v1238 = vld [vmem:[#allocation7 + $0x50] sm:$0xff]
        %v1239 = vld [vmem:[#allocation7 + $0x58] sm:$0xff]
        %v1240 = vld [vmem:[#allocation7 + $0x60] sm:$0xff]
        %v1241 = vld [vmem:[#allocation7 + $0x68] sm:$0xff]
        %v1242 = vld [vmem:[#allocation7 + $0x70] sm:$0xff]
        %v1243 = vld [vmem:[#allocation7 + $0x78] sm:$0xff]
        %v1244 = vld [vmem:[%s6] sm:$0x3]
        %v1246 = vlaneseq
        %v1247 = vshrl.u32 %v1246, 7
        %v1248 = vsub.s32 0, %v1247
        %v1249 = vrot.slane %v1244, %v1248
        %v1250 = vlaneseq
        %v1251 = vshrl.u32 %v1250, 7
        %v1252 = vsub.s32 1, %v1251
        %v1253 = vrot.slane %v1244, %v1252
        %v1260 = vunpack.c.l.b16 %v402
        %v1261 = vunpack.c.l.b16 %v403
        %v1262 = vunpack.c.l.b16 %v404
        %v1263 = vunpack.c.l.b16 %v405
        %v1264 = vpack.c.b16 %v1261, %v1260
        %v1265 = vpack.c.b16 %v1263, %v1262
        %v1284 = vunpack.c.l.b16 %v1228
        %v1285 = vunpack.c.h.b16 %v1228
        %v1286 = vunpack.c.l.b16 %v1229
        %v1287 = vunpack.c.h.b16 %v1229
        %v1288 = vunpack.c.l.b16 %v1230
        %v1289 = vunpack.c.h.b16 %v1230
        %v1290 = vunpack.c.l.b16 %v1231
        %v1291 = vunpack.c.h.b16 %v1231
        %v1292 = vunpack.c.l.b16 %v1232
        %v1293 = vunpack.c.h.b16 %v1232
        %v1294 = vunpack.c.l.b16 %v1233
        %v1295 = vunpack.c.h.b16 %v1233
        %v1296 = vunpack.c.l.b16 %v1234
        %v1297 = vunpack.c.h.b16 %v1234
        %v1298 = vunpack.c.l.b16 %v1235
        %v1299 = vunpack.c.h.b16 %v1235
        %v1300 = vunpack.c.l.b16 %v1236
        %v1301 = vunpack.c.h.b16 %v1236
        %v1302 = vunpack.c.l.b16 %v1237
        %v1303 = vunpack.c.h.b16 %v1237
        %v1304 = vunpack.c.l.b16 %v1238
        %v1305 = vunpack.c.h.b16 %v1238
        %v1306 = vunpack.c.l.b16 %v1239
        %v1307 = vunpack.c.h.b16 %v1239
        %v1308 = vunpack.c.l.b16 %v1240
        %v1309 = vunpack.c.h.b16 %v1240
        %v1310 = vunpack.c.l.b16 %v1241
        %v1311 = vunpack.c.h.b16 %v1241
        %v1312 = vunpack.c.l.b16 %v1242
        %v1313 = vunpack.c.h.b16 %v1242
        %v1314 = vunpack.c.l.b16 %v1243
        %v1315 = vunpack.c.h.b16 %v1243
        %v1316 = vpack.c.b16 %v1286, %v1284
        %v1317 = vpack.c.b16 %v1287, %v1285
        %v1318 = vpack.c.b16 %v1290, %v1288
        %v1319 = vpack.c.b16 %v1291, %v1289
        %v1320 = vpack.c.b16 %v1294, %v1292
        %v1321 = vpack.c.b16 %v1295, %v1293
        %v1322 = vpack.c.b16 %v1298, %v1296
        %v1323 = vpack.c.b16 %v1299, %v1297
        %v1324 = vpack.c.b16 %v1302, %v1300
        %v1325 = vpack.c.b16 %v1303, %v1301
        %v1326 = vpack.c.b16 %v1306, %v1304
        %v1327 = vpack.c.b16 %v1307, %v1305
        %v1328 = vpack.c.b16 %v1310, %v1308
        %v1329 = vpack.c.b16 %v1311, %v1309
        %v1330 = vpack.c.b16 %v1314, %v1312
        %v1331 = vpack.c.b16 %v1315, %v1313
        %1348 = vmatprep.subr.bf16.mxu0 %v1317
        %1349 = vmatpush1.bf16.msra.mxu0 %v1316
        %1350 = vmatprep.subr.bf16.mxu0 %v1319
        %1351 = vmatpush1.bf16.msra.mxu0 %v1318
        %1352 = vmatprep.subr.bf16.mxu0 %v1321
        %1353 = vmatpush1.bf16.msra.mxu0 %v1320
        %1354 = vmatprep.subr.bf16.mxu0 %v1323
        %1355 = vmatpush1.bf16.msra.mxu0 %v1322
        %1356 = vmatprep.subr.bf16.mxu0 %v1325
        %1357 = vmatpush1.bf16.msra.mxu0 %v1324
        %1358 = vmatprep.subr.bf16.mxu0 %v1327
        %1359 = vmatpush1.bf16.msra.mxu0 %v1326
        %1360 = vmatprep.subr.bf16.mxu0 %v1329
        %1361 = vmatpush1.bf16.msra.mxu0 %v1328
        %1362 = vmatprep.subr.bf16.mxu0 %v1331
        %1363 = vmatpush1.bf16.msra.mxu0 %v1330
        %1364 = vmatprep.subr.bf16.mxu0 0
        %1365 = vmatpush1.bf16.msra.mxu0 0
        %1366 = vmatprep.subr.bf16.mxu0 0
        %1367 = vmatpush1.bf16.msra.mxu0 0
        %1368 = vmatprep.subr.bf16.mxu0 0
        %1369 = vmatpush1.bf16.msra.mxu0 0
        %1370 = vmatprep.subr.bf16.mxu0 0
        %1371 = vmatpush1.bf16.msra.mxu0 0
        %1372 = vmatprep.subr.bf16.mxu0 0
        %1373 = vmatpush1.bf16.msra.mxu0 0
        %1374 = vmatprep.subr.bf16.mxu0 0
        %1375 = vmatpush1.bf16.msra.mxu0 0
        %1376 = vmatprep.subr.bf16.mxu0 0
        %1377 = vmatpush1.bf16.msra.mxu0 0
        %1378 = vmatprep.subr.bf16.mxu0 0
        %1379 = vmatpush1.bf16.msra.mxu0 0
        %1380 = vmatprep.mubr.bf16.mxu0 0
        %1381 = vmatmul.mubr.bf16.gmra.mrb[0].mxu0 %v1264
        %v1382 = vpop.f32.mrb[0].mxu0
        %v1383 = vadd.f32 %v1249, %v1382
        %v1384 = vpop.f32.mrb[0].mxu0
        %v1385 = vadd.f32 %v1253, %v1384
        %v1386 = vpop.f32.mrb[0].mxu0
        %v1387 = vadd.f32 %v1249, %v1386
        %v1388 = vpop.f32.mrb[0].mxu0
        %v1389 = vadd.f32 %v1253, %v1388
        %1390 = vmatprep.mubr.bf16.mxu0 0
        %1391 = vmatmul.mubr.bf16.gmra.mrb[0].mxu0 %v1265
        %v1392 = vpop.f32.mrb[0].mxu0
        %v1393 = vadd.f32 %v1249, %v1392
        %v1394 = vpop.f32.mrb[0].mxu0
        %v1395 = vadd.f32 %v1253, %v1394
        %v1396 = vpop.f32.mrb[0].mxu0
        %v1397 = vadd.f32 %v1249, %v1396
        %v1398 = vpop.f32.mrb[0].mxu0
        %v1399 = vadd.f32 %v1253, %v1398
        %1400 = vdwg.mxu0
        %v1401 = vsel %vm431, 1, 0
        %v1402 = vsel %vm432, 1, 0
        %v1403 = vsel %vm433, 1, 0
        %v1404 = vsel %vm434, 1, 0
        %1405 = vset.pattern.permute.xlu0 0
        %1406 = vperm.xlu0 %1405, %v1401
        %v1407 = vpop.permute.xlu0 %1406
        %1408 = vset.pattern.permute.xlu0 0
        %1409 = vperm.xlu0 %1408, %v1402
        %v1410 = vpop.permute.xlu0 %1409
        %1411 = vset.pattern.permute.xlu0 0
        %1412 = vperm.xlu0 %1411, %v1403
        %v1413 = vpop.permute.xlu0 %1412
        %1414 = vset.pattern.permute.xlu0 0
        %1415 = vperm.xlu0 %1414, %v1404
        %v1416 = vpop.permute.xlu0 %1415
        %vm1417 = vcmp.eq.s32.totalorder %v1407, 1
        %vm1418 = vcmp.eq.s32.totalorder %v1410, 1
        %vm1419 = vcmp.eq.s32.totalorder %v1413, 1
        %vm1420 = vcmp.eq.s32.totalorder %v1416, 1
        %v1421 = vsel %vm1417, %v1383, %v1385
        %v1422 = vsel %vm1418, %v1387, %v1389
        %v1423 = vsel %vm1419, %v1393, %v1395
        %v1424 = vsel %vm1420, %v1397, %v1399
        %v1425 = vadd.f32 %v1421, %v1224
        %v1426 = vadd.f32 %v1422, %v1225
        %v1427 = vadd.f32 %v1423, %v1226
        %v1428 = vadd.f32 %v1424, %v1227
        %vm1429 = vcmp.ge.f32.partialorder %v1425, 0.0
        %vm1430 = vcmp.ge.f32.partialorder %v1426, 0.0
        %vm1431 = vcmp.ge.f32.partialorder %v1427, 0.0
        %vm1432 = vcmp.ge.f32.partialorder %v1428, 0.0
        %v1433 = vmul.f32 %v1425, 0.22916667
        %v1434 = vmul.f32 %v1426, 0.22916667
        %v1435 = vmul.f32 %v1427, 0.22916667
        %v1436 = vmul.f32 %v1428, 0.22916667
        %v1437 = vsel %vm1429, %v1425, %v1433
        %v1438 = vsel %vm1430, %v1426, %v1434
        %v1439 = vsel %vm1431, %v1427, %v1435
        %v1440 = vsel %vm1432, %v1428, %v1436
        %1441 = vst [vmem:[%s391] sm:$0xff] %v1437
        %1442 = vst [vmem:[%s391 + $0x8] sm:$0xff] %v1438
        %1443 = vst [vmem:[%s391 + $0x10] sm:$0xff] %v1439
        %1444 = vst [vmem:[%s391 + $0x18] sm:$0xff] %v1440
        %s1445 = sand.u32 %s197, 1
        %s1446 = scalar_lea.sflag [#allocation4], %s1445
        %s1447 = sand.u32 %s197, 1
        %s1448 = smul.addr %s1447, 32
        %s1449 = scalar_lea.vmem [#allocation8], %s1448
        // Predicated region
        $region61: #{tpu_custom_call.1} parent=47 // pred_check
          %p1450 = pneg %p207
        $region62: #{tpu_custom_call.1} parent=47 // pred_check_branch
          %1452 = sbr.rel (%p1450) target = $region64
        $region63: #{tpu_custom_call.1} parent=47 // pred_region
          %s1453 = smul.u32 4, %s27
          %s1455 = ssub.s32 512, 512
          %1456 = vsyncadd %s1446, %s1455
          %s1457 = smul.addr %s1453, 128
          %s1458 = scalar_lea.hbm %s7, %s1457
          %s1459 = sshll.u32 %s1449, 4
          %s1460 = int_to_ptr.vmem [resolvable:$true] %s1459
          %1465 = dma.vmem_to_hbm [thread:$0]  %s1460, 512, %s1458, %s1446, 128, 128, 8
        $region64: #{tpu_custom_call.1} parent=47 // pred_fallthru
          _
      $region48: #{tpu_custom_call.1} parent=5 // pred_fallthru
        _
      %p1466 = scmp.le.s32.totalorder 2, %s22
      // Predicated region
      $region65: #{tpu_custom_call.1} parent=5 // pred_check
        %p1467 = pneg %p1466
      $region66: #{tpu_custom_call.1} parent=5 // pred_check_branch
        %1469 = sbr.rel (%p1467) target = $region68
      $region67: #{tpu_custom_call.1} parent=5 // pred_region
        %s1470 = ssub.s32 %s22, 2
        // Predicated region
        $region69: #{tpu_custom_call.1} parent=67 // pred_check
          %p1471 = pneg %p213
        $region70: #{tpu_custom_call.1} parent=67 // pred_check_branch
          %1473 = sbr.rel (%p1471) target = $region72
        $region71: #{tpu_custom_call.1} parent=67 // pred_region
          %s1474 = sand.u32 %s198, 1
          %s1475 = scalar_lea.sflag [#allocation4], %s1474
          %s1476 = sand.u32 %s198, 1
          %s1477 = smul.addr %s1476, 32
          %s1478 = scalar_lea.vmem [#allocation8], %s1477
          %1479 = dma.done %s1475, 512
        $region72: #{tpu_custom_call.1} parent=67 // pred_fallthru
          _
      $region68: #{tpu_custom_call.1} parent=5 // pred_fallthru
        _
    $region6: #{tpu_custom_call.1} parent=1 // loop_footer
      %s26 = sadd.s32 1, %s22
    $region7: #{tpu_custom_call.1} parent=1 // loop_footer_branch
      %21 = sbr.rel target = $region3
    $region8: #{tpu_custom_call.1} parent=1 // loop_exit
      _
    %1480 = vsyncpa [#allocation3], 1
    %s1481 = scalar_lea.sflag [#allocation3], 1
    %1482 = vsyncpa %s1481, 1
    %1483 = vsyncpa [#allocation6], 1
    %s1484 = scalar_lea.sflag [#allocation6], 1
    %1485 = vsyncpa %s1484, 1
    %1486 = vsyncpa [#allocation4], 1
    %s1487 = scalar_lea.sflag [#allocation4], 1
    %1488 = vsyncpa %s1487, 1

// kernel: tpu_custom_call.1
$region0: #{tpu_custom_call.1}
  #allocation0 [shape = 'u32[]', space=smem, size = 0x4, offset = 0x4, fixed_abs, tag = 'smem constant byte address 0x4 - core index']
  #allocation1 [shape = 'u32[144,128]{1,0:T(1,128)}', space=vmem, size = 0x12000, scoped, tag = 'internal scratch']
  #allocation9 [shape = 's32[]', space=sflag, size = 0x4, offset = 0, fixed_abs, tag = 'sflag constant byte address 0x0 - dummy sync flag']
  %s0 = inlined_call_operand.hbm [shape: bf16[64,128], index: 0, kind: input, shape index: {}]
  %s1 = inlined_call_operand.hbm [shape: bf16[4,64,128], index: 1, kind: input, shape index: {}]
  %s2 = inlined_call_operand.vmem [shape: s32[64,1], index: 2, kind: input, shape index: {}]
  %s3 = inlined_call_operand.vmem [shape: bf16[128,128], index: 3, kind: input, shape index: {}]
  %s4 = inlined_call_operand.vmem [shape: f32[1,128], index: 4, kind: input, shape index: {}]
  %s5 = inlined_call_operand.hbm [shape: bf16[128,256], index: 5, kind: input, shape index: {}]
  %s6 = inlined_call_operand.vmem [shape: f32[1,256], index: 6, kind: input, shape index: {}]
  %s7 = inlined_call_operand.hbm [shape: f32[64,128], index: 7, kind: output, shape index: {}]
  %s8 = sld [smem:[#allocation0]]
  $region73: #{tpu_custom_call.1} parent=0
    _
  %s10 = ssub.s32 1, %s8
  %s11 = scalar_select 0, %s10, %s8
  $region1: #{tpu_custom_call.1} parent=0
    #allocation2 [shape = 'u8[16384]{0}', space=vmem, size = 0x4000, scoped, tag = 'input window, operand 0']
    #allocation3 [shape = 's32[2]{0}', space=sflag, size = 0x8, scoped, tag = 'scoped memory for tpu_custom_call.1']
    #allocation4 [shape = 's32[2]{0}', space=sflag, size = 0x8, scoped, tag = 'scoped memory for tpu_custom_call.1']
    #allocation5 [shape = 'u8[65536]{0}', space=vmem, size = 0x10000, scoped, tag = 'input window, operand 1']
    #allocation6 [shape = 's32[2]{0}', space=sflag, size = 0x8, scoped, tag = 'scoped memory for tpu_custom_call.1']
    #allocation7 [shape = 'u8[65536]{0}', space=vmem, size = 0x10000, scoped, tag = 'input window, operand 5, single buffered']
    #allocation8 [shape = 'u8[32768]{0}', space=vmem, size = 0x8000, scoped, tag = 'output window, operand 0']
    %12 = vsyncpa [#allocation3], 0
    %s13 = scalar_lea.sflag [#allocation3], 1
    %14 = vsyncpa %s13, 0
    %15 = vsyncpa [#allocation6], 0
    %s16 = scalar_lea.sflag [#allocation6], 1
    %17 = vsyncpa %s16, 0
    %18 = vsyncpa [#allocation4], 0
    %s19 = scalar_lea.sflag [#allocation4], 1
    %20 = vsyncpa %s19, 0
    loop: start=0, step=1, limit=4
    $region2: #{tpu_custom_call.1} parent=1 // loop_pre_header
      _
    $region3: #{tpu_custom_call.1} parent=1 // loop_header
      %s22 = sphi 0, %s26
      %p23 = scmp.ge.s32.totalorder %s22, 4
      %s32 = sphi 0, %s34
      %s35 = sphi 0, %s32
      %s36 = sphi 0, %s35
      %s52 = sphi 0, %s36
      %s58 = sphi 0, %s60
      %s61 = sphi 0, %s58
      %s62 = sphi 0, %s61
      %s78 = sphi 0, %s62
      %s84 = sphi 0, %s86
      %s87 = sphi 0, %s84
      %s88 = sphi 0, %s87
      %s104 = sphi 0, %s88
      %s108 = sphi 0, %s108
      %s110 = sphi 0, %s108
      %s111 = sphi 0, %s110
      %s125 = sphi 0, %s111
      %s129 = sphi 0, %s129
      %s131 = sphi 0, %s129
      %s132 = sphi 0, %s131
      %s146 = sphi 0, %s132
      %s150 = sphi 0, %s150
      %s152 = sphi 0, %s150
      %s153 = sphi 0, %s152
      %s167 = sphi 0, %s153
      %s171 = sphi 0, %s171
      %s173 = sphi 0, %s171
      %s174 = sphi 0, %s173
      %s188 = sphi 0, %s174
      %s194 = sphi 0, %s196
      %s197 = sphi 0, %s194
      %s198 = sphi 0, %s197
      %s214 = sphi 0, %s198
    $region4: #{tpu_custom_call.1} parent=1 // loop_header_branch
      %25 = sbr.rel (%p23) target = $region8
    $region5: #{tpu_custom_call.1} parent=1 // loop_body
      %s27 = ssub.s32 %s22, 1
      %s28 = ssub.s32 %s22, 2
      %s29 = sadd.s32 %s22, 1
      %s30 = ssub.s32 %s22, %s29
      %p31 = scmp.eq.s32.totalorder %s30, 0
      %s33 = sadd.s32 %s32, 1
      %s34 = scalar_select %p31, %s32, %s33
      %p37 = pneg %p31
      %p38 = scmp.eq.s32.totalorder %s22, 1
      %p39 = por %p37, %p38
      %p40 = scmp.ne.s32.totalorder %s32, %s35
      %p41 = scmp.eq.s32.totalorder %s22, 0
      %p42 = por %p40, %p41
      %p43 = scmp.ne.s32.totalorder %s32, %s35
      %p44 = scmp.eq.s32.totalorder %s27, 1
      %p45 = por %p43, %p44
      %p46 = scmp.ne.s32.totalorder %s35, %s36
      %p47 = scmp.eq.s32.totalorder %s27, 0
      %p48 = por %p46, %p47
      %p49 = scmp.ne.s32.totalorder %s35, %s36
      %p50 = scmp.eq.s32.totalorder %s28, 1
      %p51 = por %p49, %p50
      %p53 = scmp.ne.s32.totalorder %s36, %s52
      %p54 = scmp.eq.s32.totalorder %s28, 0
      %p55 = por %p53, %p54
      %s56 = ssub.s32 %s22, %s29
      %p57 = scmp.eq.s32.totalorder %s56, 0
      %s59 = sadd.s32 %s58, 1
      %s60 = scalar_select %p57, %s58, %s59
      %p63 = pneg %p57
      %p64 = scmp.eq.s32.totalorder %s22, 1
      %p65 = por %p63, %p64
      %p66 = scmp.ne.s32.totalorder %s58, %s61
      %p67 = scmp.eq.s32.totalorder %s22, 0
      %p68 = por %p66, %p67
      %p69 = scmp.ne.s32.totalorder %s58, %s61
      %p70 = scmp.eq.s32.totalorder %s27, 1
      %p71 = por %p69, %p70
      %p72 = scmp.ne.s32.totalorder %s61, %s62
      %p73 = scmp.eq.s32.totalorder %s27, 0
      %p74 = por %p72, %p73
      %p75 = scmp.ne.s32.totalorder %s61, %s62
      %p76 = scmp.eq.s32.totalorder %s28, 1
      %p77 = por %p75, %p76
      %p79 = scmp.ne.s32.totalorder %s62, %s78
      %p80 = scmp.eq.s32.totalorder %s28, 0
      %p81 = por %p79, %p80
      %s82 = ssub.s32 %s22, %s29
      %p83 = scmp.eq.s32.totalorder %s82, 0
      %s85 = sadd.s32 %s84, 1
      %s86 = scalar_select %p83, %s84, %s85
      %p89 = pneg %p83
      %p90 = scmp.eq.s32.totalorder %s22, 1
      %p91 = por %p89, %p90
      %p92 = scmp.ne.s32.totalorder %s84, %s87
      %p93 = scmp.eq.s32.totalorder %s22, 0
      %p94 = por %p92, %p93
      %p95 = scmp.ne.s32.totalorder %s84, %s87
      %p96 = scmp.eq.s32.totalorder %s27, 1
      %p97 = por %p95, %p96
      %p98 = scmp.ne.s32.totalorder %s87, %s88
      %p99 = scmp.eq.s32.totalorder %s27, 0
      %p100 = por %p98, %p99
      %p101 = scmp.ne.s32.totalorder %s87, %s88
      %p102 = scmp.eq.s32.totalorder %s28, 1
      %p103 = por %p101, %p102
      %p105 = scmp.ne.s32.totalorder %s88, %s104
      %p106 = scmp.eq.s32.totalorder %s28, 0
      %p107 = por %p105, %p106
      %s109 = sadd.s32 %s108, 1
      %p112 = scmp.eq.s32.totalorder %s22, 1
      %p113 = scmp.ne.s32.totalorder %s108, %s110
      %p114 = scmp.eq.s32.totalorder %s22, 0
      %p115 = por %p113, %p114
      %p116 = scmp.ne.s32.totalorder %s108, %s110
      %p117 = scmp.eq.s32.totalorder %s27, 1
      %p118 = por %p116, %p117
      %p119 = scmp.ne.s32.totalorder %s110, %s111
      %p120 = scmp.eq.s32.totalorder %s27, 0
      %p121 = por %p119, %p120
      %p122 = scmp.ne.s32.totalorder %s110, %s111
      %p123 = scmp.eq.s32.totalorder %s28, 1
      %p124 = por %p122, %p123
      %p126 = scmp.ne.s32.totalorder %s111, %s125
      %p127 = scmp.eq.s32.totalorder %s28, 0
      %p128 = por %p126, %p127
      %s130 = sadd.s32 %s129, 1
      %p133 = scmp.eq.s32.totalorder %s22, 1
      %p134 = scmp.ne.s32.totalorder %s129, %s131
      %p135 = scmp.eq.s32.totalorder %s22, 0
      %p136 = por %p134, %p135
      %p137 = scmp.ne.s32.totalorder %s129, %s131
      %p138 = scmp.eq.s32.totalorder %s27, 1
      %p139 = por %p137, %p138
      %p140 = scmp.ne.s32.totalorder %s131, %s132
      %p141 = scmp.eq.s32.totalorder %s27, 0
      %p142 = por %p140, %p141
      %p143 = scmp.ne.s32.totalorder %s131, %s132
      %p144 = scmp.eq.s32.totalorder %s28, 1
      %p145 = por %p143, %p144
      %p147 = scmp.ne.s32.totalorder %s132, %s146
      %p148 = scmp.eq.s32.totalorder %s28, 0
      %p149 = por %p147, %p148
      %s151 = sadd.s32 %s150, 1
      %p154 = scmp.eq.s32.totalorder %s22, 1
      %p155 = scmp.ne.s32.totalorder %s150, %s152
      %p156 = scmp.eq.s32.totalorder %s22, 0
      %p157 = por %p155, %p156
      %p158 = scmp.ne.s32.totalorder %s150, %s152
      %p159 = scmp.eq.s32.totalorder %s27, 1
      %p160 = por %p158, %p159
      %p161 = scmp.ne.s32.totalorder %s152, %s153
      %p162 = scmp.eq.s32.totalorder %s27, 0
      %p163 = por %p161, %p162
      %p164 = scmp.ne.s32.totalorder %s152, %s153
      %p165 = scmp.eq.s32.totalorder %s28, 1
      %p166 = por %p164, %p165
      %p168 = scmp.ne.s32.totalorder %s153, %s167
      %p169 = scmp.eq.s32.totalorder %s28, 0
      %p170 = por %p168, %p169
      %s172 = sadd.s32 %s171, 1
      %p175 = scmp.eq.s32.totalorder %s22, 1
      %p176 = scmp.ne.s32.totalorder %s171, %s173
      %p177 = scmp.eq.s32.totalorder %s22, 0
      %p178 = por %p176, %p177
      %p179 = scmp.ne.s32.totalorder %s171, %s173
      %p180 = scmp.eq.s32.totalorder %s27, 1
      %p181 = por %p179, %p180
      %p182 = scmp.ne.s32.totalorder %s173, %s174
      %p183 = scmp.eq.s32.totalorder %s27, 0
      %p184 = por %p182, %p183
      %p185 = scmp.ne.s32.totalorder %s173, %s174
      %p186 = scmp.eq.s32.totalorder %s28, 1
      %p187 = por %p185, %p186
      %p189 = scmp.ne.s32.totalorder %s174, %s188
      %p190 = scmp.eq.s32.totalorder %s28, 0
      %p191 = por %p189, %p190
      %s192 = ssub.s32 %s22, %s29
      %p193 = scmp.eq.s32.totalorder %s192, 0
      %s195 = sadd.s32 %s194, 1
      %s196 = scalar_select %p193, %s194, %s195
      %p199 = pneg %p193
      %p200 = scmp.eq.s32.totalorder %s22, 1
      %p201 = por %p199, %p200
      %p202 = scmp.ne.s32.totalorder %s194, %s197
      %p203 = scmp.eq.s32.totalorder %s22, 0
      %p204 = por %p202, %p203
      %p205 = scmp.ne.s32.totalorder %s194, %s197
      %p206 = scmp.eq.s32.totalorder %s27, 1
      %p207 = por %p205, %p206
      %p208 = scmp.ne.s32.totalorder %s197, %s198
      %p209 = scmp.eq.s32.totalorder %s27, 0
      %p210 = por %p208, %p209
      %p211 = scmp.ne.s32.totalorder %s197, %s198
      %p212 = scmp.eq.s32.totalorder %s28, 1
      %p213 = por %p211, %p212
      %p215 = scmp.ne.s32.totalorder %s198, %s214
      %p216 = scmp.eq.s32.totalorder %s28, 0
      %p217 = por %p215, %p216
      %p218 = scmp.le.s32.totalorder 1, %s22
      %p219 = scmp.lt.s32.totalorder %s22, 3
      %p220 = pnand %p218, %p219
      %p221 = pneg %p220
      // Predicated region
      $region9: #{tpu_custom_call.1} parent=5 // pred_check
        _
      $region10: #{tpu_custom_call.1} parent=5 // pred_check_branch
        %223 = sbr.rel (%p220) target = $region12
      $region11: #{tpu_custom_call.1} parent=5 // pred_region
        %s224 = ssub.s32 %s22, 1
        // Predicated region
        $region13: #{tpu_custom_call.1} parent=11 // pred_check
          %p225 = pneg %p121
        $region14: #{tpu_custom_call.1} parent=11 // pred_check_branch
          %227 = sbr.rel (%p225) target = $region16
        $region15: #{tpu_custom_call.1} parent=11 // pred_region
          _
        $region16: #{tpu_custom_call.1} parent=11 // pred_fallthru
          _
        // Predicated region
        $region17: #{tpu_custom_call.1} parent=11 // pred_check
          %p228 = pneg %p142
        $region18: #{tpu_custom_call.1} parent=11 // pred_check_branch
          %230 = sbr.rel (%p228) target = $region20
        $region19: #{tpu_custom_call.1} parent=11 // pred_region
          _
        $region20: #{tpu_custom_call.1} parent=11 // pred_fallthru
          _
        // Predicated region
        $region21: #{tpu_custom_call.1} parent=11 // pred_check
          %p231 = pneg %p163
        $region22: #{tpu_custom_call.1} parent=11 // pred_check_branch
          %233 = sbr.rel (%p231) target = $region24
        $region23: #{tpu_custom_call.1} parent=11 // pred_region
          %s235 = ssub.s32 2048, 2048
          %236 = vsyncadd [#allocation6], %s235
          %s237 = sshll.u32 [#allocation7], 4
          %s238 = int_to_ptr.vmem [resolvable:$true] %s237
          %243 = dma.hbm_to_vmem [thread:$0]  %s5, 2048, %s238, [#allocation6], 128, 128, 8
        $region24: #{tpu_custom_call.1} parent=11 // pred_fallthru
          _
        // Predicated region
        $region25: #{tpu_custom_call.1} parent=11 // pred_check
          %p244 = pneg %p184
        $region26: #{tpu_custom_call.1} parent=11 // pred_check_branch
          %246 = sbr.rel (%p244) target = $region28
        $region27: #{tpu_custom_call.1} parent=11 // pred_region
          _
        $region28: #{tpu_custom_call.1} parent=11 // pred_fallthru
          _
      $region12: #{tpu_custom_call.1} parent=5 // pred_fallthru
        _
      %p247 = scmp.lt.s32.totalorder %s22, 2
      // Predicated region
      $region29: #{tpu_custom_call.1} parent=5 // pred_check
        %p248 = pneg %p247
      $region30: #{tpu_custom_call.1} parent=5 // pred_check_branch
        %250 = sbr.rel (%p248) target = $region32
      $region31: #{tpu_custom_call.1} parent=5 // pred_region
        // Predicated region
        $region33: #{tpu_custom_call.1} parent=31 // pred_check
          %p251 = pneg %p42
        $region34: #{tpu_custom_call.1} parent=31 // pred_check_branch
          %253 = sbr.rel (%p251) target = $region36
        $region35: #{tpu_custom_call.1} parent=31 // pred_region
          %s254 = sand.u32 %s32, 1
          %s255 = scalar_lea.sflag [#allocation3], %s254
          %s256 = sand.u32 %s32, 1
          %s257 = smul.addr %s256, 16
          %s258 = scalar_lea.vmem [#allocation2], %s257
          %s259 = smul.u32 4, %s22
          %s261 = ssub.s32 256, 256
          %262 = vsyncadd %s255, %s261
          %s263 = smul.addr %s259, 64
          %s264 = scalar_lea.hbm %s0, %s263
          %s265 = sshll.u32 %s258, 4
          %s266 = int_to_ptr.vmem [resolvable:$true] %s265
          %271 = dma.hbm_to_vmem [thread:$0]  %s264, 256, %s266, %s255, 64, 64, 4
        $region36: #{tpu_custom_call.1} parent=31 // pred_fallthru
          _
        // Predicated region
        $region37: #{tpu_custom_call.1} parent=31 // pred_check
          %p272 = pneg %p68
        $region38: #{tpu_custom_call.1} parent=31 // pred_check_branch
          %274 = sbr.rel (%p272) target = $region40
        $region39: #{tpu_custom_call.1} parent=31 // pred_region
          #allocation10 [shape = 'u32[6]{0}', space=smem, size = 0x18, scoped, tag = 'DMA stride descriptor']
          %s275 = sand.u32 %s22, 1
          %s276 = scalar_lea.sflag [#allocation6], %s275
          %s277 = sand.u32 %s58, 1
          %s278 = smul.addr %s277, 64
          %s279 = scalar_lea.vmem [#allocation5], %s278
          %s280 = smul.u32 4, %s22
          %s282 = ssub.s32 1024, 1024
          %283 = vsyncadd %s276, %s282
          %s284 = smul.addr %s280, 64
          %s285 = scalar_lea.hbm %s1, %s284
          %s287 = sshll.u32 1, 14
          %s288 = sxor.u32 4294967295, %s287
          %s290 = sld [smem:[#allocation0]]
          %s291 = sadd.s32 2, %s290
          %s293 = sshll.u32 7, 26
          %s294 = sxor.u32 4294967295, %s293
          %s295 = sand.u32 0, %s294
          %s296 = sshll.u32 %s291, 26
          %s297 = sor.u32 %s295, %s296
          %s298 = sshll.u32 %s279, 4
          %s299 = int_to_ptr.vmem [resolvable:$true] %s298
          %305 = sst [smem:[#allocation10]] 512
          %s306 = scalar_lea.smem [#allocation10], 1
          %307 = sst [smem:[%s306]] 256
          %s308 = scalar_lea.smem [#allocation10], 2
          %309 = sst [smem:[%s308]] 4
          %s310 = scalar_lea.smem [#allocation10], 3
          %311 = sst [smem:[%s310]] 64
          %s312 = scalar_lea.smem [#allocation10], 4
          %313 = sst [smem:[%s312]] 64
          %s314 = scalar_lea.smem [#allocation10], 5
          %315 = sst [smem:[%s314]] 4
          %317 = dma.general %s285, 1024, %s299, %s276, [#allocation9], [#allocation10], %s297, 0
        $region40: #{tpu_custom_call.1} parent=31 // pred_fallthru
          _
        // Predicated region
        $region41: #{tpu_custom_call.1} parent=31 // pred_check
          %p318 = pneg %p94
        $region42: #{tpu_custom_call.1} parent=31 // pred_check_branch
          %320 = sbr.rel (%p318) target = $region44
        $region43: #{tpu_custom_call.1} parent=31 // pred_region
          %s321 = smul.u32 4, %s22
          %p322 = scmp.lt.s32.totalorder %s321, 7
          %s323 = scalar_select %p322, %s321, 7
          %s324 = smul.addr %s323, 8
          %s325 = scalar_lea.vmem %s2, %s324
          %s326 = smul.u32 4, %s22
        $region44: #{tpu_custom_call.1} parent=31 // pred_fallthru
          _
      $region32: #{tpu_custom_call.1} parent=5 // pred_fallthru
        _
      %p327 = scmp.le.s32.totalorder 1, %s22
      %p328 = scmp.lt.s32.totalorder %s22, 3
      %p329 = pnand %p327, %p328
      %p330 = pneg %p329
      // Predicated region
      $region45: #{tpu_custom_call.1} parent=5 // pred_check
        _
      $region46: #{tpu_custom_call.1} parent=5 // pred_check_branch
        %332 = sbr.rel (%p329) target = $region48
      $region47: #{tpu_custom_call.1} parent=5 // pred_region
        %s333 = ssub.s32 %s22, 1
        %s334 = sand.u32 %s35, 1
        %s335 = scalar_lea.sflag [#allocation3], %s334
        %s336 = sand.u32 %s35, 1
        %s337 = smul.addr %s336, 16
        %s338 = scalar_lea.vmem [#allocation2], %s337
        // Predicated region
        $region49: #{tpu_custom_call.1} parent=47 // pred_check
          %p339 = pneg %p48
        $region50: #{tpu_custom_call.1} parent=47 // pred_check_branch
          %341 = sbr.rel (%p339) target = $region52
        $region51: #{tpu_custom_call.1} parent=47 // pred_region
          %342 = dma.done %s335, 256
        $region52: #{tpu_custom_call.1} parent=47 // pred_fallthru
          _
        %s343 = sand.u32 %s27, 1
        %s344 = scalar_lea.sflag [#allocation6], %s343
        %s345 = sand.u32 %s61, 1
        %s346 = smul.addr %s345, 64
        %s347 = scalar_lea.vmem [#allocation5], %s346
        // Predicated region
        $region53: #{tpu_custom_call.1} parent=47 // pred_check
          %p348 = pneg %p74
        $region54: #{tpu_custom_call.1} parent=47 // pred_check_branch
          %350 = sbr.rel (%p348) target = $region56
        $region55: #{tpu_custom_call.1} parent=47 // pred_region
          %351 = dma.done %s344, 1024
        $region56: #{tpu_custom_call.1} parent=47 // pred_fallthru
          _
        // Predicated region
        $region57: #{tpu_custom_call.1} parent=47 // pred_check
          %p352 = pneg %p163
        $region58: #{tpu_custom_call.1} parent=47 // pred_check_branch
          %354 = sbr.rel (%p352) target = $region60
        $region59: #{tpu_custom_call.1} parent=47 // pred_region
          %355 = dma.done [#allocation6], 2048
        $region60: #{tpu_custom_call.1} parent=47 // pred_fallthru
          _
        %s356 = sand.u32 %s35, 1
        %s357 = scalar_lea.sflag [#allocation3], %s356
        %s358 = sand.u32 %s35, 1
        %s359 = smul.addr %s358, 16
        %s360 = scalar_lea.vmem [#allocation2], %s359
        %p361 = pneg %p48
        %p362 = pneg %p45
        %s363 = sand.u32 %s27, 1
        %s364 = scalar_lea.sflag [#allocation6], %s363
        %s365 = sand.u32 %s61, 1
        %s366 = smul.addr %s365, 64
        %s367 = scalar_lea.vmem [#allocation5], %s366
        %p368 = pneg %p74
        %p369 = pneg %p71
        %s370 = smul.u32 4, %s27
        %p371 = scmp.lt.s32.totalorder %s370, 7
        %s372 = scalar_select %p371, %s370, 7
        %s373 = smul.addr %s372, 8
        %s374 = scalar_lea.vmem %s2, %s373
        %p375 = pneg %p100
        %p376 = pneg %p97
        %p377 = pneg %p121
        %p378 = pneg %p118
        %p379 = pneg %p142
        %p380 = pneg %p139
        %p381 = pneg %p163
        %p382 = pneg %p160
        %p383 = pneg %p184
        %p384 = pneg %p181
        %p385 = pneg %p210
        %p386 = pneg %p207
        %s387 = sand.u32 %s197, 1
        %s388 = scalar_lea.sflag [#allocation4], %s387
        %s389 = sand.u32 %s197, 1
        %s390 = smul.addr %s389, 32
        %s391 = scalar_lea.vmem [#allocation8], %s390
        %s392 = smul.u32 4, %s27
        %s393 = smul.u32 4, %s27
        %s394 = smul.u32 4, %s27
        %p395 = scmp.lt.s32.totalorder %s394, 7
        %s396 = scalar_select %p395, %s394, 7
        %s397 = smul.addr %s396, 8
        %s398 = scalar_lea.vmem %s2, %s397
        %s399 = smul.u32 4, %s27
        %s400 = smul.u32 4, %s27
        %v402 = vld [vmem:[%s338] sm:$0xf]
        %v403 = vld [vmem:[%s338 + $0x4] sm:$0xf]
        %v404 = vld [vmem:[%s338 + $0x8] sm:$0xf]
        %v405 = vld [vmem:[%s338 + $0xc] sm:$0xf]
        %v406 = vunpack.c.l.bf16 %v402
        %v407 = vunpack.c.l.bf16 %v403
        %v408 = vunpack.c.l.bf16 %v404
        %v409 = vunpack.c.l.bf16 %v405
        %v410 = vld [vmem:[%s398] sm:$0xff]
        %v411 = vld [vmem:[%s398 + $0x8] sm:$0xff]
        %v412 = vld [vmem:[%s398 + $0x10] sm:$0xff]
        %v413 = vld [vmem:[%s398 + $0x18] sm:$0xff]
        %v414 = vld [vmem:[%s3] sm:$0xf]
        %v415 = vld [vmem:[%s3 + $0x4] sm:$0xf]
        %v416 = vld [vmem:[%s3 + $0x8] sm:$0xf]
        %v417 = vld [vmem:[%s3 + $0xc] sm:$0xf]
        %v418 = vld [vmem:[%s3 + $0x10] sm:$0xf]
        %v419 = vld [vmem:[%s3 + $0x14] sm:$0xf]
        %v420 = vld [vmem:[%s3 + $0x18] sm:$0xf]
        %v421 = vld [vmem:[%s3 + $0x1c] sm:$0xf]
        %v422 = vld [vmem:[%s3 + $0x20] sm:$0xf]
        %v423 = vld [vmem:[%s3 + $0x24] sm:$0xf]
        %v424 = vld [vmem:[%s3 + $0x28] sm:$0xf]
        %v425 = vld [vmem:[%s3 + $0x2c] sm:$0xf]
        %v426 = vld [vmem:[%s3 + $0x30] sm:$0xf]
        %v427 = vld [vmem:[%s3 + $0x34] sm:$0xf]
        %v428 = vld [vmem:[%s3 + $0x38] sm:$0xf]
        %v429 = vld [vmem:[%s3 + $0x3c] sm:$0xf]
        %v430 = vld [vmem:[%s4] sm:$0x1]
        %vm431 = vcmp.gt.s32.totalorder %v410, 0
        %vm432 = vcmp.gt.s32.totalorder %v411, 0
        %vm433 = vcmp.gt.s32.totalorder %v412, 0
        %vm434 = vcmp.gt.s32.totalorder %v413, 0
        %v435 = vld [vmem:[%s347] sm:$0xf]
        %v436 = vld [vmem:[%s347 + $0x4] sm:$0xf]
        %v437 = vld [vmem:[%s347 + $0x8] sm:$0xf]
        %v438 = vld [vmem:[%s347 + $0xc] sm:$0xf]
        %v440 = vlaneseq
        %v441 = vshrl.u32 %v440, 7
        %v442 = vsub.s32 0, %v441
        %v443 = vrot.slane %v430, %v442
        %v449 = vunpack.c.l.b16 %v435
        %v450 = vunpack.c.l.b16 %v436
        %v451 = vunpack.c.l.b16 %v437
        %v452 = vunpack.c.l.b16 %v438
        %v453 = vpack.c.b16 %v450, %v449
        %v454 = vpack.c.b16 %v452, %v451
        %v473 = vunpack.c.l.b16 %v414
        %v474 = vunpack.c.l.b16 %v415
        %v475 = vunpack.c.l.b16 %v416
        %v476 = vunpack.c.l.b16 %v417
        %v477 = vunpack.c.l.b16 %v418
        %v478 = vunpack.c.l.b16 %v419
        %v479 = vunpack.c.l.b16 %v420
        %v480 = vunpack.c.l.b16 %v421
        %v481 = vunpack.c.l.b16 %v422
        %v482 = vunpack.c.l.b16 %v423
        %v483 = vunpack.c.l.b16 %v424
        %v484 = vunpack.c.l.b16 %v425
        %v485 = vunpack.c.l.b16 %v426
        %v486 = vunpack.c.l.b16 %v427
        %v487 = vunpack.c.l.b16 %v428
        %v488 = vunpack.c.l.b16 %v429
        %v489 = vpack.c.b16 %v474, %v473
        %v490 = vpack.c.b16 %v476, %v475
        %v491 = vpack.c.b16 %v478, %v477
        %v492 = vpack.c.b16 %v480, %v479
        %v493 = vpack.c.b16 %v482, %v481
        %v494 = vpack.c.b16 %v484, %v483
        %v495 = vpack.c.b16 %v486, %v485
        %v496 = vpack.c.b16 %v488, %v487
        %505 = vmatprep.subr.bf16.mxu0 0
        %506 = vmatpush1.bf16.msra.mxu0 %v489
        %507 = vmatprep.subr.bf16.mxu0 0
        %508 = vmatpush1.bf16.msra.mxu0 %v490
        %509 = vmatprep.subr.bf16.mxu0 0
        %510 = vmatpush1.bf16.msra.mxu0 %v491
        %511 = vmatprep.subr.bf16.mxu0 0
        %512 = vmatpush1.bf16.msra.mxu0 %v492
        %513 = vmatprep.subr.bf16.mxu0 0
        %514 = vmatpush1.bf16.msra.mxu0 %v493
        %515 = vmatprep.subr.bf16.mxu0 0
        %516 = vmatpush1.bf16.msra.mxu0 %v494
        %517 = vmatprep.subr.bf16.mxu0 0
        %518 = vmatpush1.bf16.msra.mxu0 %v495
        %519 = vmatprep.subr.bf16.mxu0 0
        %520 = vmatpush1.bf16.msra.mxu0 %v496
        %521 = vmatprep.subr.bf16.mxu0 0
        %522 = vmatpush1.bf16.msra.mxu0 0
        %523 = vmatprep.subr.bf16.mxu0 0
        %524 = vmatpush1.bf16.msra.mxu0 0
        %525 = vmatprep.subr.bf16.mxu0 0
        %526 = vmatpush1.bf16.msra.mxu0 0
        %527 = vmatprep.subr.bf16.mxu0 0
        %528 = vmatpush1.bf16.msra.mxu0 0
        %529 = vmatprep.subr.bf16.mxu0 0
        %530 = vmatpush1.bf16.msra.mxu0 0
        %531 = vmatprep.subr.bf16.mxu0 0
        %532 = vmatpush1.bf16.msra.mxu0 0
        %533 = vmatprep.subr.bf16.mxu0 0
        %534 = vmatpush1.bf16.msra.mxu0 0
        %535 = vmatprep.subr.bf16.mxu0 0
        %536 = vmatpush1.bf16.msra.mxu0 0
        %537 = vmatprep.mubr.bf16.mxu0 0
        %538 = vmatmul.mubr.bf16.gmra.mrb[0].mxu0 %v453
        %v539 = vpop.f32.mrb[0].mxu0
        %v540 = vadd.f32 %v443, %v539
        %v541 = vpop.f32.mrb[0].mxu0
        %v542 = vpop.f32.mrb[0].mxu0
        %v543 = vadd.f32 %v443, %v542
        %v544 = vpop.f32.mrb[0].mxu0
        %545 = vmatprep.mubr.bf16.mxu0 0
        %546 = vmatmul.mubr.bf16.gmra.mrb[0].mxu0 %v454
        %v547 = vpop.f32.mrb[0].mxu0
        %v548 = vadd.f32 %v443, %v547
        %v549 = vpop.f32.mrb[0].mxu0
        %v550 = vpop.f32.mrb[0].mxu0
        %v551 = vadd.f32 %v443, %v550
        %v552 = vpop.f32.mrb[0].mxu0
        %553 = vdwg.mxu0
        %v554 = vmul.f32 %v540, %v406
        %v555 = vmul.f32 %v543, %v407
        %v556 = vmul.f32 %v548, %v408
        %v557 = vmul.f32 %v551, %v409
        %558 = vadd.xlane.f32.xlu0 %v554
        %v559 = vpop.xlane.xlu0 %558
        %560 = vadd.xlane.f32.xlu0 %v555
        %v561 = vpop.xlane.xlu0 %560
        %562 = vadd.xlane.f32.xlu0 %v556
        %v563 = vpop.xlane.xlu0 %562
        %564 = vadd.xlane.f32.xlu0 %v557
        %v565 = vpop.xlane.xlu0 %564
        %v566 = vsel %vm431, %v559, -1e+30
        %v567 = vsel %vm432, %v561, -1e+30
        %v568 = vsel %vm433, %v563, -1e+30
        %v569 = vsel %vm434, %v565, -1e+30
        %v570 = vmax.f32 %v566, -1e+30
        %v571 = vmax.f32 %v567, -1e+30
        %v572 = vmax.f32 %v568, -1e+30
        %v573 = vmax.f32 %v569, -1e+30
        %v574 = vsub.f32 -1e+30, %v570
        %v575 = vsub.f32 -1e+30, %v571
        %v576 = vsub.f32 -1e+30, %v572
        %v577 = vsub.f32 -1e+30, %v573
        %v578 = vmul.f32 %v574, 1.442695
        %v579 = vpow.pop %v578
        %v580 = vmul.f32 %v575, 1.442695
        %v581 = vpow.pop %v580
        %v582 = vmul.f32 %v576, 1.442695
        %v583 = vpow.pop %v582
        %v584 = vmul.f32 %v577, 1.442695
        %v585 = vpow.pop %v584
        %v586 = vsub.f32 %v566, %v570
        %v587 = vsub.f32 %v567, %v571
        %v588 = vsub.f32 %v568, %v572
        %v589 = vsub.f32 %v569, %v573
        %v590 = vmul.f32 %v586, 1.442695
        %v591 = vpow.pop %v590
        %v592 = vmul.f32 %v587, 1.442695
        %v593 = vpow.pop %v592
        %v594 = vmul.f32 %v588, 1.442695
        %v595 = vpow.pop %v594
        %v596 = vmul.f32 %v589, 1.442695
        %v597 = vpow.pop %v596
        %v598 = vsel %vm431, %v591, 0.0
        %v599 = vsel %vm432, %v593, 0.0
        %v600 = vsel %vm433, %v595, 0.0
        %v601 = vsel %vm434, %v597, 0.0
        %v602 = vmul.f32 %v579, 0.0
        %v603 = vmul.f32 %v581, 0.0
        %v604 = vmul.f32 %v583, 0.0
        %v605 = vmul.f32 %v585, 0.0
        %v606 = vadd.f32 %v602, %v598
        %v607 = vadd.f32 %v603, %v599
        %v608 = vadd.f32 %v604, %v600
        %v609 = vadd.f32 %v605, %v601
        %611 = vset.pattern.permute.xlu0 0
        %612 = vperm.xlu0 %611, %v579
        %v613 = vpop.permute.xlu0 %612
        %616 = vset.pattern.permute.xlu0 0
        %617 = vperm.xlu0 %616, %v581
        %v618 = vpop.permute.xlu0 %617
        %621 = vset.pattern.permute.xlu0 0
        %622 = vperm.xlu0 %621, %v583
        %v623 = vpop.permute.xlu0 %622
        %626 = vset.pattern.permute.xlu0 0
        %627 = vperm.xlu0 %626, %v585
        %v628 = vpop.permute.xlu0 %627
        %v630 = vmul.f32 %v613, 0.0
        %v631 = vmul.f32 %v618, 0.0
        %v632 = vmul.f32 %v623, 0.0
        %v633 = vmul.f32 %v628, 0.0
        %635 = vset.pattern.permute.xlu0 0
        %636 = vperm.xlu0 %635, %v598
        %v637 = vpop.permute.xlu0 %636
        %640 = vset.pattern.permute.xlu0 0
        %641 = vperm.xlu0 %640, %v599
        %v642 = vpop.permute.xlu0 %641
        %645 = vset.pattern.permute.xlu0 0
        %646 = vperm.xlu0 %645, %v600
        %v647 = vpop.permute.xlu0 %646
        %650 = vset.pattern.permute.xlu0 0
        %651 = vperm.xlu0 %650, %v601
        %v652 = vpop.permute.xlu0 %651
        %v654 = vmul.f32 %v637, %v540
        %v655 = vmul.f32 %v642, %v543
        %v656 = vmul.f32 %v647, %v548
        %v657 = vmul.f32 %v652, %v551
        %v658 = vadd.f32 %v630, %v654
        %v659 = vadd.f32 %v631, %v655
        %v660 = vadd.f32 %v632, %v656
        %v661 = vadd.f32 %v633, %v657
        %vm662 = vcmp.gt.s32.totalorder %v410, 1
        %vm663 = vcmp.gt.s32.totalorder %v411, 1
        %vm664 = vcmp.gt.s32.totalorder %v412, 1
        %vm665 = vcmp.gt.s32.totalorder %v413, 1
        %s666 = scalar_lea.vmem %s347, 16 [#allocation5]
        %v667 = vld [vmem:[%s666] sm:$0xf]
        %v668 = vld [vmem:[%s666 + $0x4] sm:$0xf]
        %v669 = vld [vmem:[%s666 + $0x8] sm:$0xf]
        %v670 = vld [vmem:[%s666 + $0xc] sm:$0xf]
        %v675 = vunpack.c.l.b16 %v667
        %v676 = vunpack.c.l.b16 %v668
        %v677 = vunpack.c.l.b16 %v669
        %v678 = vunpack.c.l.b16 %v670
        %v679 = vpack.c.b16 %v676, %v675
        %v680 = vpack.c.b16 %v678, %v677
        %683 = vmatprep.subr.bf16.mxu0 0
        %684 = vmatpush1.bf16.msra.mxu0 %v489
        %685 = vmatprep.subr.bf16.mxu0 0
        %686 = vmatpush1.bf16.msra.mxu0 %v490
        %687 = vmatprep.subr.bf16.mxu0 0
        %688 = vmatpush1.bf16.msra.mxu0 %v491
        %689 = vmatprep.subr.bf16.mxu0 0
        %690 = vmatpush1.bf16.msra.mxu0 %v492
        %691 = vmatprep.subr.bf16.mxu0 0
        %692 = vmatpush1.bf16.msra.mxu0 %v493
        %693 = vmatprep.subr.bf16.mxu0 0
        %694 = vmatpush1.bf16.msra.mxu0 %v494
        %695 = vmatprep.subr.bf16.mxu0 0
        %696 = vmatpush1.bf16.msra.mxu0 %v495
        %697 = vmatprep.subr.bf16.mxu0 0
        %698 = vmatpush1.bf16.msra.mxu0 %v496
        %699 = vmatprep.subr.bf16.mxu0 0
        %700 = vmatpush1.bf16.msra.mxu0 0
        %701 = vmatprep.subr.bf16.mxu0 0
        %702 = vmatpush1.bf16.msra.mxu0 0
        %703 = vmatprep.subr.bf16.mxu0 0
        %704 = vmatpush1.bf16.msra.mxu0 0
        %705 = vmatprep.subr.bf16.mxu0 0
        %706 = vmatpush1.bf16.msra.mxu0 0
        %707 = vmatprep.subr.bf16.mxu0 0
        %708 = vmatpush1.bf16.msra.mxu0 0
        %709 = vmatprep.subr.bf16.mxu0 0
        %710 = vmatpush1.bf16.msra.mxu0 0
        %711 = vmatprep.subr.bf16.mxu0 0
        %712 = vmatpush1.bf16.msra.mxu0 0
        %713 = vmatprep.subr.bf16.mxu0 0
        %714 = vmatpush1.bf16.msra.mxu0 0
        %715 = vmatprep.mubr.bf16.mxu0 0
        %716 = vmatmul.mubr.bf16.gmra.mrb[0].mxu0 %v679
        %v717 = vpop.f32.mrb[0].mxu0
        %v718 = vadd.f32 %v443, %v717
        %v719 = vpop.f32.mrb[0].mxu0
        %v720 = vpop.f32.mrb[0].mxu0
        %v721 = vadd.f32 %v443, %v720
        %v722 = vpop.f32.mrb[0].mxu0
        %723 = vmatprep.mubr.bf16.mxu0 0
        %724 = vmatmul.mubr.bf16.gmra.mrb[0].mxu0 %v680
        %v725 = vpop.f32.mrb[0].mxu0
        %v726 = vadd.f32 %v443, %v725
        %v727 = vpop.f32.mrb[0].mxu0
        %v728 = vpop.f32.mrb[0].mxu0
        %v729 = vadd.f32 %v443, %v728
        %v730 = vpop.f32.mrb[0].mxu0
        %731 = vdwg.mxu0
        %v732 = vmul.f32 %v718, %v406
        %v733 = vmul.f32 %v721, %v407
        %v734 = vmul.f32 %v726, %v408
        %v735 = vmul.f32 %v729, %v409
        %736 = vadd.xlane.f32.xlu0 %v732
        %v737 = vpop.xlane.xlu0 %736
        %738 = vadd.xlane.f32.xlu0 %v733
        %v739 = vpop.xlane.xlu0 %738
        %740 = vadd.xlane.f32.xlu0 %v734
        %v741 = vpop.xlane.xlu0 %740
        %742 = vadd.xlane.f32.xlu0 %v735
        %v743 = vpop.xlane.xlu0 %742
        %v744 = vsel %vm662, %v737, -1e+30
        %v745 = vsel %vm663, %v739, -1e+30
        %v746 = vsel %vm664, %v741, -1e+30
        %v747 = vsel %vm665, %v743, -1e+30
        %v748 = vmax.f32 %v570, %v744
        %v749 = vmax.f32 %v571, %v745
        %v750 = vmax.f32 %v572, %v746
        %v751 = vmax.f32 %v573, %v747
        %v752 = vsub.f32 %v570, %v748
        %v753 = vsub.f32 %v571, %v749
        %v754 = vsub.f32 %v572, %v750
        %v755 = vsub.f32 %v573, %v751
        %v756 = vmul.f32 %v752, 1.442695
        %v757 = vpow.pop %v756
        %v758 = vmul.f32 %v753, 1.442695
        %v759 = vpow.pop %v758
        %v760 = vmul.f32 %v754, 1.442695
        %v761 = vpow.pop %v760
        %v762 = vmul.f32 %v755, 1.442695
        %v763 = vpow.pop %v762
        %v764 = vsub.f32 %v744, %v748
        %v765 = vsub.f32 %v745, %v749
        %v766 = vsub.f32 %v746, %v750
        %v767 = vsub.f32 %v747, %v751
        %v768 = vmul.f32 %v764, 1.442695
        %v769 = vpow.pop %v768
        %v770 = vmul.f32 %v765, 1.442695
        %v771 = vpow.pop %v770
        %v772 = vmul.f32 %v766, 1.442695
        %v773 = vpow.pop %v772
        %v774 = vmul.f32 %v767, 1.442695
        %v775 = vpow.pop %v774
        %v776 = vsel %vm662, %v769, 0.0
        %v777 = vsel %vm663, %v771, 0.0
        %v778 = vsel %vm664, %v773, 0.0
        %v779 = vsel %vm665, %v775, 0.0
        %v780 = vmul.f32 %v606, %v757
        %v781 = vmul.f32 %v607, %v759
        %v782 = vmul.f32 %v608, %v761
        %v783 = vmul.f32 %v609, %v763
        %v784 = vadd.f32 %v780, %v776
        %v785 = vadd.f32 %v781, %v777
        %v786 = vadd.f32 %v782, %v778
        %v787 = vadd.f32 %v783, %v779
        %789 = vset.pattern.permute.xlu0 0
        %790 = vperm.xlu0 %789, %v757
        %v791 = vpop.permute.xlu0 %790
        %794 = vset.pattern.permute.xlu0 0
        %795 = vperm.xlu0 %794, %v759
        %v796 = vpop.permute.xlu0 %795
        %799 = vset.pattern.permute.xlu0 0
        %800 = vperm.xlu0 %799, %v761
        %v801 = vpop.permute.xlu0 %800
        %804 = vset.pattern.permute.xlu0 0
        %805 = vperm.xlu0 %804, %v763
        %v806 = vpop.permute.xlu0 %805
        %v808 = vmul.f32 %v658, %v791
        %v809 = vmul.f32 %v659, %v796
        %v810 = vmul.f32 %v660, %v801
        %v811 = vmul.f32 %v661, %v806
        %813 = vset.pattern.permute.xlu0 0
        %814 = vperm.xlu0 %813, %v776
        %v815 = vpop.permute.xlu0 %814
        %818 = vset.pattern.permute.xlu0 0
        %819 = vperm.xlu0 %818, %v777
        %v820 = vpop.permute.xlu0 %819
        %823 = vset.pattern.permute.xlu0 0
        %824 = vperm.xlu0 %823, %v778
        %v825 = vpop.permute.xlu0 %824
        %828 = vset.pattern.permute.xlu0 0
        %829 = vperm.xlu0 %828, %v779
        %v830 = vpop.permute.xlu0 %829
        %v832 = vmul.f32 %v815, %v718
        %v833 = vmul.f32 %v820, %v721
        %v834 = vmul.f32 %v825, %v726
        %v835 = vmul.f32 %v830, %v729
        %v836 = vadd.f32 %v808, %v832
        %v837 = vadd.f32 %v809, %v833
        %v838 = vadd.f32 %v810, %v834
        %v839 = vadd.f32 %v811, %v835
        %vm840 = vcmp.gt.s32.totalorder %v410, 2
        %vm841 = vcmp.gt.s32.totalorder %v411, 2
        %vm842 = vcmp.gt.s32.totalorder %v412, 2
        %vm843 = vcmp.gt.s32.totalorder %v413, 2
        %s844 = scalar_lea.vmem %s347, 32 [#allocation5]
        %v845 = vld [vmem:[%s844] sm:$0xf]
        %v846 = vld [vmem:[%s844 + $0x4] sm:$0xf]
        %v847 = vld [vmem:[%s844 + $0x8] sm:$0xf]
        %v848 = vld [vmem:[%s844 + $0xc] sm:$0xf]
        %v853 = vunpack.c.l.b16 %v845
        %v854 = vunpack.c.l.b16 %v846
        %v855 = vunpack.c.l.b16 %v847
        %v856 = vunpack.c.l.b16 %v848
        %v857 = vpack.c.b16 %v854, %v853
        %v858 = vpack.c.b16 %v856, %v855
        %861 = vmatprep.subr.bf16.mxu0 0
        %862 = vmatpush1.bf16.msra.mxu0 %v489
        %863 = vmatprep.subr.bf16.mxu0 0
        %864 = vmatpush1.bf16.msra.mxu0 %v490
        %865 = vmatprep.subr.bf16.mxu0 0
        %866 = vmatpush1.bf16.msra.mxu0 %v491
        %867 = vmatprep.subr.bf16.mxu0 0
        %868 = vmatpush1.bf16.msra.mxu0 %v492
        %869 = vmatprep.subr.bf16.mxu0 0
        %870 = vmatpush1.bf16.msra.mxu0 %v493
        %871 = vmatprep.subr.bf16.mxu0 0
        %872 = vmatpush1.bf16.msra.mxu0 %v494
        %873 = vmatprep.subr.bf16.mxu0 0
        %874 = vmatpush1.bf16.msra.mxu0 %v495
        %875 = vmatprep.subr.bf16.mxu0 0
        %876 = vmatpush1.bf16.msra.mxu0 %v496
        %877 = vmatprep.subr.bf16.mxu0 0
        %878 = vmatpush1.bf16.msra.mxu0 0
        %879 = vmatprep.subr.bf16.mxu0 0
        %880 = vmatpush1.bf16.msra.mxu0 0
        %881 = vmatprep.subr.bf16.mxu0 0
        %882 = vmatpush1.bf16.msra.mxu0 0
        %883 = vmatprep.subr.bf16.mxu0 0
        %884 = vmatpush1.bf16.msra.mxu0 0
        %885 = vmatprep.subr.bf16.mxu0 0
        %886 = vmatpush1.bf16.msra.mxu0 0
        %887 = vmatprep.subr.bf16.mxu0 0
        %888 = vmatpush1.bf16.msra.mxu0 0
        %889 = vmatprep.subr.bf16.mxu0 0
        %890 = vmatpush1.bf16.msra.mxu0 0
        %891 = vmatprep.subr.bf16.mxu0 0
        %892 = vmatpush1.bf16.msra.mxu0 0
        %893 = vmatprep.mubr.bf16.mxu0 0
        %894 = vmatmul.mubr.bf16.gmra.mrb[0].mxu0 %v857
        %v895 = vpop.f32.mrb[0].mxu0
        %v896 = vadd.f32 %v443, %v895
        %v897 = vpop.f32.mrb[0].mxu0
        %v898 = vpop.f32.mrb[0].mxu0
        %v899 = vadd.f32 %v443, %v898
        %v900 = vpop.f32.mrb[0].mxu0
        %901 = vmatprep.mubr.bf16.mxu0 0
        %902 = vmatmul.mubr.bf16.gmra.mrb[0].mxu0 %v858
        %v903 = vpop.f32.mrb[0].mxu0
        %v904 = vadd.f32 %v443, %v903
        %v905 = vpop.f32.mrb[0].mxu0
        %v906 = vpop.f32.mrb[0].mxu0
        %v907 = vadd.f32 %v443, %v906
        %v908 = vpop.f32.mrb[0].mxu0
        %909 = vdwg.mxu0
        %v910 = vmul.f32 %v896, %v406
        %v911 = vmul.f32 %v899, %v407
        %v912 = vmul.f32 %v904, %v408
        %v913 = vmul.f32 %v907, %v409
        %914 = vadd.xlane.f32.xlu0 %v910
        %v915 = vpop.xlane.xlu0 %914
        %916 = vadd.xlane.f32.xlu0 %v911
        %v917 = vpop.xlane.xlu0 %916
        %918 = vadd.xlane.f32.xlu0 %v912
        %v919 = vpop.xlane.xlu0 %918
        %920 = vadd.xlane.f32.xlu0 %v913
        %v921 = vpop.xlane.xlu0 %920
        %v922 = vsel %vm840, %v915, -1e+30
        %v923 = vsel %vm841, %v917, -1e+30
        %v924 = vsel %vm842, %v919, -1e+30
        %v925 = vsel %vm843, %v921, -1e+30
        %v926 = vmax.f32 %v748, %v922
        %v927 = vmax.f32 %v749, %v923
        %v928 = vmax.f32 %v750, %v924
        %v929 = vmax.f32 %v751, %v925
        %v930 = vsub.f32 %v748, %v926
        %v931 = vsub.f32 %v749, %v927
        %v932 = vsub.f32 %v750, %v928
        %v933 = vsub.f32 %v751, %v929
        %v934 = vmul.f32 %v930, 1.442695
        %v935 = vpow.pop %v934
        %v936 = vmul.f32 %v931, 1.442695
        %v937 = vpow.pop %v936
        %v938 = vmul.f32 %v932, 1.442695
        %v939 = vpow.pop %v938
        %v940 = vmul.f32 %v933, 1.442695
        %v941 = vpow.pop %v940
        %v942 = vsub.f32 %v922, %v926
        %v943 = vsub.f32 %v923, %v927
        %v944 = vsub.f32 %v924, %v928
        %v945 = vsub.f32 %v925, %v929
        %v946 = vmul.f32 %v942, 1.442695
        %v947 = vpow.pop %v946
        %v948 = vmul.f32 %v943, 1.442695
        %v949 = vpow.pop %v948
        %v950 = vmul.f32 %v944, 1.442695
        %v951 = vpow.pop %v950
        %v952 = vmul.f32 %v945, 1.442695
        %v953 = vpow.pop %v952
        %v954 = vsel %vm840, %v947, 0.0
        %v955 = vsel %vm841, %v949, 0.0
        %v956 = vsel %vm842, %v951, 0.0
        %v957 = vsel %vm843, %v953, 0.0
        %v958 = vmul.f32 %v784, %v935
        %v959 = vmul.f32 %v785, %v937
        %v960 = vmul.f32 %v786, %v939
        %v961 = vmul.f32 %v787, %v941
        %v962 = vadd.f32 %v958, %v954
        %v963 = vadd.f32 %v959, %v955
        %v964 = vadd.f32 %v960, %v956
        %v965 = vadd.f32 %v961, %v957
        %967 = vset.pattern.permute.xlu0 0
        %968 = vperm.xlu0 %967, %v935
        %v969 = vpop.permute.xlu0 %968
        %972 = vset.pattern.permute.xlu0 0
        %973 = vperm.xlu0 %972, %v937
        %v974 = vpop.permute.xlu0 %973
        %977 = vset.pattern.permute.xlu0 0
        %978 = vperm.xlu0 %977, %v939
        %v979 = vpop.permute.xlu0 %978
        %982 = vset.pattern.permute.xlu0 0
        %983 = vperm.xlu0 %982, %v941
        %v984 = vpop.permute.xlu0 %983
        %v986 = vmul.f32 %v836, %v969
        %v987 = vmul.f32 %v837, %v974
        %v988 = vmul.f32 %v838, %v979
        %v989 = vmul.f32 %v839, %v984
        %991 = vset.pattern.permute.xlu0 0
        %992 = vperm.xlu0 %991, %v954
        %v993 = vpop.permute.xlu0 %992
        %996 = vset.pattern.permute.xlu0 0
        %997 = vperm.xlu0 %996, %v955
        %v998 = vpop.permute.xlu0 %997
        %1001 = vset.pattern.permute.xlu0 0
        %1002 = vperm.xlu0 %1001, %v956
        %v1003 = vpop.permute.xlu0 %1002
        %1006 = vset.pattern.permute.xlu0 0
        %1007 = vperm.xlu0 %1006, %v957
        %v1008 = vpop.permute.xlu0 %1007
        %v1010 = vmul.f32 %v993, %v896
        %v1011 = vmul.f32 %v998, %v899
        %v1012 = vmul.f32 %v1003, %v904
        %v1013 = vmul.f32 %v1008, %v907
        %v1014 = vadd.f32 %v986, %v1010
        %v1015 = vadd.f32 %v987, %v1011
        %v1016 = vadd.f32 %v988, %v1012
        %v1017 = vadd.f32 %v989, %v1013
        %vm1018 = vcmp.gt.s32.totalorder %v410, 3
        %vm1019 = vcmp.gt.s32.totalorder %v411, 3
        %vm1020 = vcmp.gt.s32.totalorder %v412, 3
        %vm1021 = vcmp.gt.s32.totalorder %v413, 3
        %s1022 = scalar_lea.vmem %s347, 48 [#allocation5]
        %v1023 = vld [vmem:[%s1022] sm:$0xf]
        %v1024 = vld [vmem:[%s1022 + $0x4] sm:$0xf]
        %v1025 = vld [vmem:[%s1022 + $0x8] sm:$0xf]
        %v1026 = vld [vmem:[%s1022 + $0xc] sm:$0xf]
        %v1031 = vunpack.c.l.b16 %v1023
        %v1032 = vunpack.c.l.b16 %v1024
        %v1033 = vunpack.c.l.b16 %v1025
        %v1034 = vunpack.c.l.b16 %v1026
        %v1035 = vpack.c.b16 %v1032, %v1031
        %v1036 = vpack.c.b16 %v1034, %v1033
        %1039 = vmatprep.subr.bf16.mxu0 0
        %1040 = vmatpush1.bf16.msra.mxu0 %v489
        %1041 = vmatprep.subr.bf16.mxu0 0
        %1042 = vmatpush1.bf16.msra.mxu0 %v490
        %1043 = vmatprep.subr.bf16.mxu0 0
        %1044 = vmatpush1.bf16.msra.mxu0 %v491
        %1045 = vmatprep.subr.bf16.mxu0 0
        %1046 = vmatpush1.bf16.msra.mxu0 %v492
        %1047 = vmatprep.subr.bf16.mxu0 0
        %1048 = vmatpush1.bf16.msra.mxu0 %v493
        %1049 = vmatprep.subr.bf16.mxu0 0
        %1050 = vmatpush1.bf16.msra.mxu0 %v494
        %1051 = vmatprep.subr.bf16.mxu0 0
        %1052 = vmatpush1.bf16.msra.mxu0 %v495
        %1053 = vmatprep.subr.bf16.mxu0 0
        %1054 = vmatpush1.bf16.msra.mxu0 %v496
        %1055 = vmatprep.subr.bf16.mxu0 0
        %1056 = vmatpush1.bf16.msra.mxu0 0
        %1057 = vmatprep.subr.bf16.mxu0 0
        %1058 = vmatpush1.bf16.msra.mxu0 0
        %1059 = vmatprep.subr.bf16.mxu0 0
        %1060 = vmatpush1.bf16.msra.mxu0 0
        %1061 = vmatprep.subr.bf16.mxu0 0
        %1062 = vmatpush1.bf16.msra.mxu0 0
        %1063 = vmatprep.subr.bf16.mxu0 0
        %1064 = vmatpush1.bf16.msra.mxu0 0
        %1065 = vmatprep.subr.bf16.mxu0 0
        %1066 = vmatpush1.bf16.msra.mxu0 0
        %1067 = vmatprep.subr.bf16.mxu0 0
        %1068 = vmatpush1.bf16.msra.mxu0 0
        %1069 = vmatprep.subr.bf16.mxu0 0
        %1070 = vmatpush1.bf16.msra.mxu0 0
        %1071 = vmatprep.mubr.bf16.mxu0 0
        %1072 = vmatmul.mubr.bf16.gmra.mrb[0].mxu0 %v1035
        %v1073 = vpop.f32.mrb[0].mxu0
        %v1074 = vadd.f32 %v443, %v1073
        %v1075 = vpop.f32.mrb[0].mxu0
        %v1076 = vpop.f32.mrb[0].mxu0
        %v1077 = vadd.f32 %v443, %v1076
        %v1078 = vpop.f32.mrb[0].mxu0
        %1079 = vmatprep.mubr.bf16.mxu0 0
        %1080 = vmatmul.mubr.bf16.gmra.mrb[0].mxu0 %v1036
        %v1081 = vpop.f32.mrb[0].mxu0
        %v1082 = vadd.f32 %v443, %v1081
        %v1083 = vpop.f32.mrb[0].mxu0
        %v1084 = vpop.f32.mrb[0].mxu0
        %v1085 = vadd.f32 %v443, %v1084
        %v1086 = vpop.f32.mrb[0].mxu0
        %1087 = vdwg.mxu0
        %v1088 = vmul.f32 %v1074, %v406
        %v1089 = vmul.f32 %v1077, %v407
        %v1090 = vmul.f32 %v1082, %v408
        %v1091 = vmul.f32 %v1085, %v409
        %1092 = vadd.xlane.f32.xlu0 %v1088
        %v1093 = vpop.xlane.xlu0 %1092
        %1094 = vadd.xlane.f32.xlu0 %v1089
        %v1095 = vpop.xlane.xlu0 %1094
        %1096 = vadd.xlane.f32.xlu0 %v1090
        %v1097 = vpop.xlane.xlu0 %1096
        %1098 = vadd.xlane.f32.xlu0 %v1091
        %v1099 = vpop.xlane.xlu0 %1098
        %v1100 = vsel %vm1018, %v1093, -1e+30
        %v1101 = vsel %vm1019, %v1095, -1e+30
        %v1102 = vsel %vm1020, %v1097, -1e+30
        %v1103 = vsel %vm1021, %v1099, -1e+30
        %v1104 = vmax.f32 %v926, %v1100
        %v1105 = vmax.f32 %v927, %v1101
        %v1106 = vmax.f32 %v928, %v1102
        %v1107 = vmax.f32 %v929, %v1103
        %v1108 = vsub.f32 %v926, %v1104
        %v1109 = vsub.f32 %v927, %v1105
        %v1110 = vsub.f32 %v928, %v1106
        %v1111 = vsub.f32 %v929, %v1107
        %v1112 = vmul.f32 %v1108, 1.442695
        %v1113 = vpow.pop %v1112
        %v1114 = vmul.f32 %v1109, 1.442695
        %v1115 = vpow.pop %v1114
        %v1116 = vmul.f32 %v1110, 1.442695
        %v1117 = vpow.pop %v1116
        %v1118 = vmul.f32 %v1111, 1.442695
        %v1119 = vpow.pop %v1118
        %v1120 = vsub.f32 %v1100, %v1104
        %v1121 = vsub.f32 %v1101, %v1105
        %v1122 = vsub.f32 %v1102, %v1106
        %v1123 = vsub.f32 %v1103, %v1107
        %v1124 = vmul.f32 %v1120, 1.442695
        %v1125 = vpow.pop %v1124
        %v1126 = vmul.f32 %v1121, 1.442695
        %v1127 = vpow.pop %v1126
        %v1128 = vmul.f32 %v1122, 1.442695
        %v1129 = vpow.pop %v1128
        %v1130 = vmul.f32 %v1123, 1.442695
        %v1131 = vpow.pop %v1130
        %v1132 = vsel %vm1018, %v1125, 0.0
        %v1133 = vsel %vm1019, %v1127, 0.0
        %v1134 = vsel %vm1020, %v1129, 0.0
        %v1135 = vsel %vm1021, %v1131, 0.0
        %v1136 = vmul.f32 %v962, %v1113
        %v1137 = vmul.f32 %v963, %v1115
        %v1138 = vmul.f32 %v964, %v1117
        %v1139 = vmul.f32 %v965, %v1119
        %v1140 = vadd.f32 %v1136, %v1132
        %v1141 = vadd.f32 %v1137, %v1133
        %v1142 = vadd.f32 %v1138, %v1134
        %v1143 = vadd.f32 %v1139, %v1135
        %1145 = vset.pattern.permute.xlu0 0
        %1146 = vperm.xlu0 %1145, %v1113
        %v1147 = vpop.permute.xlu0 %1146
        %1150 = vset.pattern.permute.xlu0 0
        %1151 = vperm.xlu0 %1150, %v1115
        %v1152 = vpop.permute.xlu0 %1151
        %1155 = vset.pattern.permute.xlu0 0
        %1156 = vperm.xlu0 %1155, %v1117
        %v1157 = vpop.permute.xlu0 %1156
        %1160 = vset.pattern.permute.xlu0 0
        %1161 = vperm.xlu0 %1160, %v1119
        %v1162 = vpop.permute.xlu0 %1161
        %v1164 = vmul.f32 %v1014, %v1147
        %v1165 = vmul.f32 %v1015, %v1152
        %v1166 = vmul.f32 %v1016, %v1157
        %v1167 = vmul.f32 %v1017, %v1162
        %1169 = vset.pattern.permute.xlu0 0
        %1170 = vperm.xlu0 %1169, %v1132
        %v1171 = vpop.permute.xlu0 %1170
        %1174 = vset.pattern.permute.xlu0 0
        %1175 = vperm.xlu0 %1174, %v1133
        %v1176 = vpop.permute.xlu0 %1175
        %1179 = vset.pattern.permute.xlu0 0
        %1180 = vperm.xlu0 %1179, %v1134
        %v1181 = vpop.permute.xlu0 %1180
        %1184 = vset.pattern.permute.xlu0 0
        %1185 = vperm.xlu0 %1184, %v1135
        %v1186 = vpop.permute.xlu0 %1185
        %v1188 = vmul.f32 %v1171, %v1074
        %v1189 = vmul.f32 %v1176, %v1077
        %v1190 = vmul.f32 %v1181, %v1082
        %v1191 = vmul.f32 %v1186, %v1085
        %v1192 = vadd.f32 %v1164, %v1188
        %v1193 = vadd.f32 %v1165, %v1189
        %v1194 = vadd.f32 %v1166, %v1190
        %v1195 = vadd.f32 %v1167, %v1191
        %v1196 = vsel %vm431, %v1140, 1.0
        %v1197 = vsel %vm432, %v1141, 1.0
        %v1198 = vsel %vm433, %v1142, 1.0
        %v1199 = vsel %vm434, %v1143, 1.0
        %v1200 = vrcp.pop %v1196
        %v1201 = vrcp.pop %v1197
        %v1202 = vrcp.pop %v1198
        %v1203 = vrcp.pop %v1199
        %1205 = vset.pattern.permute.xlu0 0
        %1206 = vperm.xlu0 %1205, %v1200
        %v1207 = vpop.permute.xlu0 %1206
        %1210 = vset.pattern.permute.xlu0 0
        %1211 = vperm.xlu0 %1210, %v1201
        %v1212 = vpop.permute.xlu0 %1211
        %1215 = vset.pattern.permute.xlu0 0
        %1216 = vperm.xlu0 %1215, %v1202
        %v1217 = vpop.permute.xlu0 %1216
        %1220 = vset.pattern.permute.xlu0 0
        %1221 = vperm.xlu0 %1220, %v1203
        %v1222 = vpop.permute.xlu0 %1221
        %v1224 = vmul.f32 %v1192, %v1207
        %v1225 = vmul.f32 %v1193, %v1212
        %v1226 = vmul.f32 %v1194, %v1217
        %v1227 = vmul.f32 %v1195, %v1222
        %v1228 = vld [vmem:[#allocation7] sm:$0xff]
        %v1229 = vld [vmem:[#allocation7 + $0x8] sm:$0xff]
        %v1230 = vld [vmem:[#allocation7 + $0x10] sm:$0xff]
        %v1231 = vld [vmem:[#allocation7 + $0x18] sm:$0xff]
        %v1232 = vld [vmem:[#allocation7 + $0x20] sm:$0xff]
        %v1233 = vld [vmem:[#allocation7 + $0x28] sm:$0xff]
        %v1234 = vld [vmem:[#allocation7 + $0x30] sm:$0xff]
        %v1235 = vld [vmem:[#allocation7 + $0x38] sm:$0xff]
        %v1236 = vld [vmem:[#allocation7 + $0x40] sm:$0xff]
        %v1237 = vld [vmem:[#allocation7 + $0x48] sm:$0xff]
        %v1238 = vld [vmem:[#allocation7 + $0x50] sm:$0xff]
        %v1239 = vld [vmem:[#allocation7 + $0x58] sm:$0xff]
        %v1240 = vld [vmem:[#allocation7 + $0x60] sm:$0xff]
        %v1241 = vld [vmem:[#allocation7 + $0x68] sm:$0xff]
        %v1242 = vld [vmem:[#allocation7 + $0x70] sm:$0xff]
        %v1243 = vld [vmem:[#allocation7 + $0x78] sm:$0xff]
        %v1244 = vld [vmem:[%s6] sm:$0x3]
        %v1246 = vlaneseq
        %v1247 = vshrl.u32 %v1246, 7
        %v1248 = vsub.s32 0, %v1247
        %v1249 = vrot.slane %v1244, %v1248
        %v1250 = vlaneseq
        %v1251 = vshrl.u32 %v1250, 7
        %v1252 = vsub.s32 1, %v1251
        %v1253 = vrot.slane %v1244, %v1252
        %v1260 = vunpack.c.l.b16 %v402
        %v1261 = vunpack.c.l.b16 %v403
        %v1262 = vunpack.c.l.b16 %v404
        %v1263 = vunpack.c.l.b16 %v405
        %v1264 = vpack.c.b16 %v1261, %v1260
        %v1265 = vpack.c.b16 %v1263, %v1262
        %v1284 = vunpack.c.l.b16 %v1228
        %v1285 = vunpack.c.h.b16 %v1228
        %v1286 = vunpack.c.l.b16 %v1229
        %v1287 = vunpack.c.h.b16 %v1229
        %v1288 = vunpack.c.l.b16 %v1230
        %v1289 = vunpack.c.h.b16 %v1230
        %v1290 = vunpack.c.l.b16 %v1231
        %v1291 = vunpack.c.h.b16 %v1231
        %v1292 = vunpack.c.l.b16 %v1232
        %v1293 = vunpack.c.h.b16 %v1232
        %v1294 = vunpack.c.l.b16 %v1233
        %v1295 = vunpack.c.h.b16 %v1233
        %v1296 = vunpack.c.l.b16 %v1234
        %v1297 = vunpack.c.h.b16 %v1234
        %v1298 = vunpack.c.l.b16 %v1235
        %v1299 = vunpack.c.h.b16 %v1235
        %v1300 = vunpack.c.l.b16 %v1236
        %v1301 = vunpack.c.h.b16 %v1236
        %v1302 = vunpack.c.l.b16 %v1237
        %v1303 = vunpack.c.h.b16 %v1237
        %v1304 = vunpack.c.l.b16 %v1238
        %v1305 = vunpack.c.h.b16 %v1238
        %v1306 = vunpack.c.l.b16 %v1239
        %v1307 = vunpack.c.h.b16 %v1239
        %v1308 = vunpack.c.l.b16 %v1240
        %v1309 = vunpack.c.h.b16 %v1240
        %v1310 = vunpack.c.l.b16 %v1241
        %v1311 = vunpack.c.h.b16 %v1241
        %v1312 = vunpack.c.l.b16 %v1242
        %v1313 = vunpack.c.h.b16 %v1242
        %v1314 = vunpack.c.l.b16 %v1243
        %v1315 = vunpack.c.h.b16 %v1243
        %v1316 = vpack.c.b16 %v1286, %v1284
        %v1317 = vpack.c.b16 %v1287, %v1285
        %v1318 = vpack.c.b16 %v1290, %v1288
        %v1319 = vpack.c.b16 %v1291, %v1289
        %v1320 = vpack.c.b16 %v1294, %v1292
        %v1321 = vpack.c.b16 %v1295, %v1293
        %v1322 = vpack.c.b16 %v1298, %v1296
        %v1323 = vpack.c.b16 %v1299, %v1297
        %v1324 = vpack.c.b16 %v1302, %v1300
        %v1325 = vpack.c.b16 %v1303, %v1301
        %v1326 = vpack.c.b16 %v1306, %v1304
        %v1327 = vpack.c.b16 %v1307, %v1305
        %v1328 = vpack.c.b16 %v1310, %v1308
        %v1329 = vpack.c.b16 %v1311, %v1309
        %v1330 = vpack.c.b16 %v1314, %v1312
        %v1331 = vpack.c.b16 %v1315, %v1313
        %1348 = vmatprep.subr.bf16.mxu0 %v1317
        %1349 = vmatpush1.bf16.msra.mxu0 %v1316
        %1350 = vmatprep.subr.bf16.mxu0 %v1319
        %1351 = vmatpush1.bf16.msra.mxu0 %v1318
        %1352 = vmatprep.subr.bf16.mxu0 %v1321
        %1353 = vmatpush1.bf16.msra.mxu0 %v1320
        %1354 = vmatprep.subr.bf16.mxu0 %v1323
        %1355 = vmatpush1.bf16.msra.mxu0 %v1322
        %1356 = vmatprep.subr.bf16.mxu0 %v1325
        %1357 = vmatpush1.bf16.msra.mxu0 %v1324
        %1358 = vmatprep.subr.bf16.mxu0 %v1327
        %1359 = vmatpush1.bf16.msra.mxu0 %v1326
        %1360 = vmatprep.subr.bf16.mxu0 %v1329
        %1361 = vmatpush1.bf16.msra.mxu0 %v1328
        %1362 = vmatprep.subr.bf16.mxu0 %v1331
        %1363 = vmatpush1.bf16.msra.mxu0 %v1330
        %1364 = vmatprep.subr.bf16.mxu0 0
        %1365 = vmatpush1.bf16.msra.mxu0 0
        %1366 = vmatprep.subr.bf16.mxu0 0
        %1367 = vmatpush1.bf16.msra.mxu0 0
        %1368 = vmatprep.subr.bf16.mxu0 0
        %1369 = vmatpush1.bf16.msra.mxu0 0
        %1370 = vmatprep.subr.bf16.mxu0 0
        %1371 = vmatpush1.bf16.msra.mxu0 0
        %1372 = vmatprep.subr.bf16.mxu0 0
        %1373 = vmatpush1.bf16.msra.mxu0 0
        %1374 = vmatprep.subr.bf16.mxu0 0
        %1375 = vmatpush1.bf16.msra.mxu0 0
        %1376 = vmatprep.subr.bf16.mxu0 0
        %1377 = vmatpush1.bf16.msra.mxu0 0
        %1378 = vmatprep.subr.bf16.mxu0 0
        %1379 = vmatpush1.bf16.msra.mxu0 0
        %1380 = vmatprep.mubr.bf16.mxu0 0
        %1381 = vmatmul.mubr.bf16.gmra.mrb[0].mxu0 %v1264
        %v1382 = vpop.f32.mrb[0].mxu0
        %v1383 = vadd.f32 %v1249, %v1382
        %v1384 = vpop.f32.mrb[0].mxu0
        %v1385 = vadd.f32 %v1253, %v1384
        %v1386 = vpop.f32.mrb[0].mxu0
        %v1387 = vadd.f32 %v1249, %v1386
        %v1388 = vpop.f32.mrb[0].mxu0
        %v1389 = vadd.f32 %v1253, %v1388
        %1390 = vmatprep.mubr.bf16.mxu0 0
        %1391 = vmatmul.mubr.bf16.gmra.mrb[0].mxu0 %v1265
        %v1392 = vpop.f32.mrb[0].mxu0
        %v1393 = vadd.f32 %v1249, %v1392
        %v1394 = vpop.f32.mrb[0].mxu0
        %v1395 = vadd.f32 %v1253, %v1394
        %v1396 = vpop.f32.mrb[0].mxu0
        %v1397 = vadd.f32 %v1249, %v1396
        %v1398 = vpop.f32.mrb[0].mxu0
        %v1399 = vadd.f32 %v1253, %v1398
        %1400 = vdwg.mxu0
        %v1401 = vsel %vm431, 1, 0
        %v1402 = vsel %vm432, 1, 0
        %v1403 = vsel %vm433, 1, 0
        %v1404 = vsel %vm434, 1, 0
        %1405 = vset.pattern.permute.xlu0 0
        %1406 = vperm.xlu0 %1405, %v1401
        %v1407 = vpop.permute.xlu0 %1406
        %1408 = vset.pattern.permute.xlu0 0
        %1409 = vperm.xlu0 %1408, %v1402
        %v1410 = vpop.permute.xlu0 %1409
        %1411 = vset.pattern.permute.xlu0 0
        %1412 = vperm.xlu0 %1411, %v1403
        %v1413 = vpop.permute.xlu0 %1412
        %1414 = vset.pattern.permute.xlu0 0
        %1415 = vperm.xlu0 %1414, %v1404
        %v1416 = vpop.permute.xlu0 %1415
        %vm1417 = vcmp.eq.s32.totalorder %v1407, 1
        %vm1418 = vcmp.eq.s32.totalorder %v1410, 1
        %vm1419 = vcmp.eq.s32.totalorder %v1413, 1
        %vm1420 = vcmp.eq.s32.totalorder %v1416, 1
        %v1421 = vsel %vm1417, %v1383, %v1385
        %v1422 = vsel %vm1418, %v1387, %v1389
        %v1423 = vsel %vm1419, %v1393, %v1395
        %v1424 = vsel %vm1420, %v1397, %v1399
        %v1425 = vadd.f32 %v1421, %v1224
        %v1426 = vadd.f32 %v1422, %v1225
        %v1427 = vadd.f32 %v1423, %v1226
        %v1428 = vadd.f32 %v1424, %v1227
        %vm1429 = vcmp.ge.f32.partialorder %v1425, 0.0
        %vm1430 = vcmp.ge.f32.partialorder %v1426, 0.0
        %vm1431 = vcmp.ge.f32.partialorder %v1427, 0.0
        %vm1432 = vcmp.ge.f32.partialorder %v1428, 0.0
        %v1433 = vmul.f32 %v1425, 0.22916667
        %v1434 = vmul.f32 %v1426, 0.22916667
        %v1435 = vmul.f32 %v1427, 0.22916667
        %v1436 = vmul.f32 %v1428, 0.22916667
        %v1437 = vsel %vm1429, %v1425, %v1433
        %v1438 = vsel %vm1430, %v1426, %v1434
        %v1439 = vsel %vm1431, %v1427, %v1435
        %v1440 = vsel %vm1432, %v1428, %v1436
        %1441 = vst [vmem:[%s391] sm:$0xff] %v1437
        %1442 = vst [vmem:[%s391 + $0x8] sm:$0xff] %v1438
        %1443 = vst [vmem:[%s391 + $0x10] sm:$0xff] %v1439
        %1444 = vst [vmem:[%s391 + $0x18] sm:$0xff] %v1440
        %s1445 = sand.u32 %s197, 1
        %s1446 = scalar_lea.sflag [#allocation4], %s1445
        %s1447 = sand.u32 %s197, 1
        %s1448 = smul.addr %s1447, 32
        %s1449 = scalar_lea.vmem [#allocation8], %s1448
        // Predicated region
        $region61: #{tpu_custom_call.1} parent=47 // pred_check
          %p1450 = pneg %p207
        $region62: #{tpu_custom_call.1} parent=47 // pred_check_branch
          %1452 = sbr.rel (%p1450) target = $region64
        $region63: #{tpu_custom_call.1} parent=47 // pred_region
          %s1453 = smul.u32 4, %s27
          %s1455 = ssub.s32 512, 512
          %1456 = vsyncadd %s1446, %s1455
          %s1457 = smul.addr %s1453, 128
          %s1458 = scalar_lea.hbm %s7, %s1457
          %s1459 = sshll.u32 %s1449, 4
          %s1460 = int_to_ptr.vmem [resolvable:$true] %s1459
          %1465 = dma.vmem_to_hbm [thread:$0]  %s1460, 512, %s1458, %s1446, 128, 128, 8
        $region64: #{tpu_custom_call.1} parent=47 // pred_fallthru
          _
      $region48: #{tpu_custom_call.1} parent=5 // pred_fallthru
        _
      %p1466 = scmp.le.s32.totalorder 2, %s22
      // Predicated region
      $region65: #{tpu_custom_call.1} parent=5 // pred_check
        %p1467 = pneg %p1466
      $region66: #{tpu_custom_call.1} parent=5 // pred_check_branch
        %1469 = sbr.rel (%p1467) target = $region68
      $region67: #{tpu_custom_call.1} parent=5 // pred_region
        %s1470 = ssub.s32 %s22, 2
        // Predicated region
        $region69: #{tpu_custom_call.1} parent=67 // pred_check
          %p1471 = pneg %p213
        $region70: #{tpu_custom_call.1} parent=67 // pred_check_branch
          %1473 = sbr.rel (%p1471) target = $region72
        $region71: #{tpu_custom_call.1} parent=67 // pred_region
          %s1474 = sand.u32 %s198, 1
          %s1475 = scalar_lea.sflag [#allocation4], %s1474
          %s1476 = sand.u32 %s198, 1
          %s1477 = smul.addr %s1476, 32
          %s1478 = scalar_lea.vmem [#allocation8], %s1477
          %1479 = dma.done %s1475, 512
        $region72: #{tpu_custom_call.1} parent=67 // pred_fallthru
          _
      $region68: #{tpu_custom_call.1} parent=5 // pred_fallthru
        _
    $region6: #{tpu_custom_call.1} parent=1 // loop_footer
      %s26 = sadd.s32 1, %s22
    $region7: #{tpu_custom_call.1} parent=1 // loop_footer_branch
      %21 = sbr.rel target = $region3
    $region8: #{tpu_custom_call.1} parent=1 // loop_exit
      _
    %1480 = vsyncpa [#allocation3], 1
    %s1481 = scalar_lea.sflag [#allocation3], 1
    %1482 = vsyncpa %s1481, 1
    %1483 = vsyncpa [#allocation6], 1
    %s1484 = scalar_lea.sflag [#allocation6], 1
    %1485 = vsyncpa %s1484, 1
    %1486 = vsyncpa [#allocation4], 1
    %s1487 = scalar_lea.sflag [#allocation4], 1
    %1488 = vsyncpa %s1487, 1

</llo_original>
